<compile_context>
chip_gen: v7x
topology: tpu7x:2x2x1
jax: 0.10.0
libtpu: 0.0.40
codegen_flags: <defaults>
</compile_context>

<pallas_src>
import functools

import jax
import jax.numpy as jnp
from jax.experimental import pallas as pl
from jax.experimental.pallas import tpu as pltpu


# --------------------------------------------------------------------------
# In-kernel LSTM recurrence over a precomputed input-projection slab.
#   gx_ref : (S*Bp, 4*Hp)  = x @ Wih + (b_ih + b_hh)   (already in VMEM)
#   whh_ref: (Hp, 4*Hp)    recurrent weights (pre-transposed)
#   hs_ref : (S*Bp, Hp)    output hidden-state slab (written per step)
# --------------------------------------------------------------------------
def _lstm_recurrence(gx_ref, whh_ref, hs_ref, seq_len, batch_p, hidden_p):
    Hp = hidden_p

    def step(t, carry):
        h, c = carry
        row = pl.multiple_of(t * batch_p, batch_p)
        gates = gx_ref[pl.ds(row, batch_p), :] + jnp.dot(
            h, whh_ref[...], preferred_element_type=jnp.float32)
        # Gate slices are lane-aligned because Hp is a multiple of 128.
        i_g = jax.nn.sigmoid(gates[:, 0 * Hp:1 * Hp])
        f_g = jax.nn.sigmoid(gates[:, 1 * Hp:2 * Hp])
        g_g = jnp.tanh(gates[:, 2 * Hp:3 * Hp])
        o_g = jax.nn.sigmoid(gates[:, 3 * Hp:4 * Hp])
        c_new = f_g * c + i_g * g_g
        h_new = o_g * jnp.tanh(c_new)
        hs_ref[pl.ds(row, batch_p), :] = h_new
        return (h_new, c_new)

    init = (jnp.zeros((batch_p, hidden_p), jnp.float32),
            jnp.zeros((batch_p, hidden_p), jnp.float32))
    jax.lax.fori_loop(0, seq_len, step, init, unroll=True)


# --------------------------------------------------------------------------
# Fused kernel: layer0 LSTM -> layer1 LSTM -> Linear head, all in one call.
# --------------------------------------------------------------------------
def _lstm_reg_fused_kernel(x_ref, wih0_ref, whh0_ref, b0_ref,
                           wih1_ref, whh1_ref, b1_ref,
                           wreg_ref, breg_ref,
                           y_ref,
                           gx_ref, hs0_ref, hs1_ref,
                           *, seq_len, batch_p, hidden_p):
    # ---- layer 0: hoisted input projection, one big MXU matmul ----
    gx_ref[...] = (jnp.dot(x_ref[...], wih0_ref[...],
                           preferred_element_type=jnp.float32) + b0_ref[...])
    _lstm_recurrence(gx_ref, whh0_ref, hs0_ref, seq_len, batch_p, hidden_p)

    # ---- layer 1: hoisted input projection over layer-0 hidden slab ----
    gx_ref[...] = (jnp.dot(hs0_ref[...], wih1_ref[...],
                           preferred_element_type=jnp.float32) + b1_ref[...])
    _lstm_recurrence(gx_ref, whh1_ref, hs1_ref, seq_len, batch_p, hidden_p)

    # ---- linear head fused in the same kernel ----
    y_ref[...] = (jnp.dot(hs1_ref[...], wreg_ref[...],
                          preferred_element_type=jnp.float32) + breg_ref[...])


# --------------------------------------------------------------------------
# Parameter preparation: transpose to (in, 4H) layout and zero-pad hidden to
# a lane-aligned size.  Gate order (i, f, g, o) preserved blockwise.
# --------------------------------------------------------------------------
def _round_up(x, m):
    return ((x + m - 1) // m) * m


def _prep_lstm_layer(w_ih, w_hh, b_ih, b_hh, d_in_p, h_p):
    four_h, d_in = w_ih.shape
    H = w_hh.shape[1]
    assert four_h == 4 * H
    w_ih4 = jnp.asarray(w_ih, jnp.float32).reshape(4, H, d_in)
    w_hh4 = jnp.asarray(w_hh, jnp.float32).reshape(4, H, H)
    b4 = (jnp.asarray(b_ih, jnp.float32)
          + jnp.asarray(b_hh, jnp.float32)).reshape(4, H)

    w_ih_p = jnp.zeros((4, h_p, d_in_p), jnp.float32).at[:, :H, :d_in].set(w_ih4)
    w_hh_p = jnp.zeros((4, h_p, h_p), jnp.float32).at[:, :H, :H].set(w_hh4)
    b_p = jnp.zeros((4, h_p), jnp.float32).at[:, :H].set(b4)

    wih_t = w_ih_p.reshape(4 * h_p, d_in_p).T      # (d_in_p, 4*Hp)
    whh_t = w_hh_p.reshape(4 * h_p, h_p).T         # (Hp, 4*Hp)
    bias = b_p.reshape(1, 4 * h_p)                 # (1, 4*Hp)
    return wih_t, whh_t, bias


def _prep_reg(w, b, h_p):
    O, H = w.shape
    w_p = jnp.zeros((O, h_p), jnp.float32).at[:, :H].set(
        jnp.asarray(w, jnp.float32))
    return w_p.T, jnp.asarray(b, jnp.float32).reshape(1, O)


# --------------------------------------------------------------------------
# Full forward: x -> 2-layer LSTM -> Linear, semantics of the PyTorch module.
# --------------------------------------------------------------------------
def lstm_reg_forward(x, params):
    S, B, D = x.shape
    layers = params["lstm"]
    assert len(layers) == 2, "kernel is specialized to num_layers=2"
    H = layers[0][1].shape[1]
    O = params["reg_w"].shape[0]

    Bp = _round_up(B, 8)        # fill the f32 sublane group
    Hp = _round_up(H, 128)      # lane-align gates / hidden slabs

    # Zero-pad batch; padded rows never mix with real rows and are sliced off.
    x_p = jnp.zeros((S, Bp, D), jnp.float32).at[:, :B, :].set(
        jnp.asarray(x, jnp.float32))
    x2d = x_p.reshape(S * Bp, D)

    wih0, whh0, b0 = _prep_lstm_layer(*layers[0], d_in_p=D, h_p=Hp)
    wih1, whh1, b1 = _prep_lstm_layer(*layers[1], d_in_p=Hp, h_p=Hp)
    wreg, breg = _prep_reg(params["reg_w"], params["reg_b"], Hp)

    kernel = functools.partial(_lstm_reg_fused_kernel,
                               seq_len=S, batch_p=Bp, hidden_p=Hp)

    y2d = pl.pallas_call(
        kernel,
        out_shape=jax.ShapeDtypeStruct((S * Bp, O), jnp.float32),
        in_specs=[
            pl.BlockSpec((S * Bp, D), lambda: (0, 0)),       # x (flattened)
            pl.BlockSpec((D, 4 * Hp), lambda: (0, 0)),        # Wih0^T
            pl.BlockSpec((Hp, 4 * Hp), lambda: (0, 0)),       # Whh0^T
            pl.BlockSpec((1, 4 * Hp), lambda: (0, 0)),        # b0
            pl.BlockSpec((Hp, 4 * Hp), lambda: (0, 0)),       # Wih1^T
            pl.BlockSpec((Hp, 4 * Hp), lambda: (0, 0)),       # Whh1^T
            pl.BlockSpec((1, 4 * Hp), lambda: (0, 0)),        # b1
            pl.BlockSpec((Hp, O), lambda: (0, 0)),            # Wreg^T
            pl.BlockSpec((1, O), lambda: (0, 0)),             # breg
        ],
        out_specs=pl.BlockSpec((S * Bp, O), lambda: (0, 0)),
        scratch_shapes=[
            pltpu.VMEM((S * Bp, 4 * Hp), jnp.float32),   # gates slab (reused)
            pltpu.VMEM((S * Bp, Hp), jnp.float32),       # layer-0 hidden slab
            pltpu.VMEM((S * Bp, Hp), jnp.float32),       # layer-1 hidden slab
        ],
    )(x2d, wih0, whh0, b0, wih1, whh1, b1, wreg, breg)

    return y2d.reshape(S, Bp, O)[:, :B, :]


# --------------------------------------------------------------------------
# Pure-JAX reference (lax.scan) for validation.
# --------------------------------------------------------------------------
def lstm_reg_reference(x, params):
    def layer_ref(xs, w_ih, w_hh, b_ih, b_hh):
        H = w_hh.shape[1]
        B = xs.shape[1]

        def step(carry, x_t):
            h, c = carry
            gates = x_t @ w_ih.T + h @ w_hh.T + b_ih + b_hh
            i = jax.nn.sigmoid(gates[:, 0 * H:1 * H])
            f = jax.nn.sigmoid(gates[:, 1 * H:2 * H])
            g = jnp.tanh(gates[:, 2 * H:3 * H])
            o = jax.nn.sigmoid(gates[:, 3 * H:4 * H])
            c = f * c + i * g
            h = o * jnp.tanh(c)
            return (h, c), h

        init = (jnp.zeros((B, H), jnp.float32), jnp.zeros((B, H), jnp.float32))
        _, ys = jax.lax.scan(step, init, xs)
        return ys

    h = x
    for layer in params["lstm"]:
        h = layer_ref(h, *layer)
    S, B, H = h.shape
    y = h.reshape(S * B, H) @ params["reg_w"].T + params["reg_b"]
    return y.reshape(S, B, -1)


# --------------------------------------------------------------------------
# Deterministic parameter init (same shapes as nn.LSTM / nn.Linear).
# --------------------------------------------------------------------------
def init_params(key, input_size, hidden_size, output_size=1, num_layers=2):
    bound = 1.0 / (hidden_size ** 0.5)
    layers = []
    for layer_idx in range(num_layers):
        d_in = input_size if layer_idx == 0 else hidden_size
        key, k1, k2, k3, k4 = jax.random.split(key, 5)
        w_ih = jax.random.uniform(k1, (4 * hidden_size, d_in),
                                  jnp.float32, -bound, bound)
        w_hh = jax.random.uniform(k2, (4 * hidden_size, hidden_size),
                                  jnp.float32, -bound, bound)
        b_ih = jax.random.uniform(k3, (4 * hidden_size,),
                                  jnp.float32, -bound, bound)
        b_hh = jax.random.uniform(k4, (4 * hidden_size,),
                                  jnp.float32, -bound, bound)
        layers.append((w_ih, w_hh, b_ih, b_hh))
    key, k5, k6 = jax.random.split(key, 3)
    reg_w = jax.random.uniform(k5, (output_size, hidden_size),
                               jnp.float32, -bound, bound)
    reg_b = jax.random.uniform(k6, (output_size,), jnp.float32, -bound, bound)
    return {"lstm": layers, "reg_w": reg_w, "reg_b": reg_b}


if __name__ == "__main__":
    SEQ, BATCH, INPUT_SIZE, HIDDEN, OUTPUT = 8, 4, 8, 32, 1

    key = jax.random.PRNGKey(0)
    key, kx = jax.random.split(key)
    x = jax.random.normal(kx, (SEQ, BATCH, INPUT_SIZE), jnp.float32)
    params = init_params(key, INPUT_SIZE, HIDDEN, OUTPUT, num_layers=2)

    out = jax.block_until_ready(lstm_reg_forward(x, params))
    ref = jax.block_until_ready(lstm_reg_reference(x, params))

    assert out.shape == (SEQ, BATCH, OUTPUT), out.shape
    assert jnp.allclose(out, ref, atol=1e-5, rtol=1e-5), (
        float(jnp.max(jnp.abs(out - ref))))

    print("KERNEL_OK")
</pallas_src>

<mosaic_0001>
module attributes {stable_mosaic.version = 11 : i64} {
  func.func @_lstm_reg_fused_kernel(%arg0: memref<64x8xf32, #tpu.memory_space<vmem>>, %arg1: memref<8x512xf32, #tpu.memory_space<vmem>>, %arg2: memref<128x512xf32, #tpu.memory_space<vmem>>, %arg3: memref<1x512xf32, #tpu.memory_space<vmem>>, %arg4: memref<128x512xf32, #tpu.memory_space<vmem>>, %arg5: memref<128x512xf32, #tpu.memory_space<vmem>>, %arg6: memref<1x512xf32, #tpu.memory_space<vmem>>, %arg7: memref<128x1xf32, #tpu.memory_space<vmem>>, %arg8: memref<1x1xf32, #tpu.memory_space<vmem>>, %arg9: memref<64x1xf32, #tpu.memory_space<vmem>>, %arg10: memref<64x512xf32, #tpu.memory_space<vmem>>, %arg11: memref<64x128xf32, #tpu.memory_space<vmem>>, %arg12: memref<64x128xf32, #tpu.memory_space<vmem>>) attributes {dimension_semantics = [], scalar_prefetch = 0 : i64, scratch_operands = 3 : i64, tpu.core_type = #tpu.core_type<tc>} {
    %c0 = arith.constant 0 : index
    %c0_0 = arith.constant 0 : index
    %0 = vector.load %arg0[%c0, %c0_0] : memref<64x8xf32, #tpu.memory_space<vmem>>, vector<64x8xf32>
    %c0_1 = arith.constant 0 : index
    %c0_2 = arith.constant 0 : index
    %1 = vector.load %arg1[%c0_1, %c0_2] : memref<8x512xf32, #tpu.memory_space<vmem>>, vector<8x512xf32>
    %cst = arith.constant dense<0.000000e+00> : vector<64x512xf32>
    %2 = tpu.matmul %0, %1, %cst {dimension_numbers = #tpu.dot_dimension_numbers<[1], [0], [0], [1], [0, 0, 1, 1], [], []>} : vector<64x8xf32>, vector<8x512xf32>, vector<64x512xf32> -> vector<64x512xf32>
    %c0_3 = arith.constant 0 : index
    %c0_4 = arith.constant 0 : index
    %3 = vector.load %arg3[%c0_3, %c0_4] : memref<1x512xf32, #tpu.memory_space<vmem>>, vector<1x512xf32>
    %4 = vector.broadcast %3 : vector<1x512xf32> to vector<64x512xf32>
    %5 = arith.addf %2, %4 : vector<64x512xf32>
    %c0_5 = arith.constant 0 : index
    %c0_6 = arith.constant 0 : index
    %6 = vector.load %arg10[%c0_5, %c0_6] : memref<64x512xf32, #tpu.memory_space<vmem>>, vector<64x512xf32>
    tpu.vector_store %arg10[%c0_5, %c0_6], %5 {strides = array<i32>} : memref<64x512xf32, #tpu.memory_space<vmem>>, vector<64x512xf32>,
    %cst_7 = arith.constant 0.000000e+00 : f32
    %7 = vector.broadcast %cst_7 : f32 to vector<8x128xf32>
    %cst_8 = arith.constant 0.000000e+00 : f32
    %8 = vector.broadcast %cst_8 : f32 to vector<8x128xf32>
    %c0_i32 = arith.constant 0 : i32
    %c8_i32 = arith.constant 8 : i32
    %9 = arith.muli %c0_i32, %c8_i32 : i32
    %10 = tpu.assume_multiple %9, 8 : i32
    %11 = arith.index_cast %10 : i32 to index
    %c0_9 = arith.constant 0 : index
    %12 = vector.load %arg10[%11, %c0_9] : memref<64x512xf32, #tpu.memory_space<vmem>>, vector<8x512xf32>
    %c0_10 = arith.constant 0 : index
    %c0_11 = arith.constant 0 : index
    %13 = vector.load %arg2[%c0_10, %c0_11] : memref<128x512xf32, #tpu.memory_space<vmem>>, vector<128x512xf32>
    %cst_12 = arith.constant dense<0.000000e+00> : vector<8x512xf32>
    %14 = tpu.matmul %7, %13, %cst_12 {dimension_numbers = #tpu.dot_dimension_numbers<[1], [0], [0], [1], [0, 0, 1, 1], [], []>} : vector<8x128xf32>, vector<128x512xf32>, vector<8x512xf32> -> vector<8x512xf32>
    %15 = arith.addf %12, %14 : vector<8x512xf32>
    %16 = vector.extract_strided_slice %15 {offsets = [0, 0], sizes = [8, 128], strides = [1, 1]} : vector<8x512xf32> to vector<8x128xf32>
    %17 = arith.negf %16 : vector<8x128xf32>
    %18 = math.exp %17 : vector<8x128xf32>
    %cst_13 = arith.constant 1.000000e+00 : f32
    %19 = vector.broadcast %cst_13 : f32 to vector<8x128xf32>
    %20 = arith.addf %19, %18 : vector<8x128xf32>
    %21 = arith.divf %19, %20 : vector<8x128xf32>
    %22 = vector.extract_strided_slice %15 {offsets = [0, 128], sizes = [8, 128], strides = [1, 1]} : vector<8x512xf32> to vector<8x128xf32>
    %23 = arith.negf %22 : vector<8x128xf32>
    %24 = math.exp %23 : vector<8x128xf32>
    %cst_14 = arith.constant 1.000000e+00 : f32
    %25 = vector.broadcast %cst_14 : f32 to vector<8x128xf32>
    %26 = arith.addf %25, %24 : vector<8x128xf32>
    %27 = arith.divf %25, %26 : vector<8x128xf32>
    %28 = vector.extract_strided_slice %15 {offsets = [0, 256], sizes = [8, 128], strides = [1, 1]} : vector<8x512xf32> to vector<8x128xf32>
    %29 = math.tanh %28 : vector<8x128xf32>
    %30 = vector.extract_strided_slice %15 {offsets = [0, 384], sizes = [8, 128], strides = [1, 1]} : vector<8x512xf32> to vector<8x128xf32>
    %31 = arith.negf %30 : vector<8x128xf32>
    %32 = math.exp %31 : vector<8x128xf32>
    %cst_15 = arith.constant 1.000000e+00 : f32
    %33 = vector.broadcast %cst_15 : f32 to vector<8x128xf32>
    %34 = arith.addf %33, %32 : vector<8x128xf32>
    %35 = arith.divf %33, %34 : vector<8x128xf32>
    %36 = arith.mulf %27, %8 : vector<8x128xf32>
    %37 = arith.mulf %21, %29 : vector<8x128xf32>
    %38 = arith.addf %36, %37 : vector<8x128xf32>
    %39 = math.tanh %38 : vector<8x128xf32>
    %40 = arith.mulf %35, %39 : vector<8x128xf32>
    %41 = arith.index_cast %10 : i32 to index
    %c0_16 = arith.constant 0 : index
    %42 = vector.load %arg11[%41, %c0_16] : memref<64x128xf32, #tpu.memory_space<vmem>>, vector<8x128xf32>
    tpu.vector_store %arg11[%41, %c0_16], %40 {strides = array<i32>} : memref<64x128xf32, #tpu.memory_space<vmem>>, vector<8x128xf32>,
    %c1_i32 = arith.constant 1 : i32
    %c8_i32_17 = arith.constant 8 : i32
    %43 = arith.muli %c1_i32, %c8_i32_17 : i32
    %44 = tpu.assume_multiple %43, 8 : i32
    %45 = arith.index_cast %44 : i32 to index
    %c0_18 = arith.constant 0 : index
    %46 = vector.load %arg10[%45, %c0_18] : memref<64x512xf32, #tpu.memory_space<vmem>>, vector<8x512xf32>
    %c0_19 = arith.constant 0 : index
    %c0_20 = arith.constant 0 : index
    %47 = vector.load %arg2[%c0_19, %c0_20] : memref<128x512xf32, #tpu.memory_space<vmem>>, vector<128x512xf32>
    %cst_21 = arith.constant dense<0.000000e+00> : vector<8x512xf32>
    %48 = tpu.matmul %40, %47, %cst_21 {dimension_numbers = #tpu.dot_dimension_numbers<[1], [0], [0], [1], [0, 0, 1, 1], [], []>} : vector<8x128xf32>, vector<128x512xf32>, vector<8x512xf32> -> vector<8x512xf32>
    %49 = arith.addf %46, %48 : vector<8x512xf32>
    %50 = vector.extract_strided_slice %49 {offsets = [0, 0], sizes = [8, 128], strides = [1, 1]} : vector<8x512xf32> to vector<8x128xf32>
    %51 = arith.negf %50 : vector<8x128xf32>
    %52 = math.exp %51 : vector<8x128xf32>
    %cst_22 = arith.constant 1.000000e+00 : f32
    %53 = vector.broadcast %cst_22 : f32 to vector<8x128xf32>
    %54 = arith.addf %53, %52 : vector<8x128xf32>
    %55 = arith.divf %53, %54 : vector<8x128xf32>
    %56 = vector.extract_strided_slice %49 {offsets = [0, 128], sizes = [8, 128], strides = [1, 1]} : vector<8x512xf32> to vector<8x128xf32>
    %57 = arith.negf %56 : vector<8x128xf32>
    %58 = math.exp %57 : vector<8x128xf32>
    %cst_23 = arith.constant 1.000000e+00 : f32
    %59 = vector.broadcast %cst_23 : f32 to vector<8x128xf32>
    %60 = arith.addf %59, %58 : vector<8x128xf32>
    %61 = arith.divf %59, %60 : vector<8x128xf32>
    %62 = vector.extract_strided_slice %49 {offsets = [0, 256], sizes = [8, 128], strides = [1, 1]} : vector<8x512xf32> to vector<8x128xf32>
    %63 = math.tanh %62 : vector<8x128xf32>
    %64 = vector.extract_strided_slice %49 {offsets = [0, 384], sizes = [8, 128], strides = [1, 1]} : vector<8x512xf32> to vector<8x128xf32>
    %65 = arith.negf %64 : vector<8x128xf32>
    %66 = math.exp %65 : vector<8x128xf32>
    %cst_24 = arith.constant 1.000000e+00 : f32
    %67 = vector.broadcast %cst_24 : f32 to vector<8x128xf32>
    %68 = arith.addf %67, %66 : vector<8x128xf32>
    %69 = arith.divf %67, %68 : vector<8x128xf32>
    %70 = arith.mulf %61, %38 : vector<8x128xf32>
    %71 = arith.mulf %55, %63 : vector<8x128xf32>
    %72 = arith.addf %70, %71 : vector<8x128xf32>
    %73 = math.tanh %72 : vector<8x128xf32>
    %74 = arith.mulf %69, %73 : vector<8x128xf32>
    %75 = arith.index_cast %44 : i32 to index
    %c0_25 = arith.constant 0 : index
    %76 = vector.load %arg11[%75, %c0_25] : memref<64x128xf32, #tpu.memory_space<vmem>>, vector<8x128xf32>
    tpu.vector_store %arg11[%75, %c0_25], %74 {strides = array<i32>} : memref<64x128xf32, #tpu.memory_space<vmem>>, vector<8x128xf32>,
    %c2_i32 = arith.constant 2 : i32
    %c8_i32_26 = arith.constant 8 : i32
    %77 = arith.muli %c2_i32, %c8_i32_26 : i32
    %78 = tpu.assume_multiple %77, 8 : i32
    %79 = arith.index_cast %78 : i32 to index
    %c0_27 = arith.constant 0 : index
    %80 = vector.load %arg10[%79, %c0_27] : memref<64x512xf32, #tpu.memory_space<vmem>>, vector<8x512xf32>
    %c0_28 = arith.constant 0 : index
    %c0_29 = arith.constant 0 : index
    %81 = vector.load %arg2[%c0_28, %c0_29] : memref<128x512xf32, #tpu.memory_space<vmem>>, vector<128x512xf32>
    %cst_30 = arith.constant dense<0.000000e+00> : vector<8x512xf32>
    %82 = tpu.matmul %74, %81, %cst_30 {dimension_numbers = #tpu.dot_dimension_numbers<[1], [0], [0], [1], [0, 0, 1, 1], [], []>} : vector<8x128xf32>, vector<128x512xf32>, vector<8x512xf32> -> vector<8x512xf32>
    %83 = arith.addf %80, %82 : vector<8x512xf32>
    %84 = vector.extract_strided_slice %83 {offsets = [0, 0], sizes = [8, 128], strides = [1, 1]} : vector<8x512xf32> to vector<8x128xf32>
    %85 = arith.negf %84 : vector<8x128xf32>
    %86 = math.exp %85 : vector<8x128xf32>
    %cst_31 = arith.constant 1.000000e+00 : f32
    %87 = vector.broadcast %cst_31 : f32 to vector<8x128xf32>
    %88 = arith.addf %87, %86 : vector<8x128xf32>
    %89 = arith.divf %87, %88 : vector<8x128xf32>
    %90 = vector.extract_strided_slice %83 {offsets = [0, 128], sizes = [8, 128], strides = [1, 1]} : vector<8x512xf32> to vector<8x128xf32>
    %91 = arith.negf %90 : vector<8x128xf32>
    %92 = math.exp %91 : vector<8x128xf32>
    %cst_32 = arith.constant 1.000000e+00 : f32
    %93 = vector.broadcast %cst_32 : f32 to vector<8x128xf32>
    %94 = arith.addf %93, %92 : vector<8x128xf32>
    %95 = arith.divf %93, %94 : vector<8x128xf32>
    %96 = vector.extract_strided_slice %83 {offsets = [0, 256], sizes = [8, 128], strides = [1, 1]} : vector<8x512xf32> to vector<8x128xf32>
    %97 = math.tanh %96 : vector<8x128xf32>
    %98 = vector.extract_strided_slice %83 {offsets = [0, 384], sizes = [8, 128], strides = [1, 1]} : vector<8x512xf32> to vector<8x128xf32>
    %99 = arith.negf %98 : vector<8x128xf32>
    %100 = math.exp %99 : vector<8x128xf32>
    %cst_33 = arith.constant 1.000000e+00 : f32
    %101 = vector.broadcast %cst_33 : f32 to vector<8x128xf32>
    %102 = arith.addf %101, %100 : vector<8x128xf32>
    %103 = arith.divf %101, %102 : vector<8x128xf32>
    %104 = arith.mulf %95, %72 : vector<8x128xf32>
    %105 = arith.mulf %89, %97 : vector<8x128xf32>
    %106 = arith.addf %104, %105 : vector<8x128xf32>
    %107 = math.tanh %106 : vector<8x128xf32>
    %108 = arith.mulf %103, %107 : vector<8x128xf32>
    %109 = arith.index_cast %78 : i32 to index
    %c0_34 = arith.constant 0 : index
    %110 = vector.load %arg11[%109, %c0_34] : memref<64x128xf32, #tpu.memory_space<vmem>>, vector<8x128xf32>
    tpu.vector_store %arg11[%109, %c0_34], %108 {strides = array<i32>} : memref<64x128xf32, #tpu.memory_space<vmem>>, vector<8x128xf32>,
    %c3_i32 = arith.constant 3 : i32
    %c8_i32_35 = arith.constant 8 : i32
    %111 = arith.muli %c3_i32, %c8_i32_35 : i32
    %112 = tpu.assume_multiple %111, 8 : i32
    %113 = arith.index_cast %112 : i32 to index
    %c0_36 = arith.constant 0 : index
    %114 = vector.load %arg10[%113, %c0_36] : memref<64x512xf32, #tpu.memory_space<vmem>>, vector<8x512xf32>
    %c0_37 = arith.constant 0 : index
    %c0_38 = arith.constant 0 : index
    %115 = vector.load %arg2[%c0_37, %c0_38] : memref<128x512xf32, #tpu.memory_space<vmem>>, vector<128x512xf32>
    %cst_39 = arith.constant dense<0.000000e+00> : vector<8x512xf32>
    %116 = tpu.matmul %108, %115, %cst_39 {dimension_numbers = #tpu.dot_dimension_numbers<[1], [0], [0], [1], [0, 0, 1, 1], [], []>} : vector<8x128xf32>, vector<128x512xf32>, vector<8x512xf32> -> vector<8x512xf32>
    %117 = arith.addf %114, %116 : vector<8x512xf32>
    %118 = vector.extract_strided_slice %117 {offsets = [0, 0], sizes = [8, 128], strides = [1, 1]} : vector<8x512xf32> to vector<8x128xf32>
    %119 = arith.negf %118 : vector<8x128xf32>
    %120 = math.exp %119 : vector<8x128xf32>
    %cst_40 = arith.constant 1.000000e+00 : f32
    %121 = vector.broadcast %cst_40 : f32 to vector<8x128xf32>
    %122 = arith.addf %121, %120 : vector<8x128xf32>
    %123 = arith.divf %121, %122 : vector<8x128xf32>
    %124 = vector.extract_strided_slice %117 {offsets = [0, 128], sizes = [8, 128], strides = [1, 1]} : vector<8x512xf32> to vector<8x128xf32>
    %125 = arith.negf %124 : vector<8x128xf32>
    %126 = math.exp %125 : vector<8x128xf32>
    %cst_41 = arith.constant 1.000000e+00 : f32
    %127 = vector.broadcast %cst_41 : f32 to vector<8x128xf32>
    %128 = arith.addf %127, %126 : vector<8x128xf32>
    %129 = arith.divf %127, %128 : vector<8x128xf32>
    %130 = vector.extract_strided_slice %117 {offsets = [0, 256], sizes = [8, 128], strides = [1, 1]} : vector<8x512xf32> to vector<8x128xf32>
    %131 = math.tanh %130 : vector<8x128xf32>
    %132 = vector.extract_strided_slice %117 {offsets = [0, 384], sizes = [8, 128], strides = [1, 1]} : vector<8x512xf32> to vector<8x128xf32>
    %133 = arith.negf %132 : vector<8x128xf32>
    %134 = math.exp %133 : vector<8x128xf32>
    %cst_42 = arith.constant 1.000000e+00 : f32
    %135 = vector.broadcast %cst_42 : f32 to vector<8x128xf32>
    %136 = arith.addf %135, %134 : vector<8x128xf32>
    %137 = arith.divf %135, %136 : vector<8x128xf32>
    %138 = arith.mulf %129, %106 : vector<8x128xf32>
    %139 = arith.mulf %123, %131 : vector<8x128xf32>
    %140 = arith.addf %138, %139 : vector<8x128xf32>
    %141 = math.tanh %140 : vector<8x128xf32>
    %142 = arith.mulf %137, %141 : vector<8x128xf32>
    %143 = arith.index_cast %112 : i32 to index
    %c0_43 = arith.constant 0 : index
    %144 = vector.load %arg11[%143, %c0_43] : memref<64x128xf32, #tpu.memory_space<vmem>>, vector<8x128xf32>
    tpu.vector_store %arg11[%143, %c0_43], %142 {strides = array<i32>} : memref<64x128xf32, #tpu.memory_space<vmem>>, vector<8x128xf32>,
    %c4_i32 = arith.constant 4 : i32
    %c8_i32_44 = arith.constant 8 : i32
    %145 = arith.muli %c4_i32, %c8_i32_44 : i32
    %146 = tpu.assume_multiple %145, 8 : i32
    %147 = arith.index_cast %146 : i32 to index
    %c0_45 = arith.constant 0 : index
    %148 = vector.load %arg10[%147, %c0_45] : memref<64x512xf32, #tpu.memory_space<vmem>>, vector<8x512xf32>
    %c0_46 = arith.constant 0 : index
    %c0_47 = arith.constant 0 : index
    %149 = vector.load %arg2[%c0_46, %c0_47] : memref<128x512xf32, #tpu.memory_space<vmem>>, vector<128x512xf32>
    %cst_48 = arith.constant dense<0.000000e+00> : vector<8x512xf32>
    %150 = tpu.matmul %142, %149, %cst_48 {dimension_numbers = #tpu.dot_dimension_numbers<[1], [0], [0], [1], [0, 0, 1, 1], [], []>} : vector<8x128xf32>, vector<128x512xf32>, vector<8x512xf32> -> vector<8x512xf32>
    %151 = arith.addf %148, %150 : vector<8x512xf32>
    %152 = vector.extract_strided_slice %151 {offsets = [0, 0], sizes = [8, 128], strides = [1, 1]} : vector<8x512xf32> to vector<8x128xf32>
    %153 = arith.negf %152 : vector<8x128xf32>
    %154 = math.exp %153 : vector<8x128xf32>
    %cst_49 = arith.constant 1.000000e+00 : f32
    %155 = vector.broadcast %cst_49 : f32 to vector<8x128xf32>
    %156 = arith.addf %155, %154 : vector<8x128xf32>
    %157 = arith.divf %155, %156 : vector<8x128xf32>
    %158 = vector.extract_strided_slice %151 {offsets = [0, 128], sizes = [8, 128], strides = [1, 1]} : vector<8x512xf32> to vector<8x128xf32>
    %159 = arith.negf %158 : vector<8x128xf32>
    %160 = math.exp %159 : vector<8x128xf32>
    %cst_50 = arith.constant 1.000000e+00 : f32
    %161 = vector.broadcast %cst_50 : f32 to vector<8x128xf32>
    %162 = arith.addf %161, %160 : vector<8x128xf32>
    %163 = arith.divf %161, %162 : vector<8x128xf32>
    %164 = vector.extract_strided_slice %151 {offsets = [0, 256], sizes = [8, 128], strides = [1, 1]} : vector<8x512xf32> to vector<8x128xf32>
    %165 = math.tanh %164 : vector<8x128xf32>
    %166 = vector.extract_strided_slice %151 {offsets = [0, 384], sizes = [8, 128], strides = [1, 1]} : vector<8x512xf32> to vector<8x128xf32>
    %167 = arith.negf %166 : vector<8x128xf32>
    %168 = math.exp %167 : vector<8x128xf32>
    %cst_51 = arith.constant 1.000000e+00 : f32
    %169 = vector.broadcast %cst_51 : f32 to vector<8x128xf32>
    %170 = arith.addf %169, %168 : vector<8x128xf32>
    %171 = arith.divf %169, %170 : vector<8x128xf32>
    %172 = arith.mulf %163, %140 : vector<8x128xf32>
    %173 = arith.mulf %157, %165 : vector<8x128xf32>
    %174 = arith.addf %172, %173 : vector<8x128xf32>
    %175 = math.tanh %174 : vector<8x128xf32>
    %176 = arith.mulf %171, %175 : vector<8x128xf32>
    %177 = arith.index_cast %146 : i32 to index
    %c0_52 = arith.constant 0 : index
    %178 = vector.load %arg11[%177, %c0_52] : memref<64x128xf32, #tpu.memory_space<vmem>>, vector<8x128xf32>
    tpu.vector_store %arg11[%177, %c0_52], %176 {strides = array<i32>} : memref<64x128xf32, #tpu.memory_space<vmem>>, vector<8x128xf32>,
    %c5_i32 = arith.constant 5 : i32
    %c8_i32_53 = arith.constant 8 : i32
    %179 = arith.muli %c5_i32, %c8_i32_53 : i32
    %180 = tpu.assume_multiple %179, 8 : i32
    %181 = arith.index_cast %180 : i32 to index
    %c0_54 = arith.constant 0 : index
    %182 = vector.load %arg10[%181, %c0_54] : memref<64x512xf32, #tpu.memory_space<vmem>>, vector<8x512xf32>
    %c0_55 = arith.constant 0 : index
    %c0_56 = arith.constant 0 : index
    %183 = vector.load %arg2[%c0_55, %c0_56] : memref<128x512xf32, #tpu.memory_space<vmem>>, vector<128x512xf32>
    %cst_57 = arith.constant dense<0.000000e+00> : vector<8x512xf32>
    %184 = tpu.matmul %176, %183, %cst_57 {dimension_numbers = #tpu.dot_dimension_numbers<[1], [0], [0], [1], [0, 0, 1, 1], [], []>} : vector<8x128xf32>, vector<128x512xf32>, vector<8x512xf32> -> vector<8x512xf32>
    %185 = arith.addf %182, %184 : vector<8x512xf32>
    %186 = vector.extract_strided_slice %185 {offsets = [0, 0], sizes = [8, 128], strides = [1, 1]} : vector<8x512xf32> to vector<8x128xf32>
    %187 = arith.negf %186 : vector<8x128xf32>
    %188 = math.exp %187 : vector<8x128xf32>
    %cst_58 = arith.constant 1.000000e+00 : f32
    %189 = vector.broadcast %cst_58 : f32 to vector<8x128xf32>
    %190 = arith.addf %189, %188 : vector<8x128xf32>
    %191 = arith.divf %189, %190 : vector<8x128xf32>
    %192 = vector.extract_strided_slice %185 {offsets = [0, 128], sizes = [8, 128], strides = [1, 1]} : vector<8x512xf32> to vector<8x128xf32>
    %193 = arith.negf %192 : vector<8x128xf32>
    %194 = math.exp %193 : vector<8x128xf32>
    %cst_59 = arith.constant 1.000000e+00 : f32
    %195 = vector.broadcast %cst_59 : f32 to vector<8x128xf32>
    %196 = arith.addf %195, %194 : vector<8x128xf32>
    %197 = arith.divf %195, %196 : vector<8x128xf32>
    %198 = vector.extract_strided_slice %185 {offsets = [0, 256], sizes = [8, 128], strides = [1, 1]} : vector<8x512xf32> to vector<8x128xf32>
    %199 = math.tanh %198 : vector<8x128xf32>
    %200 = vector.extract_strided_slice %185 {offsets = [0, 384], sizes = [8, 128], strides = [1, 1]} : vector<8x512xf32> to vector<8x128xf32>
    %201 = arith.negf %200 : vector<8x128xf32>
    %202 = math.exp %201 : vector<8x128xf32>
    %cst_60 = arith.constant 1.000000e+00 : f32
    %203 = vector.broadcast %cst_60 : f32 to vector<8x128xf32>
    %204 = arith.addf %203, %202 : vector<8x128xf32>
    %205 = arith.divf %203, %204 : vector<8x128xf32>
    %206 = arith.mulf %197, %174 : vector<8x128xf32>
    %207 = arith.mulf %191, %199 : vector<8x128xf32>
    %208 = arith.addf %206, %207 : vector<8x128xf32>
    %209 = math.tanh %208 : vector<8x128xf32>
    %210 = arith.mulf %205, %209 : vector<8x128xf32>
    %211 = arith.index_cast %180 : i32 to index
    %c0_61 = arith.constant 0 : index
    %212 = vector.load %arg11[%211, %c0_61] : memref<64x128xf32, #tpu.memory_space<vmem>>, vector<8x128xf32>
    tpu.vector_store %arg11[%211, %c0_61], %210 {strides = array<i32>} : memref<64x128xf32, #tpu.memory_space<vmem>>, vector<8x128xf32>,
    %c6_i32 = arith.constant 6 : i32
    %c8_i32_62 = arith.constant 8 : i32
    %213 = arith.muli %c6_i32, %c8_i32_62 : i32
    %214 = tpu.assume_multiple %213, 8 : i32
    %215 = arith.index_cast %214 : i32 to index
    %c0_63 = arith.constant 0 : index
    %216 = vector.load %arg10[%215, %c0_63] : memref<64x512xf32, #tpu.memory_space<vmem>>, vector<8x512xf32>
    %c0_64 = arith.constant 0 : index
    %c0_65 = arith.constant 0 : index
    %217 = vector.load %arg2[%c0_64, %c0_65] : memref<128x512xf32, #tpu.memory_space<vmem>>, vector<128x512xf32>
    %cst_66 = arith.constant dense<0.000000e+00> : vector<8x512xf32>
    %218 = tpu.matmul %210, %217, %cst_66 {dimension_numbers = #tpu.dot_dimension_numbers<[1], [0], [0], [1], [0, 0, 1, 1], [], []>} : vector<8x128xf32>, vector<128x512xf32>, vector<8x512xf32> -> vector<8x512xf32>
    %219 = arith.addf %216, %218 : vector<8x512xf32>
    %220 = vector.extract_strided_slice %219 {offsets = [0, 0], sizes = [8, 128], strides = [1, 1]} : vector<8x512xf32> to vector<8x128xf32>
    %221 = arith.negf %220 : vector<8x128xf32>
    %222 = math.exp %221 : vector<8x128xf32>
    %cst_67 = arith.constant 1.000000e+00 : f32
    %223 = vector.broadcast %cst_67 : f32 to vector<8x128xf32>
    %224 = arith.addf %223, %222 : vector<8x128xf32>
    %225 = arith.divf %223, %224 : vector<8x128xf32>
    %226 = vector.extract_strided_slice %219 {offsets = [0, 128], sizes = [8, 128], strides = [1, 1]} : vector<8x512xf32> to vector<8x128xf32>
    %227 = arith.negf %226 : vector<8x128xf32>
    %228 = math.exp %227 : vector<8x128xf32>
    %cst_68 = arith.constant 1.000000e+00 : f32
    %229 = vector.broadcast %cst_68 : f32 to vector<8x128xf32>
    %230 = arith.addf %229, %228 : vector<8x128xf32>
    %231 = arith.divf %229, %230 : vector<8x128xf32>
    %232 = vector.extract_strided_slice %219 {offsets = [0, 256], sizes = [8, 128], strides = [1, 1]} : vector<8x512xf32> to vector<8x128xf32>
    %233 = math.tanh %232 : vector<8x128xf32>
    %234 = vector.extract_strided_slice %219 {offsets = [0, 384], sizes = [8, 128], strides = [1, 1]} : vector<8x512xf32> to vector<8x128xf32>
    %235 = arith.negf %234 : vector<8x128xf32>
    %236 = math.exp %235 : vector<8x128xf32>
    %cst_69 = arith.constant 1.000000e+00 : f32
    %237 = vector.broadcast %cst_69 : f32 to vector<8x128xf32>
    %238 = arith.addf %237, %236 : vector<8x128xf32>
    %239 = arith.divf %237, %238 : vector<8x128xf32>
    %240 = arith.mulf %231, %208 : vector<8x128xf32>
    %241 = arith.mulf %225, %233 : vector<8x128xf32>
    %242 = arith.addf %240, %241 : vector<8x128xf32>
    %243 = math.tanh %242 : vector<8x128xf32>
    %244 = arith.mulf %239, %243 : vector<8x128xf32>
    %245 = arith.index_cast %214 : i32 to index
    %c0_70 = arith.constant 0 : index
    %246 = vector.load %arg11[%245, %c0_70] : memref<64x128xf32, #tpu.memory_space<vmem>>, vector<8x128xf32>
    tpu.vector_store %arg11[%245, %c0_70], %244 {strides = array<i32>} : memref<64x128xf32, #tpu.memory_space<vmem>>, vector<8x128xf32>,
    %c7_i32 = arith.constant 7 : i32
    %c8_i32_71 = arith.constant 8 : i32
    %247 = arith.muli %c7_i32, %c8_i32_71 : i32
    %248 = tpu.assume_multiple %247, 8 : i32
    %249 = arith.index_cast %248 : i32 to index
    %c0_72 = arith.constant 0 : index
    %250 = vector.load %arg10[%249, %c0_72] : memref<64x512xf32, #tpu.memory_space<vmem>>, vector<8x512xf32>
    %c0_73 = arith.constant 0 : index
    %c0_74 = arith.constant 0 : index
    %251 = vector.load %arg2[%c0_73, %c0_74] : memref<128x512xf32, #tpu.memory_space<vmem>>, vector<128x512xf32>
    %cst_75 = arith.constant dense<0.000000e+00> : vector<8x512xf32>
    %252 = tpu.matmul %244, %251, %cst_75 {dimension_numbers = #tpu.dot_dimension_numbers<[1], [0], [0], [1], [0, 0, 1, 1], [], []>} : vector<8x128xf32>, vector<128x512xf32>, vector<8x512xf32> -> vector<8x512xf32>
    %253 = arith.addf %250, %252 : vector<8x512xf32>
    %254 = vector.extract_strided_slice %253 {offsets = [0, 0], sizes = [8, 128], strides = [1, 1]} : vector<8x512xf32> to vector<8x128xf32>
    %255 = arith.negf %254 : vector<8x128xf32>
    %256 = math.exp %255 : vector<8x128xf32>
    %cst_76 = arith.constant 1.000000e+00 : f32
    %257 = vector.broadcast %cst_76 : f32 to vector<8x128xf32>
    %258 = arith.addf %257, %256 : vector<8x128xf32>
    %259 = arith.divf %257, %258 : vector<8x128xf32>
    %260 = vector.extract_strided_slice %253 {offsets = [0, 128], sizes = [8, 128], strides = [1, 1]} : vector<8x512xf32> to vector<8x128xf32>
    %261 = arith.negf %260 : vector<8x128xf32>
    %262 = math.exp %261 : vector<8x128xf32>
    %cst_77 = arith.constant 1.000000e+00 : f32
    %263 = vector.broadcast %cst_77 : f32 to vector<8x128xf32>
    %264 = arith.addf %263, %262 : vector<8x128xf32>
    %265 = arith.divf %263, %264 : vector<8x128xf32>
    %266 = vector.extract_strided_slice %253 {offsets = [0, 256], sizes = [8, 128], strides = [1, 1]} : vector<8x512xf32> to vector<8x128xf32>
    %267 = math.tanh %266 : vector<8x128xf32>
    %268 = vector.extract_strided_slice %253 {offsets = [0, 384], sizes = [8, 128], strides = [1, 1]} : vector<8x512xf32> to vector<8x128xf32>
    %269 = arith.negf %268 : vector<8x128xf32>
    %270 = math.exp %269 : vector<8x128xf32>
    %cst_78 = arith.constant 1.000000e+00 : f32
    %271 = vector.broadcast %cst_78 : f32 to vector<8x128xf32>
    %272 = arith.addf %271, %270 : vector<8x128xf32>
    %273 = arith.divf %271, %272 : vector<8x128xf32>
    %274 = arith.mulf %265, %242 : vector<8x128xf32>
    %275 = arith.mulf %259, %267 : vector<8x128xf32>
    %276 = arith.addf %274, %275 : vector<8x128xf32>
    %277 = math.tanh %276 : vector<8x128xf32>
    %278 = arith.mulf %273, %277 : vector<8x128xf32>
    %279 = arith.index_cast %248 : i32 to index
    %c0_79 = arith.constant 0 : index
    %280 = vector.load %arg11[%279, %c0_79] : memref<64x128xf32, #tpu.memory_space<vmem>>, vector<8x128xf32>
    tpu.vector_store %arg11[%279, %c0_79], %278 {strides = array<i32>} : memref<64x128xf32, #tpu.memory_space<vmem>>, vector<8x128xf32>,
    %c8_i32_80 = arith.constant 8 : i32
    %c0_81 = arith.constant 0 : index
    %c0_82 = arith.constant 0 : index
    %281 = vector.load %arg11[%c0_81, %c0_82] : memref<64x128xf32, #tpu.memory_space<vmem>>, vector<64x128xf32>
    %c0_83 = arith.constant 0 : index
    %c0_84 = arith.constant 0 : index
    %282 = vector.load %arg4[%c0_83, %c0_84] : memref<128x512xf32, #tpu.memory_space<vmem>>, vector<128x512xf32>
    %cst_85 = arith.constant dense<0.000000e+00> : vector<64x512xf32>
    %283 = tpu.matmul %281, %282, %cst_85 {dimension_numbers = #tpu.dot_dimension_numbers<[1], [0], [0], [1], [0, 0, 1, 1], [], []>} : vector<64x128xf32>, vector<128x512xf32>, vector<64x512xf32> -> vector<64x512xf32>
    %c0_86 = arith.constant 0 : index
    %c0_87 = arith.constant 0 : index
    %284 = vector.load %arg6[%c0_86, %c0_87] : memref<1x512xf32, #tpu.memory_space<vmem>>, vector<1x512xf32>
    %285 = vector.broadcast %284 : vector<1x512xf32> to vector<64x512xf32>
    %286 = arith.addf %283, %285 : vector<64x512xf32>
    %c0_88 = arith.constant 0 : index
    %c0_89 = arith.constant 0 : index
    %287 = vector.load %arg10[%c0_88, %c0_89] : memref<64x512xf32, #tpu.memory_space<vmem>>, vector<64x512xf32>
    tpu.vector_store %arg10[%c0_88, %c0_89], %286 {strides = array<i32>} : memref<64x512xf32, #tpu.memory_space<vmem>>, vector<64x512xf32>,
    %cst_90 = arith.constant 0.000000e+00 : f32
    %288 = vector.broadcast %cst_90 : f32 to vector<8x128xf32>
    %cst_91 = arith.constant 0.000000e+00 : f32
    %289 = vector.broadcast %cst_91 : f32 to vector<8x128xf32>
    %c0_i32_92 = arith.constant 0 : i32
    %c8_i32_93 = arith.constant 8 : i32
    %290 = arith.muli %c0_i32_92, %c8_i32_93 : i32
    %291 = tpu.assume_multiple %290, 8 : i32
    %292 = arith.index_cast %291 : i32 to index
    %c0_94 = arith.constant 0 : index
    %293 = vector.load %arg10[%292, %c0_94] : memref<64x512xf32, #tpu.memory_space<vmem>>, vector<8x512xf32>
    %c0_95 = arith.constant 0 : index
    %c0_96 = arith.constant 0 : index
    %294 = vector.load %arg5[%c0_95, %c0_96] : memref<128x512xf32, #tpu.memory_space<vmem>>, vector<128x512xf32>
    %cst_97 = arith.constant dense<0.000000e+00> : vector<8x512xf32>
    %295 = tpu.matmul %288, %294, %cst_97 {dimension_numbers = #tpu.dot_dimension_numbers<[1], [0], [0], [1], [0, 0, 1, 1], [], []>} : vector<8x128xf32>, vector<128x512xf32>, vector<8x512xf32> -> vector<8x512xf32>
    %296 = arith.addf %293, %295 : vector<8x512xf32>
    %297 = vector.extract_strided_slice %296 {offsets = [0, 0], sizes = [8, 128], strides = [1, 1]} : vector<8x512xf32> to vector<8x128xf32>
    %298 = arith.negf %297 : vector<8x128xf32>
    %299 = math.exp %298 : vector<8x128xf32>
    %cst_98 = arith.constant 1.000000e+00 : f32
    %300 = vector.broadcast %cst_98 : f32 to vector<8x128xf32>
    %301 = arith.addf %300, %299 : vector<8x128xf32>
    %302 = arith.divf %300, %301 : vector<8x128xf32>
    %303 = vector.extract_strided_slice %296 {offsets = [0, 128], sizes = [8, 128], strides = [1, 1]} : vector<8x512xf32> to vector<8x128xf32>
    %304 = arith.negf %303 : vector<8x128xf32>
    %305 = math.exp %304 : vector<8x128xf32>
    %cst_99 = arith.constant 1.000000e+00 : f32
    %306 = vector.broadcast %cst_99 : f32 to vector<8x128xf32>
    %307 = arith.addf %306, %305 : vector<8x128xf32>
    %308 = arith.divf %306, %307 : vector<8x128xf32>
    %309 = vector.extract_strided_slice %296 {offsets = [0, 256], sizes = [8, 128], strides = [1, 1]} : vector<8x512xf32> to vector<8x128xf32>
    %310 = math.tanh %309 : vector<8x128xf32>
    %311 = vector.extract_strided_slice %296 {offsets = [0, 384], sizes = [8, 128], strides = [1, 1]} : vector<8x512xf32> to vector<8x128xf32>
    %312 = arith.negf %311 : vector<8x128xf32>
    %313 = math.exp %312 : vector<8x128xf32>
    %cst_100 = arith.constant 1.000000e+00 : f32
    %314 = vector.broadcast %cst_100 : f32 to vector<8x128xf32>
    %315 = arith.addf %314, %313 : vector<8x128xf32>
    %316 = arith.divf %314, %315 : vector<8x128xf32>
    %317 = arith.mulf %308, %289 : vector<8x128xf32>
    %318 = arith.mulf %302, %310 : vector<8x128xf32>
    %319 = arith.addf %317, %318 : vector<8x128xf32>
    %320 = math.tanh %319 : vector<8x128xf32>
    %321 = arith.mulf %316, %320 : vector<8x128xf32>
    %322 = arith.index_cast %291 : i32 to index
    %c0_101 = arith.constant 0 : index
    %323 = vector.load %arg12[%322, %c0_101] : memref<64x128xf32, #tpu.memory_space<vmem>>, vector<8x128xf32>
    tpu.vector_store %arg12[%322, %c0_101], %321 {strides = array<i32>} : memref<64x128xf32, #tpu.memory_space<vmem>>, vector<8x128xf32>,
    %c1_i32_102 = arith.constant 1 : i32
    %c8_i32_103 = arith.constant 8 : i32
    %324 = arith.muli %c1_i32_102, %c8_i32_103 : i32
    %325 = tpu.assume_multiple %324, 8 : i32
    %326 = arith.index_cast %325 : i32 to index
    %c0_104 = arith.constant 0 : index
    %327 = vector.load %arg10[%326, %c0_104] : memref<64x512xf32, #tpu.memory_space<vmem>>, vector<8x512xf32>
    %c0_105 = arith.constant 0 : index
    %c0_106 = arith.constant 0 : index
    %328 = vector.load %arg5[%c0_105, %c0_106] : memref<128x512xf32, #tpu.memory_space<vmem>>, vector<128x512xf32>
    %cst_107 = arith.constant dense<0.000000e+00> : vector<8x512xf32>
    %329 = tpu.matmul %321, %328, %cst_107 {dimension_numbers = #tpu.dot_dimension_numbers<[1], [0], [0], [1], [0, 0, 1, 1], [], []>} : vector<8x128xf32>, vector<128x512xf32>, vector<8x512xf32> -> vector<8x512xf32>
    %330 = arith.addf %327, %329 : vector<8x512xf32>
    %331 = vector.extract_strided_slice %330 {offsets = [0, 0], sizes = [8, 128], strides = [1, 1]} : vector<8x512xf32> to vector<8x128xf32>
    %332 = arith.negf %331 : vector<8x128xf32>
    %333 = math.exp %332 : vector<8x128xf32>
    %cst_108 = arith.constant 1.000000e+00 : f32
    %334 = vector.broadcast %cst_108 : f32 to vector<8x128xf32>
    %335 = arith.addf %334, %333 : vector<8x128xf32>
    %336 = arith.divf %334, %335 : vector<8x128xf32>
    %337 = vector.extract_strided_slice %330 {offsets = [0, 128], sizes = [8, 128], strides = [1, 1]} : vector<8x512xf32> to vector<8x128xf32>
    %338 = arith.negf %337 : vector<8x128xf32>
    %339 = math.exp %338 : vector<8x128xf32>
    %cst_109 = arith.constant 1.000000e+00 : f32
    %340 = vector.broadcast %cst_109 : f32 to vector<8x128xf32>
    %341 = arith.addf %340, %339 : vector<8x128xf32>
    %342 = arith.divf %340, %341 : vector<8x128xf32>
    %343 = vector.extract_strided_slice %330 {offsets = [0, 256], sizes = [8, 128], strides = [1, 1]} : vector<8x512xf32> to vector<8x128xf32>
    %344 = math.tanh %343 : vector<8x128xf32>
    %345 = vector.extract_strided_slice %330 {offsets = [0, 384], sizes = [8, 128], strides = [1, 1]} : vector<8x512xf32> to vector<8x128xf32>
    %346 = arith.negf %345 : vector<8x128xf32>
    %347 = math.exp %346 : vector<8x128xf32>
    %cst_110 = arith.constant 1.000000e+00 : f32
    %348 = vector.broadcast %cst_110 : f32 to vector<8x128xf32>
    %349 = arith.addf %348, %347 : vector<8x128xf32>
    %350 = arith.divf %348, %349 : vector<8x128xf32>
    %351 = arith.mulf %342, %319 : vector<8x128xf32>
    %352 = arith.mulf %336, %344 : vector<8x128xf32>
    %353 = arith.addf %351, %352 : vector<8x128xf32>
    %354 = math.tanh %353 : vector<8x128xf32>
    %355 = arith.mulf %350, %354 : vector<8x128xf32>
    %356 = arith.index_cast %325 : i32 to index
    %c0_111 = arith.constant 0 : index
    %357 = vector.load %arg12[%356, %c0_111] : memref<64x128xf32, #tpu.memory_space<vmem>>, vector<8x128xf32>
    tpu.vector_store %arg12[%356, %c0_111], %355 {strides = array<i32>} : memref<64x128xf32, #tpu.memory_space<vmem>>, vector<8x128xf32>,
    %c2_i32_112 = arith.constant 2 : i32
    %c8_i32_113 = arith.constant 8 : i32
    %358 = arith.muli %c2_i32_112, %c8_i32_113 : i32
    %359 = tpu.assume_multiple %358, 8 : i32
    %360 = arith.index_cast %359 : i32 to index
    %c0_114 = arith.constant 0 : index
    %361 = vector.load %arg10[%360, %c0_114] : memref<64x512xf32, #tpu.memory_space<vmem>>, vector<8x512xf32>
    %c0_115 = arith.constant 0 : index
    %c0_116 = arith.constant 0 : index
    %362 = vector.load %arg5[%c0_115, %c0_116] : memref<128x512xf32, #tpu.memory_space<vmem>>, vector<128x512xf32>
    %cst_117 = arith.constant dense<0.000000e+00> : vector<8x512xf32>
    %363 = tpu.matmul %355, %362, %cst_117 {dimension_numbers = #tpu.dot_dimension_numbers<[1], [0], [0], [1], [0, 0, 1, 1], [], []>} : vector<8x128xf32>, vector<128x512xf32>, vector<8x512xf32> -> vector<8x512xf32>
    %364 = arith.addf %361, %363 : vector<8x512xf32>
    %365 = vector.extract_strided_slice %364 {offsets = [0, 0], sizes = [8, 128], strides = [1, 1]} : vector<8x512xf32> to vector<8x128xf32>
    %366 = arith.negf %365 : vector<8x128xf32>
    %367 = math.exp %366 : vector<8x128xf32>
    %cst_118 = arith.constant 1.000000e+00 : f32
    %368 = vector.broadcast %cst_118 : f32 to vector<8x128xf32>
    %369 = arith.addf %368, %367 : vector<8x128xf32>
    %370 = arith.divf %368, %369 : vector<8x128xf32>
    %371 = vector.extract_strided_slice %364 {offsets = [0, 128], sizes = [8, 128], strides = [1, 1]} : vector<8x512xf32> to vector<8x128xf32>
    %372 = arith.negf %371 : vector<8x128xf32>
    %373 = math.exp %372 : vector<8x128xf32>
    %cst_119 = arith.constant 1.000000e+00 : f32
    %374 = vector.broadcast %cst_119 : f32 to vector<8x128xf32>
    %375 = arith.addf %374, %373 : vector<8x128xf32>
    %376 = arith.divf %374, %375 : vector<8x128xf32>
    %377 = vector.extract_strided_slice %364 {offsets = [0, 256], sizes = [8, 128], strides = [1, 1]} : vector<8x512xf32> to vector<8x128xf32>
    %378 = math.tanh %377 : vector<8x128xf32>
    %379 = vector.extract_strided_slice %364 {offsets = [0, 384], sizes = [8, 128], strides = [1, 1]} : vector<8x512xf32> to vector<8x128xf32>
    %380 = arith.negf %379 : vector<8x128xf32>
    %381 = math.exp %380 : vector<8x128xf32>
    %cst_120 = arith.constant 1.000000e+00 : f32
    %382 = vector.broadcast %cst_120 : f32 to vector<8x128xf32>
    %383 = arith.addf %382, %381 : vector<8x128xf32>
    %384 = arith.divf %382, %383 : vector<8x128xf32>
    %385 = arith.mulf %376, %353 : vector<8x128xf32>
    %386 = arith.mulf %370, %378 : vector<8x128xf32>
    %387 = arith.addf %385, %386 : vector<8x128xf32>
    %388 = math.tanh %387 : vector<8x128xf32>
    %389 = arith.mulf %384, %388 : vector<8x128xf32>
    %390 = arith.index_cast %359 : i32 to index
    %c0_121 = arith.constant 0 : index
    %391 = vector.load %arg12[%390, %c0_121] : memref<64x128xf32, #tpu.memory_space<vmem>>, vector<8x128xf32>
    tpu.vector_store %arg12[%390, %c0_121], %389 {strides = array<i32>} : memref<64x128xf32, #tpu.memory_space<vmem>>, vector<8x128xf32>,
    %c3_i32_122 = arith.constant 3 : i32
    %c8_i32_123 = arith.constant 8 : i32
    %392 = arith.muli %c3_i32_122, %c8_i32_123 : i32
    %393 = tpu.assume_multiple %392, 8 : i32
    %394 = arith.index_cast %393 : i32 to index
    %c0_124 = arith.constant 0 : index
    %395 = vector.load %arg10[%394, %c0_124] : memref<64x512xf32, #tpu.memory_space<vmem>>, vector<8x512xf32>
    %c0_125 = arith.constant 0 : index
    %c0_126 = arith.constant 0 : index
    %396 = vector.load %arg5[%c0_125, %c0_126] : memref<128x512xf32, #tpu.memory_space<vmem>>, vector<128x512xf32>
    %cst_127 = arith.constant dense<0.000000e+00> : vector<8x512xf32>
    %397 = tpu.matmul %389, %396, %cst_127 {dimension_numbers = #tpu.dot_dimension_numbers<[1], [0], [0], [1], [0, 0, 1, 1], [], []>} : vector<8x128xf32>, vector<128x512xf32>, vector<8x512xf32> -> vector<8x512xf32>
    %398 = arith.addf %395, %397 : vector<8x512xf32>
    %399 = vector.extract_strided_slice %398 {offsets = [0, 0], sizes = [8, 128], strides = [1, 1]} : vector<8x512xf32> to vector<8x128xf32>
    %400 = arith.negf %399 : vector<8x128xf32>
    %401 = math.exp %400 : vector<8x128xf32>
    %cst_128 = arith.constant 1.000000e+00 : f32
    %402 = vector.broadcast %cst_128 : f32 to vector<8x128xf32>
    %403 = arith.addf %402, %401 : vector<8x128xf32>
    %404 = arith.divf %402, %403 : vector<8x128xf32>
    %405 = vector.extract_strided_slice %398 {offsets = [0, 128], sizes = [8, 128], strides = [1, 1]} : vector<8x512xf32> to vector<8x128xf32>
    %406 = arith.negf %405 : vector<8x128xf32>
    %407 = math.exp %406 : vector<8x128xf32>
    %cst_129 = arith.constant 1.000000e+00 : f32
    %408 = vector.broadcast %cst_129 : f32 to vector<8x128xf32>
    %409 = arith.addf %408, %407 : vector<8x128xf32>
    %410 = arith.divf %408, %409 : vector<8x128xf32>
    %411 = vector.extract_strided_slice %398 {offsets = [0, 256], sizes = [8, 128], strides = [1, 1]} : vector<8x512xf32> to vector<8x128xf32>
    %412 = math.tanh %411 : vector<8x128xf32>
    %413 = vector.extract_strided_slice %398 {offsets = [0, 384], sizes = [8, 128], strides = [1, 1]} : vector<8x512xf32> to vector<8x128xf32>
    %414 = arith.negf %413 : vector<8x128xf32>
    %415 = math.exp %414 : vector<8x128xf32>
    %cst_130 = arith.constant 1.000000e+00 : f32
    %416 = vector.broadcast %cst_130 : f32 to vector<8x128xf32>
    %417 = arith.addf %416, %415 : vector<8x128xf32>
    %418 = arith.divf %416, %417 : vector<8x128xf32>
    %419 = arith.mulf %410, %387 : vector<8x128xf32>
    %420 = arith.mulf %404, %412 : vector<8x128xf32>
    %421 = arith.addf %419, %420 : vector<8x128xf32>
    %422 = math.tanh %421 : vector<8x128xf32>
    %423 = arith.mulf %418, %422 : vector<8x128xf32>
    %424 = arith.index_cast %393 : i32 to index
    %c0_131 = arith.constant 0 : index
    %425 = vector.load %arg12[%424, %c0_131] : memref<64x128xf32, #tpu.memory_space<vmem>>, vector<8x128xf32>
    tpu.vector_store %arg12[%424, %c0_131], %423 {strides = array<i32>} : memref<64x128xf32, #tpu.memory_space<vmem>>, vector<8x128xf32>,
    %c4_i32_132 = arith.constant 4 : i32
    %c8_i32_133 = arith.constant 8 : i32
    %426 = arith.muli %c4_i32_132, %c8_i32_133 : i32
    %427 = tpu.assume_multiple %426, 8 : i32
    %428 = arith.index_cast %427 : i32 to index
    %c0_134 = arith.constant 0 : index
    %429 = vector.load %arg10[%428, %c0_134] : memref<64x512xf32, #tpu.memory_space<vmem>>, vector<8x512xf32>
    %c0_135 = arith.constant 0 : index
    %c0_136 = arith.constant 0 : index
    %430 = vector.load %arg5[%c0_135, %c0_136] : memref<128x512xf32, #tpu.memory_space<vmem>>, vector<128x512xf32>
    %cst_137 = arith.constant dense<0.000000e+00> : vector<8x512xf32>
    %431 = tpu.matmul %423, %430, %cst_137 {dimension_numbers = #tpu.dot_dimension_numbers<[1], [0], [0], [1], [0, 0, 1, 1], [], []>} : vector<8x128xf32>, vector<128x512xf32>, vector<8x512xf32> -> vector<8x512xf32>
    %432 = arith.addf %429, %431 : vector<8x512xf32>
    %433 = vector.extract_strided_slice %432 {offsets = [0, 0], sizes = [8, 128], strides = [1, 1]} : vector<8x512xf32> to vector<8x128xf32>
    %434 = arith.negf %433 : vector<8x128xf32>
    %435 = math.exp %434 : vector<8x128xf32>
    %cst_138 = arith.constant 1.000000e+00 : f32
    %436 = vector.broadcast %cst_138 : f32 to vector<8x128xf32>
    %437 = arith.addf %436, %435 : vector<8x128xf32>
    %438 = arith.divf %436, %437 : vector<8x128xf32>
    %439 = vector.extract_strided_slice %432 {offsets = [0, 128], sizes = [8, 128], strides = [1, 1]} : vector<8x512xf32> to vector<8x128xf32>
    %440 = arith.negf %439 : vector<8x128xf32>
    %441 = math.exp %440 : vector<8x128xf32>
    %cst_139 = arith.constant 1.000000e+00 : f32
    %442 = vector.broadcast %cst_139 : f32 to vector<8x128xf32>
    %443 = arith.addf %442, %441 : vector<8x128xf32>
    %444 = arith.divf %442, %443 : vector<8x128xf32>
    %445 = vector.extract_strided_slice %432 {offsets = [0, 256], sizes = [8, 128], strides = [1, 1]} : vector<8x512xf32> to vector<8x128xf32>
    %446 = math.tanh %445 : vector<8x128xf32>
    %447 = vector.extract_strided_slice %432 {offsets = [0, 384], sizes = [8, 128], strides = [1, 1]} : vector<8x512xf32> to vector<8x128xf32>
    %448 = arith.negf %447 : vector<8x128xf32>
    %449 = math.exp %448 : vector<8x128xf32>
    %cst_140 = arith.constant 1.000000e+00 : f32
    %450 = vector.broadcast %cst_140 : f32 to vector<8x128xf32>
    %451 = arith.addf %450, %449 : vector<8x128xf32>
    %452 = arith.divf %450, %451 : vector<8x128xf32>
    %453 = arith.mulf %444, %421 : vector<8x128xf32>
    %454 = arith.mulf %438, %446 : vector<8x128xf32>
    %455 = arith.addf %453, %454 : vector<8x128xf32>
    %456 = math.tanh %455 : vector<8x128xf32>
    %457 = arith.mulf %452, %456 : vector<8x128xf32>
    %458 = arith.index_cast %427 : i32 to index
    %c0_141 = arith.constant 0 : index
    %459 = vector.load %arg12[%458, %c0_141] : memref<64x128xf32, #tpu.memory_space<vmem>>, vector<8x128xf32>
    tpu.vector_store %arg12[%458, %c0_141], %457 {strides = array<i32>} : memref<64x128xf32, #tpu.memory_space<vmem>>, vector<8x128xf32>,
    %c5_i32_142 = arith.constant 5 : i32
    %c8_i32_143 = arith.constant 8 : i32
    %460 = arith.muli %c5_i32_142, %c8_i32_143 : i32
    %461 = tpu.assume_multiple %460, 8 : i32
    %462 = arith.index_cast %461 : i32 to index
    %c0_144 = arith.constant 0 : index
    %463 = vector.load %arg10[%462, %c0_144] : memref<64x512xf32, #tpu.memory_space<vmem>>, vector<8x512xf32>
    %c0_145 = arith.constant 0 : index
    %c0_146 = arith.constant 0 : index
    %464 = vector.load %arg5[%c0_145, %c0_146] : memref<128x512xf32, #tpu.memory_space<vmem>>, vector<128x512xf32>
    %cst_147 = arith.constant dense<0.000000e+00> : vector<8x512xf32>
    %465 = tpu.matmul %457, %464, %cst_147 {dimension_numbers = #tpu.dot_dimension_numbers<[1], [0], [0], [1], [0, 0, 1, 1], [], []>} : vector<8x128xf32>, vector<128x512xf32>, vector<8x512xf32> -> vector<8x512xf32>
    %466 = arith.addf %463, %465 : vector<8x512xf32>
    %467 = vector.extract_strided_slice %466 {offsets = [0, 0], sizes = [8, 128], strides = [1, 1]} : vector<8x512xf32> to vector<8x128xf32>
    %468 = arith.negf %467 : vector<8x128xf32>
    %469 = math.exp %468 : vector<8x128xf32>
    %cst_148 = arith.constant 1.000000e+00 : f32
    %470 = vector.broadcast %cst_148 : f32 to vector<8x128xf32>
    %471 = arith.addf %470, %469 : vector<8x128xf32>
    %472 = arith.divf %470, %471 : vector<8x128xf32>
    %473 = vector.extract_strided_slice %466 {offsets = [0, 128], sizes = [8, 128], strides = [1, 1]} : vector<8x512xf32> to vector<8x128xf32>
    %474 = arith.negf %473 : vector<8x128xf32>
    %475 = math.exp %474 : vector<8x128xf32>
    %cst_149 = arith.constant 1.000000e+00 : f32
    %476 = vector.broadcast %cst_149 : f32 to vector<8x128xf32>
    %477 = arith.addf %476, %475 : vector<8x128xf32>
    %478 = arith.divf %476, %477 : vector<8x128xf32>
    %479 = vector.extract_strided_slice %466 {offsets = [0, 256], sizes = [8, 128], strides = [1, 1]} : vector<8x512xf32> to vector<8x128xf32>
    %480 = math.tanh %479 : vector<8x128xf32>
    %481 = vector.extract_strided_slice %466 {offsets = [0, 384], sizes = [8, 128], strides = [1, 1]} : vector<8x512xf32> to vector<8x128xf32>
    %482 = arith.negf %481 : vector<8x128xf32>
    %483 = math.exp %482 : vector<8x128xf32>
    %cst_150 = arith.constant 1.000000e+00 : f32
    %484 = vector.broadcast %cst_150 : f32 to vector<8x128xf32>
    %485 = arith.addf %484, %483 : vector<8x128xf32>
    %486 = arith.divf %484, %485 : vector<8x128xf32>
    %487 = arith.mulf %478, %455 : vector<8x128xf32>
    %488 = arith.mulf %472, %480 : vector<8x128xf32>
    %489 = arith.addf %487, %488 : vector<8x128xf32>
    %490 = math.tanh %489 : vector<8x128xf32>
    %491 = arith.mulf %486, %490 : vector<8x128xf32>
    %492 = arith.index_cast %461 : i32 to index
    %c0_151 = arith.constant 0 : index
    %493 = vector.load %arg12[%492, %c0_151] : memref<64x128xf32, #tpu.memory_space<vmem>>, vector<8x128xf32>
    tpu.vector_store %arg12[%492, %c0_151], %491 {strides = array<i32>} : memref<64x128xf32, #tpu.memory_space<vmem>>, vector<8x128xf32>,
    %c6_i32_152 = arith.constant 6 : i32
    %c8_i32_153 = arith.constant 8 : i32
    %494 = arith.muli %c6_i32_152, %c8_i32_153 : i32
    %495 = tpu.assume_multiple %494, 8 : i32
    %496 = arith.index_cast %495 : i32 to index
    %c0_154 = arith.constant 0 : index
    %497 = vector.load %arg10[%496, %c0_154] : memref<64x512xf32, #tpu.memory_space<vmem>>, vector<8x512xf32>
    %c0_155 = arith.constant 0 : index
    %c0_156 = arith.constant 0 : index
    %498 = vector.load %arg5[%c0_155, %c0_156] : memref<128x512xf32, #tpu.memory_space<vmem>>, vector<128x512xf32>
    %cst_157 = arith.constant dense<0.000000e+00> : vector<8x512xf32>
    %499 = tpu.matmul %491, %498, %cst_157 {dimension_numbers = #tpu.dot_dimension_numbers<[1], [0], [0], [1], [0, 0, 1, 1], [], []>} : vector<8x128xf32>, vector<128x512xf32>, vector<8x512xf32> -> vector<8x512xf32>
    %500 = arith.addf %497, %499 : vector<8x512xf32>
    %501 = vector.extract_strided_slice %500 {offsets = [0, 0], sizes = [8, 128], strides = [1, 1]} : vector<8x512xf32> to vector<8x128xf32>
    %502 = arith.negf %501 : vector<8x128xf32>
    %503 = math.exp %502 : vector<8x128xf32>
    %cst_158 = arith.constant 1.000000e+00 : f32
    %504 = vector.broadcast %cst_158 : f32 to vector<8x128xf32>
    %505 = arith.addf %504, %503 : vector<8x128xf32>
    %506 = arith.divf %504, %505 : vector<8x128xf32>
    %507 = vector.extract_strided_slice %500 {offsets = [0, 128], sizes = [8, 128], strides = [1, 1]} : vector<8x512xf32> to vector<8x128xf32>
    %508 = arith.negf %507 : vector<8x128xf32>
    %509 = math.exp %508 : vector<8x128xf32>
    %cst_159 = arith.constant 1.000000e+00 : f32
    %510 = vector.broadcast %cst_159 : f32 to vector<8x128xf32>
    %511 = arith.addf %510, %509 : vector<8x128xf32>
    %512 = arith.divf %510, %511 : vector<8x128xf32>
    %513 = vector.extract_strided_slice %500 {offsets = [0, 256], sizes = [8, 128], strides = [1, 1]} : vector<8x512xf32> to vector<8x128xf32>
    %514 = math.tanh %513 : vector<8x128xf32>
    %515 = vector.extract_strided_slice %500 {offsets = [0, 384], sizes = [8, 128], strides = [1, 1]} : vector<8x512xf32> to vector<8x128xf32>
    %516 = arith.negf %515 : vector<8x128xf32>
    %517 = math.exp %516 : vector<8x128xf32>
    %cst_160 = arith.constant 1.000000e+00 : f32
    %518 = vector.broadcast %cst_160 : f32 to vector<8x128xf32>
    %519 = arith.addf %518, %517 : vector<8x128xf32>
    %520 = arith.divf %518, %519 : vector<8x128xf32>
    %521 = arith.mulf %512, %489 : vector<8x128xf32>
    %522 = arith.mulf %506, %514 : vector<8x128xf32>
    %523 = arith.addf %521, %522 : vector<8x128xf32>
    %524 = math.tanh %523 : vector<8x128xf32>
    %525 = arith.mulf %520, %524 : vector<8x128xf32>
    %526 = arith.index_cast %495 : i32 to index
    %c0_161 = arith.constant 0 : index
    %527 = vector.load %arg12[%526, %c0_161] : memref<64x128xf32, #tpu.memory_space<vmem>>, vector<8x128xf32>
    tpu.vector_store %arg12[%526, %c0_161], %525 {strides = array<i32>} : memref<64x128xf32, #tpu.memory_space<vmem>>, vector<8x128xf32>,
    %c7_i32_162 = arith.constant 7 : i32
    %c8_i32_163 = arith.constant 8 : i32
    %528 = arith.muli %c7_i32_162, %c8_i32_163 : i32
    %529 = tpu.assume_multiple %528, 8 : i32
    %530 = arith.index_cast %529 : i32 to index
    %c0_164 = arith.constant 0 : index
    %531 = vector.load %arg10[%530, %c0_164] : memref<64x512xf32, #tpu.memory_space<vmem>>, vector<8x512xf32>
    %c0_165 = arith.constant 0 : index
    %c0_166 = arith.constant 0 : index
    %532 = vector.load %arg5[%c0_165, %c0_166] : memref<128x512xf32, #tpu.memory_space<vmem>>, vector<128x512xf32>
    %cst_167 = arith.constant dense<0.000000e+00> : vector<8x512xf32>
    %533 = tpu.matmul %525, %532, %cst_167 {dimension_numbers = #tpu.dot_dimension_numbers<[1], [0], [0], [1], [0, 0, 1, 1], [], []>} : vector<8x128xf32>, vector<128x512xf32>, vector<8x512xf32> -> vector<8x512xf32>
    %534 = arith.addf %531, %533 : vector<8x512xf32>
    %535 = vector.extract_strided_slice %534 {offsets = [0, 0], sizes = [8, 128], strides = [1, 1]} : vector<8x512xf32> to vector<8x128xf32>
    %536 = arith.negf %535 : vector<8x128xf32>
    %537 = math.exp %536 : vector<8x128xf32>
    %cst_168 = arith.constant 1.000000e+00 : f32
    %538 = vector.broadcast %cst_168 : f32 to vector<8x128xf32>
    %539 = arith.addf %538, %537 : vector<8x128xf32>
    %540 = arith.divf %538, %539 : vector<8x128xf32>
    %541 = vector.extract_strided_slice %534 {offsets = [0, 128], sizes = [8, 128], strides = [1, 1]} : vector<8x512xf32> to vector<8x128xf32>
    %542 = arith.negf %541 : vector<8x128xf32>
    %543 = math.exp %542 : vector<8x128xf32>
    %cst_169 = arith.constant 1.000000e+00 : f32
    %544 = vector.broadcast %cst_169 : f32 to vector<8x128xf32>
    %545 = arith.addf %544, %543 : vector<8x128xf32>
    %546 = arith.divf %544, %545 : vector<8x128xf32>
    %547 = vector.extract_strided_slice %534 {offsets = [0, 256], sizes = [8, 128], strides = [1, 1]} : vector<8x512xf32> to vector<8x128xf32>
    %548 = math.tanh %547 : vector<8x128xf32>
    %549 = vector.extract_strided_slice %534 {offsets = [0, 384], sizes = [8, 128], strides = [1, 1]} : vector<8x512xf32> to vector<8x128xf32>
    %550 = arith.negf %549 : vector<8x128xf32>
    %551 = math.exp %550 : vector<8x128xf32>
    %cst_170 = arith.constant 1.000000e+00 : f32
    %552 = vector.broadcast %cst_170 : f32 to vector<8x128xf32>
    %553 = arith.addf %552, %551 : vector<8x128xf32>
    %554 = arith.divf %552, %553 : vector<8x128xf32>
    %555 = arith.mulf %546, %523 : vector<8x128xf32>
    %556 = arith.mulf %540, %548 : vector<8x128xf32>
    %557 = arith.addf %555, %556 : vector<8x128xf32>
    %558 = math.tanh %557 : vector<8x128xf32>
    %559 = arith.mulf %554, %558 : vector<8x128xf32>
    %560 = arith.index_cast %529 : i32 to index
    %c0_171 = arith.constant 0 : index
    %561 = vector.load %arg12[%560, %c0_171] : memref<64x128xf32, #tpu.memory_space<vmem>>, vector<8x128xf32>
    tpu.vector_store %arg12[%560, %c0_171], %559 {strides = array<i32>} : memref<64x128xf32, #tpu.memory_space<vmem>>, vector<8x128xf32>,
    %c8_i32_172 = arith.constant 8 : i32
    %c0_173 = arith.constant 0 : index
    %c0_174 = arith.constant 0 : index
    %562 = vector.load %arg12[%c0_173, %c0_174] : memref<64x128xf32, #tpu.memory_space<vmem>>, vector<64x128xf32>
    %c0_175 = arith.constant 0 : index
    %c0_176 = arith.constant 0 : index
    %563 = vector.load %arg7[%c0_175, %c0_176] : memref<128x1xf32, #tpu.memory_space<vmem>>, vector<128x1xf32>
    %cst_177 = arith.constant dense<0.000000e+00> : vector<64x1xf32>
    %564 = tpu.matmul %562, %563, %cst_177 {dimension_numbers = #tpu.dot_dimension_numbers<[1], [0], [0], [1], [0, 0, 1, 1], [], []>} : vector<64x128xf32>, vector<128x1xf32>, vector<64x1xf32> -> vector<64x1xf32>
    %c0_178 = arith.constant 0 : index
    %c0_179 = arith.constant 0 : index
    %565 = vector.load %arg8[%c0_178, %c0_179] : memref<1x1xf32, #tpu.memory_space<vmem>>, vector<1x1xf32>
    %566 = vector.broadcast %565 : vector<1x1xf32> to vector<64x1xf32>
    %567 = arith.addf %564, %566 : vector<64x1xf32>
    %c0_180 = arith.constant 0 : index
    %c0_181 = arith.constant 0 : index
    %568 = vector.load %arg9[%c0_180, %c0_181] : memref<64x1xf32, #tpu.memory_space<vmem>>, vector<64x1xf32>
    tpu.vector_store %arg9[%c0_180, %c0_181], %567 {strides = array<i32>} : memref<64x1xf32, #tpu.memory_space<vmem>>, vector<64x1xf32>,
    return
  }
}

</mosaic_0001>

<llo_original>
// kernel: tpu_custom_call.1
$region0: #{tpu_custom_call.1}
  #allocation0 [shape = 'u32[]', space=smem, size = 0x4, offset = 0x4, fixed_abs, tag = 'smem constant byte address 0x4 - core index']
  #allocation1 [shape = 'u32[144,128]{1,0:T(1,128)}', space=vmem, size = 0x12000, scoped, tag = 'internal scratch']
  #allocation2 [shape = 'f32[64,512]{1,0:T(8,128)}', space=vmem, size = 0x20000, scoped, tag = 'scratch operand']
  #allocation3 [shape = 'f32[64,128]{1,0:T(8,128)}', space=vmem, size = 0x8000, scoped, tag = 'scratch operand']
  #allocation4 [shape = 'f32[64,128]{1,0:T(8,128)}', space=vmem, size = 0x8000, scoped, tag = 'scratch operand']
  #allocation5 [shape = 'f32[1,1]{1,0:T(1,128)S(1)}', space=vmem, size = 0x200, scoped, tag = 'scoped memory for tpu_custom_call.1']
  %s0 = inlined_call_operand.vmem [shape: f32[64,8], index: 0, kind: input, shape index: {}]
  %s1 = inlined_call_operand.vmem [shape: f32[8,512], index: 1, kind: input, shape index: {}]
  %s2 = inlined_call_operand.hbm [shape: f32[128,512], index: 2, kind: input, shape index: {}]
  %s3 = inlined_call_operand.vmem [shape: f32[1,512], index: 3, kind: input, shape index: {}]
  %s4 = inlined_call_operand.hbm [shape: f32[128,512], index: 4, kind: input, shape index: {}]
  %s5 = inlined_call_operand.hbm [shape: f32[128,512], index: 5, kind: input, shape index: {}]
  %s6 = inlined_call_operand.vmem [shape: f32[1,512], index: 6, kind: input, shape index: {}]
  %s7 = inlined_call_operand.vmem [shape: f32[128,1], index: 7, kind: input, shape index: {}]
  %s8 = inlined_call_operand.<no memory space> [shape: f32[1,1], index: 8, kind: input, shape index: {}]
  %s9 = inlined_call_operand.vmem [shape: f32[64,1], index: 9, kind: output, shape index: {}]
  %s10 = sld [smem:[#allocation0]]
  $region58: #{tpu_custom_call.1} parent=0
    _
  %s12 = ssub.s32 1, %s10
  %s13 = scalar_select 0, %s12, %s10
  %v14 = vstv %s8
  %15 = vst [vmem:[#allocation5] sm:$0x1] %v14
  $region1: #{tpu_custom_call.1} parent=0
    #allocation6 [shape = 'u8[262144]{0}', space=vmem, size = 0x40000, scoped, tag = 'input window, operand 2, single buffered']
    #allocation7 [shape = 's32[1]{0}', space=sflag, size = 0x4, scoped, tag = 'scoped memory for tpu_custom_call.1']
    #allocation8 [shape = 'u8[262144]{0}', space=vmem, size = 0x40000, scoped, tag = 'input window, operand 4, single buffered']
    #allocation9 [shape = 's32[1]{0}', space=sflag, size = 0x4, scoped, tag = 'scoped memory for tpu_custom_call.1']
    #allocation10 [shape = 'u8[262144]{0}', space=vmem, size = 0x40000, scoped, tag = 'input window, operand 5, single buffered']
    %16 = vsyncpa [#allocation7], 0
    %17 = vsyncpa [#allocation9], 0
    // Predicated region
    $region2: #{tpu_custom_call.1} parent=1 // pred_check
      _
    $region3: #{tpu_custom_call.1} parent=1 // pred_check_branch
      %19 = sbr.rel (0) target = $region5
    $region4: #{tpu_custom_call.1} parent=1 // pred_region
      _
    $region5: #{tpu_custom_call.1} parent=1 // pred_fallthru
      _
    // Predicated region
    $region6: #{tpu_custom_call.1} parent=1 // pred_check
      _
    $region7: #{tpu_custom_call.1} parent=1 // pred_check_branch
      %21 = sbr.rel (0) target = $region9
    $region8: #{tpu_custom_call.1} parent=1 // pred_region
      _
    $region9: #{tpu_custom_call.1} parent=1 // pred_fallthru
      _
    // Predicated region
    $region10: #{tpu_custom_call.1} parent=1 // pred_check
      _
    $region11: #{tpu_custom_call.1} parent=1 // pred_check_branch
      %23 = sbr.rel (0) target = $region13
    $region12: #{tpu_custom_call.1} parent=1 // pred_region
      %s25 = ssub.s32 8192, 8192
      %26 = vsyncadd [#allocation7], %s25
      %s27 = sshll.u32 [#allocation6], 4
      %s28 = int_to_ptr.vmem [resolvable:$true] %s27
      %33 = dma.hbm_to_vmem [thread:$0]  %s2, 8192, %s28, [#allocation7], 512, 512, 32
    $region13: #{tpu_custom_call.1} parent=1 // pred_fallthru
      _
    // Predicated region
    $region14: #{tpu_custom_call.1} parent=1 // pred_check
      _
    $region15: #{tpu_custom_call.1} parent=1 // pred_check_branch
      %35 = sbr.rel (0) target = $region17
    $region16: #{tpu_custom_call.1} parent=1 // pred_region
      _
    $region17: #{tpu_custom_call.1} parent=1 // pred_fallthru
      _
    // Predicated region
    $region18: #{tpu_custom_call.1} parent=1 // pred_check
      _
    $region19: #{tpu_custom_call.1} parent=1 // pred_check_branch
      %37 = sbr.rel (0) target = $region21
    $region20: #{tpu_custom_call.1} parent=1 // pred_region
      %s39 = ssub.s32 8192, 8192
      %40 = vsyncadd [#allocation9], %s39
      %s41 = sshll.u32 [#allocation8], 4
      %s42 = int_to_ptr.vmem [resolvable:$true] %s41
      %47 = dma.hbm_to_vmem [thread:$0]  %s4, 8192, %s42, [#allocation9], 512, 512, 32
    $region21: #{tpu_custom_call.1} parent=1 // pred_fallthru
      _
    // Predicated region
    $region22: #{tpu_custom_call.1} parent=1 // pred_check
      _
    $region23: #{tpu_custom_call.1} parent=1 // pred_check_branch
      %49 = sbr.rel (0) target = $region25
    $region24: #{tpu_custom_call.1} parent=1 // pred_region
      %s51 = ssub.s32 8192, 8192
      %52 = vsyncadd [#allocation9], %s51
      %s53 = sshll.u32 [#allocation10], 4
      %s54 = int_to_ptr.vmem [resolvable:$true] %s53
      %59 = dma.hbm_to_vmem [thread:$0]  %s5, 8192, %s54, [#allocation9], 512, 512, 32
    $region25: #{tpu_custom_call.1} parent=1 // pred_fallthru
      _
    // Predicated region
    $region26: #{tpu_custom_call.1} parent=1 // pred_check
      _
    $region27: #{tpu_custom_call.1} parent=1 // pred_check_branch
      %61 = sbr.rel (0) target = $region29
    $region28: #{tpu_custom_call.1} parent=1 // pred_region
      _
    $region29: #{tpu_custom_call.1} parent=1 // pred_fallthru
      _
    // Predicated region
    $region30: #{tpu_custom_call.1} parent=1 // pred_check
      _
    $region31: #{tpu_custom_call.1} parent=1 // pred_check_branch
      %63 = sbr.rel (0) target = $region33
    $region32: #{tpu_custom_call.1} parent=1 // pred_region
      _
    $region33: #{tpu_custom_call.1} parent=1 // pred_fallthru
      _
    // Predicated region
    $region34: #{tpu_custom_call.1} parent=1 // pred_check
      _
    $region35: #{tpu_custom_call.1} parent=1 // pred_check_branch
      %65 = sbr.rel (0) target = $region37
    $region36: #{tpu_custom_call.1} parent=1 // pred_region
      _
    $region37: #{tpu_custom_call.1} parent=1 // pred_fallthru
      _
    // Predicated region
    $region38: #{tpu_custom_call.1} parent=1 // pred_check
      _
    $region39: #{tpu_custom_call.1} parent=1 // pred_check_branch
      %67 = sbr.rel (0) target = $region41
    $region40: #{tpu_custom_call.1} parent=1 // pred_region
      %68 = dma.done [#allocation7], 8192
    $region41: #{tpu_custom_call.1} parent=1 // pred_fallthru
      _
    // Predicated region
    $region42: #{tpu_custom_call.1} parent=1 // pred_check
      _
    $region43: #{tpu_custom_call.1} parent=1 // pred_check_branch
      %70 = sbr.rel (0) target = $region45
    $region44: #{tpu_custom_call.1} parent=1 // pred_region
      %71 = dma.done [#allocation9], 8192
    $region45: #{tpu_custom_call.1} parent=1 // pred_fallthru
      _
    // Predicated region
    $region46: #{tpu_custom_call.1} parent=1 // pred_check
      _
    $region47: #{tpu_custom_call.1} parent=1 // pred_check_branch
      %73 = sbr.rel (0) target = $region49
    $region48: #{tpu_custom_call.1} parent=1 // pred_region
      %74 = dma.done [#allocation9], 8192
    $region49: #{tpu_custom_call.1} parent=1 // pred_fallthru
      _
    %v75 = vld [vmem:[%s0] sm:$0xff]
    %v76 = vld [vmem:[%s0 + $0x8] sm:$0xff]
    %v77 = vld [vmem:[%s0 + $0x10] sm:$0xff]
    %v78 = vld [vmem:[%s0 + $0x18] sm:$0xff]
    %v79 = vld [vmem:[%s0 + $0x20] sm:$0xff]
    %v80 = vld [vmem:[%s0 + $0x28] sm:$0xff]
    %v81 = vld [vmem:[%s0 + $0x30] sm:$0xff]
    %v82 = vld [vmem:[%s0 + $0x38] sm:$0xff]
    %v83 = vld [vmem:[%s1] sm:$0xff]
    %v84 = vld [vmem:[%s1 + $0x8] sm:$0xff]
    %v85 = vld [vmem:[%s1 + $0x10] sm:$0xff]
    %v86 = vld [vmem:[%s1 + $0x18] sm:$0xff]
    %v87 = vld [vmem:[%s3] sm:$0xf]
    %v89 = vlaneseq
    %v90 = vshrl.u32 %v89, 7
    %v91 = vsub.s32 0, %v90
    %v92 = vrot.slane %v87, %v91
    %v93 = vlaneseq
    %v94 = vshrl.u32 %v93, 7
    %v95 = vsub.s32 1, %v94
    %v96 = vrot.slane %v87, %v95
    %v97 = vlaneseq
    %v98 = vshrl.u32 %v97, 7
    %v99 = vsub.s32 2, %v98
    %v100 = vrot.slane %v87, %v99
    %v101 = vlaneseq
    %v102 = vshrl.u32 %v101, 7
    %v103 = vsub.s32 3, %v102
    %v104 = vrot.slane %v87, %v103
    %vm109 = vcmask 64512
    %v111 = vsel %vm109, %v75, 0
    %v114 = vsel %vm109, %v76, 0
    %v117 = vsel %vm109, %v77, 0
    %v120 = vsel %vm109, %v78, 0
    %v123 = vsel %vm109, %v79, 0
    %v126 = vsel %vm109, %v80, 0
    %v129 = vsel %vm109, %v81, 0
    %v132 = vsel %vm109, %v82, 0
    %134 = vmatprep.subr.mxu0 %v84
    %135 = vmatpush1.msra.mxu0 %v83
    %136 = vmatprep.subr.mxu0 0.0
    %137 = vmatpush1.msra.mxu0 0.0
    %138 = vmatprep.subr.mxu0 0.0
    %139 = vmatpush1.msra.mxu0 0.0
    %140 = vmatprep.subr.mxu0 0.0
    %141 = vmatpush1.msra.mxu0 0.0
    %142 = vmatprep.subr.mxu0 0.0
    %143 = vmatpush1.msra.mxu0 0.0
    %144 = vmatprep.subr.mxu0 0.0
    %145 = vmatpush1.msra.mxu0 0.0
    %146 = vmatprep.subr.mxu0 0.0
    %147 = vmatpush1.msra.mxu0 0.0
    %148 = vmatprep.subr.mxu0 0.0
    %149 = vmatpush1.msra.mxu0 0.0
    %150 = vmatprep.subr.mxu0 0.0
    %151 = vmatpush1.msra.mxu0 0.0
    %152 = vmatprep.subr.mxu0 0.0
    %153 = vmatpush1.msra.mxu0 0.0
    %154 = vmatprep.subr.mxu0 0.0
    %155 = vmatpush1.msra.mxu0 0.0
    %156 = vmatprep.subr.mxu0 0.0
    %157 = vmatpush1.msra.mxu0 0.0
    %158 = vmatprep.subr.mxu0 0.0
    %159 = vmatpush1.msra.mxu0 0.0
    %160 = vmatprep.subr.mxu0 0.0
    %161 = vmatpush1.msra.mxu0 0.0
    %162 = vmatprep.subr.mxu0 0.0
    %163 = vmatpush1.msra.mxu0 0.0
    %164 = vmatprep.subr.mxu0 0.0
    %165 = vmatpush1.msra.mxu0 0.0
    %166 = vmatprep.subr.mxu0 0.0
    %167 = vmatpush1.msra.mxu0 0.0
    %168 = vmatprep.subr.mxu0 0.0
    %169 = vmatpush1.msra.mxu0 0.0
    %170 = vmatprep.subr.mxu0 0.0
    %171 = vmatpush1.msra.mxu0 0.0
    %172 = vmatprep.subr.mxu0 0.0
    %173 = vmatpush1.msra.mxu0 0.0
    %174 = vmatprep.subr.mxu0 0.0
    %175 = vmatpush1.msra.mxu0 0.0
    %176 = vmatprep.subr.mxu0 0.0
    %177 = vmatpush1.msra.mxu0 0.0
    %178 = vmatprep.subr.mxu0 0.0
    %179 = vmatpush1.msra.mxu0 0.0
    %180 = vmatprep.subr.mxu0 0.0
    %181 = vmatpush1.msra.mxu0 0.0
    %182 = vmatprep.subr.mxu0 0.0
    %183 = vmatpush1.msra.mxu0 0.0
    %184 = vmatprep.subr.mxu0 0.0
    %185 = vmatpush1.msra.mxu0 0.0
    %186 = vmatprep.subr.mxu0 0.0
    %187 = vmatpush1.msra.mxu0 0.0
    %188 = vmatprep.subr.mxu0 0.0
    %189 = vmatpush1.msra.mxu0 0.0
    %190 = vmatprep.subr.mxu0 0.0
    %191 = vmatpush1.msra.mxu0 0.0
    %192 = vmatprep.subr.mxu0 0.0
    %193 = vmatpush1.msra.mxu0 0.0
    %194 = vmatprep.subr.mxu0 0.0
    %195 = vmatpush1.msra.mxu0 0.0
    %196 = vmatprep.subr.mxu0 0.0
    %197 = vmatpush1.msra.mxu0 0.0
    %198 = vmatprep.mubr.f32.mxu0 0.0
    %199 = vmatmul.mubr.f32.gmra.mrb[0].mxu0 %v111
    %v200 = vpop.f32.mrb[0].mxu0
    %v201 = vadd.f32 %v92, %v200
    %v202 = vpop.f32.mrb[0].mxu0
    %v203 = vadd.f32 %v96, %v202
    %204 = vmatprep.mubr.f32.mxu0 0.0
    %205 = vmatmul.mubr.f32.gmra.mrb[0].mxu0 %v114
    %v206 = vpop.f32.mrb[0].mxu0
    %v207 = vadd.f32 %v92, %v206
    %v208 = vpop.f32.mrb[0].mxu0
    %v209 = vadd.f32 %v96, %v208
    %210 = vmatprep.mubr.f32.mxu0 0.0
    %211 = vmatmul.mubr.f32.gmra.mrb[0].mxu0 %v117
    %v212 = vpop.f32.mrb[0].mxu0
    %v213 = vadd.f32 %v92, %v212
    %v214 = vpop.f32.mrb[0].mxu0
    %v215 = vadd.f32 %v96, %v214
    %216 = vmatprep.mubr.f32.mxu0 0.0
    %217 = vmatmul.mubr.f32.gmra.mrb[0].mxu0 %v120
    %v218 = vpop.f32.mrb[0].mxu0
    %v219 = vadd.f32 %v92, %v218
    %v220 = vpop.f32.mrb[0].mxu0
    %v221 = vadd.f32 %v96, %v220
    %222 = vmatprep.mubr.f32.mxu0 0.0
    %223 = vmatmul.mubr.f32.gmra.mrb[0].mxu0 %v123
    %v224 = vpop.f32.mrb[0].mxu0
    %v225 = vadd.f32 %v92, %v224
    %v226 = vpop.f32.mrb[0].mxu0
    %v227 = vadd.f32 %v96, %v226
    %228 = vmatprep.mubr.f32.mxu0 0.0
    %229 = vmatmul.mubr.f32.gmra.mrb[0].mxu0 %v126
    %v230 = vpop.f32.mrb[0].mxu0
    %v231 = vadd.f32 %v92, %v230
    %v232 = vpop.f32.mrb[0].mxu0
    %v233 = vadd.f32 %v96, %v232
    %234 = vmatprep.mubr.f32.mxu0 0.0
    %235 = vmatmul.mubr.f32.gmra.mrb[0].mxu0 %v129
    %v236 = vpop.f32.mrb[0].mxu0
    %v237 = vadd.f32 %v92, %v236
    %v238 = vpop.f32.mrb[0].mxu0
    %v239 = vadd.f32 %v96, %v238
    %240 = vmatprep.mubr.f32.mxu0 0.0
    %241 = vmatmul.mubr.f32.gmra.mrb[0].mxu0 %v132
    %v242 = vpop.f32.mrb[0].mxu0
    %v243 = vadd.f32 %v92, %v242
    %v244 = vpop.f32.mrb[0].mxu0
    %v245 = vadd.f32 %v96, %v244
    %246 = vdwg.mxu0
    %247 = vmatprep.subr.mxu0 %v86
    %248 = vmatpush1.msra.mxu0 %v85
    %249 = vmatprep.subr.mxu0 0.0
    %250 = vmatpush1.msra.mxu0 0.0
    %251 = vmatprep.subr.mxu0 0.0
    %252 = vmatpush1.msra.mxu0 0.0
    %253 = vmatprep.subr.mxu0 0.0
    %254 = vmatpush1.msra.mxu0 0.0
    %255 = vmatprep.subr.mxu0 0.0
    %256 = vmatpush1.msra.mxu0 0.0
    %257 = vmatprep.subr.mxu0 0.0
    %258 = vmatpush1.msra.mxu0 0.0
    %259 = vmatprep.subr.mxu0 0.0
    %260 = vmatpush1.msra.mxu0 0.0
    %261 = vmatprep.subr.mxu0 0.0
    %262 = vmatpush1.msra.mxu0 0.0
    %263 = vmatprep.subr.mxu0 0.0
    %264 = vmatpush1.msra.mxu0 0.0
    %265 = vmatprep.subr.mxu0 0.0
    %266 = vmatpush1.msra.mxu0 0.0
    %267 = vmatprep.subr.mxu0 0.0
    %268 = vmatpush1.msra.mxu0 0.0
    %269 = vmatprep.subr.mxu0 0.0
    %270 = vmatpush1.msra.mxu0 0.0
    %271 = vmatprep.subr.mxu0 0.0
    %272 = vmatpush1.msra.mxu0 0.0
    %273 = vmatprep.subr.mxu0 0.0
    %274 = vmatpush1.msra.mxu0 0.0
    %275 = vmatprep.subr.mxu0 0.0
    %276 = vmatpush1.msra.mxu0 0.0
    %277 = vmatprep.subr.mxu0 0.0
    %278 = vmatpush1.msra.mxu0 0.0
    %279 = vmatprep.subr.mxu0 0.0
    %280 = vmatpush1.msra.mxu0 0.0
    %281 = vmatprep.subr.mxu0 0.0
    %282 = vmatpush1.msra.mxu0 0.0
    %283 = vmatprep.subr.mxu0 0.0
    %284 = vmatpush1.msra.mxu0 0.0
    %285 = vmatprep.subr.mxu0 0.0
    %286 = vmatpush1.msra.mxu0 0.0
    %287 = vmatprep.subr.mxu0 0.0
    %288 = vmatpush1.msra.mxu0 0.0
    %289 = vmatprep.subr.mxu0 0.0
    %290 = vmatpush1.msra.mxu0 0.0
    %291 = vmatprep.subr.mxu0 0.0
    %292 = vmatpush1.msra.mxu0 0.0
    %293 = vmatprep.subr.mxu0 0.0
    %294 = vmatpush1.msra.mxu0 0.0
    %295 = vmatprep.subr.mxu0 0.0
    %296 = vmatpush1.msra.mxu0 0.0
    %297 = vmatprep.subr.mxu0 0.0
    %298 = vmatpush1.msra.mxu0 0.0
    %299 = vmatprep.subr.mxu0 0.0
    %300 = vmatpush1.msra.mxu0 0.0
    %301 = vmatprep.subr.mxu0 0.0
    %302 = vmatpush1.msra.mxu0 0.0
    %303 = vmatprep.subr.mxu0 0.0
    %304 = vmatpush1.msra.mxu0 0.0
    %305 = vmatprep.subr.mxu0 0.0
    %306 = vmatpush1.msra.mxu0 0.0
    %307 = vmatprep.subr.mxu0 0.0
    %308 = vmatpush1.msra.mxu0 0.0
    %309 = vmatprep.subr.mxu0 0.0
    %310 = vmatpush1.msra.mxu0 0.0
    %311 = vmatprep.mubr.f32.mxu0 0.0
    %312 = vmatmul.mubr.f32.gmra.mrb[0].mxu0 %v111
    %v313 = vpop.f32.mrb[0].mxu0
    %v314 = vadd.f32 %v100, %v313
    %v315 = vpop.f32.mrb[0].mxu0
    %v316 = vadd.f32 %v104, %v315
    %317 = vmatprep.mubr.f32.mxu0 0.0
    %318 = vmatmul.mubr.f32.gmra.mrb[0].mxu0 %v114
    %v319 = vpop.f32.mrb[0].mxu0
    %v320 = vadd.f32 %v100, %v319
    %v321 = vpop.f32.mrb[0].mxu0
    %v322 = vadd.f32 %v104, %v321
    %323 = vmatprep.mubr.f32.mxu0 0.0
    %324 = vmatmul.mubr.f32.gmra.mrb[0].mxu0 %v117
    %v325 = vpop.f32.mrb[0].mxu0
    %v326 = vadd.f32 %v100, %v325
    %v327 = vpop.f32.mrb[0].mxu0
    %v328 = vadd.f32 %v104, %v327
    %329 = vmatprep.mubr.f32.mxu0 0.0
    %330 = vmatmul.mubr.f32.gmra.mrb[0].mxu0 %v120
    %v331 = vpop.f32.mrb[0].mxu0
    %v332 = vadd.f32 %v100, %v331
    %v333 = vpop.f32.mrb[0].mxu0
    %v334 = vadd.f32 %v104, %v333
    %335 = vmatprep.mubr.f32.mxu0 0.0
    %336 = vmatmul.mubr.f32.gmra.mrb[0].mxu0 %v123
    %v337 = vpop.f32.mrb[0].mxu0
    %v338 = vadd.f32 %v100, %v337
    %v339 = vpop.f32.mrb[0].mxu0
    %v340 = vadd.f32 %v104, %v339
    %341 = vmatprep.mubr.f32.mxu0 0.0
    %342 = vmatmul.mubr.f32.gmra.mrb[0].mxu0 %v126
    %v343 = vpop.f32.mrb[0].mxu0
    %v344 = vadd.f32 %v100, %v343
    %v345 = vpop.f32.mrb[0].mxu0
    %v346 = vadd.f32 %v104, %v345
    %347 = vmatprep.mubr.f32.mxu0 0.0
    %348 = vmatmul.mubr.f32.gmra.mrb[0].mxu0 %v129
    %v349 = vpop.f32.mrb[0].mxu0
    %v350 = vadd.f32 %v100, %v349
    %v351 = vpop.f32.mrb[0].mxu0
    %v352 = vadd.f32 %v104, %v351
    %353 = vmatprep.mubr.f32.mxu0 0.0
    %354 = vmatmul.mubr.f32.gmra.mrb[0].mxu0 %v132
    %v355 = vpop.f32.mrb[0].mxu0
    %v356 = vadd.f32 %v100, %v355
    %v357 = vpop.f32.mrb[0].mxu0
    %v358 = vadd.f32 %v104, %v357
    %359 = vdwg.mxu0
    %360 = vst [vmem:[#allocation2] sm:$0xff] %v201
    %361 = vst [vmem:[#allocation2 + $0x8] sm:$0xff] %v203
    %362 = vst [vmem:[#allocation2 + $0x10] sm:$0xff] %v314
    %363 = vst [vmem:[#allocation2 + $0x18] sm:$0xff] %v316
    %364 = vst [vmem:[#allocation2 + $0x20] sm:$0xff] %v207
    %365 = vst [vmem:[#allocation2 + $0x28] sm:$0xff] %v209
    %366 = vst [vmem:[#allocation2 + $0x30] sm:$0xff] %v320
    %367 = vst [vmem:[#allocation2 + $0x38] sm:$0xff] %v322
    %368 = vst [vmem:[#allocation2 + $0x40] sm:$0xff] %v213
    %369 = vst [vmem:[#allocation2 + $0x48] sm:$0xff] %v215
    %370 = vst [vmem:[#allocation2 + $0x50] sm:$0xff] %v326
    %371 = vst [vmem:[#allocation2 + $0x58] sm:$0xff] %v328
    %372 = vst [vmem:[#allocation2 + $0x60] sm:$0xff] %v219
    %373 = vst [vmem:[#allocation2 + $0x68] sm:$0xff] %v221
    %374 = vst [vmem:[#allocation2 + $0x70] sm:$0xff] %v332
    %375 = vst [vmem:[#allocation2 + $0x78] sm:$0xff] %v334
    %376 = vst [vmem:[#allocation2 + $0x80] sm:$0xff] %v225
    %377 = vst [vmem:[#allocation2 + $0x88] sm:$0xff] %v227
    %378 = vst [vmem:[#allocation2 + $0x90] sm:$0xff] %v338
    %379 = vst [vmem:[#allocation2 + $0x98] sm:$0xff] %v340
    %380 = vst [vmem:[#allocation2 + $0xa0] sm:$0xff] %v231
    %381 = vst [vmem:[#allocation2 + $0xa8] sm:$0xff] %v233
    %382 = vst [vmem:[#allocation2 + $0xb0] sm:$0xff] %v344
    %383 = vst [vmem:[#allocation2 + $0xb8] sm:$0xff] %v346
    %384 = vst [vmem:[#allocation2 + $0xc0] sm:$0xff] %v237
    %385 = vst [vmem:[#allocation2 + $0xc8] sm:$0xff] %v239
    %386 = vst [vmem:[#allocation2 + $0xd0] sm:$0xff] %v350
    %387 = vst [vmem:[#allocation2 + $0xd8] sm:$0xff] %v352
    %388 = vst [vmem:[#allocation2 + $0xe0] sm:$0xff] %v243
    %389 = vst [vmem:[#allocation2 + $0xe8] sm:$0xff] %v245
    %390 = vst [vmem:[#allocation2 + $0xf0] sm:$0xff] %v356
    %391 = vst [vmem:[#allocation2 + $0xf8] sm:$0xff] %v358
    %s392 = smul.u32 0, 4
    %s393 = smul.addr %s392, 8
    %s394 = scalar_lea.vmem [#allocation2], %s393
    %v395 = vld [vmem:[%s394] sm:$0xff]
    %v396 = vld [vmem:[%s394 + $0x8] sm:$0xff]
    %v397 = vld [vmem:[%s394 + $0x10] sm:$0xff]
    %v398 = vld [vmem:[%s394 + $0x18] sm:$0xff]
    %v399 = vld [vmem:[#allocation6] sm:$0xff]
    %v400 = vld [vmem:[#allocation6 + $0x8] sm:$0xff]
    %v401 = vld [vmem:[#allocation6 + $0x10] sm:$0xff]
    %v402 = vld [vmem:[#allocation6 + $0x18] sm:$0xff]
    %v403 = vld [vmem:[#allocation6 + $0x20] sm:$0xff]
    %v404 = vld [vmem:[#allocation6 + $0x28] sm:$0xff]
    %v405 = vld [vmem:[#allocation6 + $0x30] sm:$0xff]
    %v406 = vld [vmem:[#allocation6 + $0x38] sm:$0xff]
    %v407 = vld [vmem:[#allocation6 + $0x40] sm:$0xff]
    %v408 = vld [vmem:[#allocation6 + $0x48] sm:$0xff]
    %v409 = vld [vmem:[#allocation6 + $0x50] sm:$0xff]
    %v410 = vld [vmem:[#allocation6 + $0x58] sm:$0xff]
    %v411 = vld [vmem:[#allocation6 + $0x60] sm:$0xff]
    %v412 = vld [vmem:[#allocation6 + $0x68] sm:$0xff]
    %v413 = vld [vmem:[#allocation6 + $0x70] sm:$0xff]
    %v414 = vld [vmem:[#allocation6 + $0x78] sm:$0xff]
    %v415 = vld [vmem:[#allocation6 + $0x80] sm:$0xff]
    %v416 = vld [vmem:[#allocation6 + $0x88] sm:$0xff]
    %v417 = vld [vmem:[#allocation6 + $0x90] sm:$0xff]
    %v418 = vld [vmem:[#allocation6 + $0x98] sm:$0xff]
    %v419 = vld [vmem:[#allocation6 + $0xa0] sm:$0xff]
    %v420 = vld [vmem:[#allocation6 + $0xa8] sm:$0xff]
    %v421 = vld [vmem:[#allocation6 + $0xb0] sm:$0xff]
    %v422 = vld [vmem:[#allocation6 + $0xb8] sm:$0xff]
    %v423 = vld [vmem:[#allocation6 + $0xc0] sm:$0xff]
    %v424 = vld [vmem:[#allocation6 + $0xc8] sm:$0xff]
    %v425 = vld [vmem:[#allocation6 + $0xd0] sm:$0xff]
    %v426 = vld [vmem:[#allocation6 + $0xd8] sm:$0xff]
    %v427 = vld [vmem:[#allocation6 + $0xe0] sm:$0xff]
    %v428 = vld [vmem:[#allocation6 + $0xe8] sm:$0xff]
    %v429 = vld [vmem:[#allocation6 + $0xf0] sm:$0xff]
    %v430 = vld [vmem:[#allocation6 + $0xf8] sm:$0xff]
    %v431 = vld [vmem:[#allocation6 + $0x100] sm:$0xff]
    %v432 = vld [vmem:[#allocation6 + $0x108] sm:$0xff]
    %v433 = vld [vmem:[#allocation6 + $0x110] sm:$0xff]
    %v434 = vld [vmem:[#allocation6 + $0x118] sm:$0xff]
    %v435 = vld [vmem:[#allocation6 + $0x120] sm:$0xff]
    %v436 = vld [vmem:[#allocation6 + $0x128] sm:$0xff]
    %v437 = vld [vmem:[#allocation6 + $0x130] sm:$0xff]
    %v438 = vld [vmem:[#allocation6 + $0x138] sm:$0xff]
    %v439 = vld [vmem:[#allocation6 + $0x140] sm:$0xff]
    %v440 = vld [vmem:[#allocation6 + $0x148] sm:$0xff]
    %v441 = vld [vmem:[#allocation6 + $0x150] sm:$0xff]
    %v442 = vld [vmem:[#allocation6 + $0x158] sm:$0xff]
    %v443 = vld [vmem:[#allocation6 + $0x160] sm:$0xff]
    %v444 = vld [vmem:[#allocation6 + $0x168] sm:$0xff]
    %v445 = vld [vmem:[#allocation6 + $0x170] sm:$0xff]
    %v446 = vld [vmem:[#allocation6 + $0x178] sm:$0xff]
    %v447 = vld [vmem:[#allocation6 + $0x180] sm:$0xff]
    %v448 = vld [vmem:[#allocation6 + $0x188] sm:$0xff]
    %v449 = vld [vmem:[#allocation6 + $0x190] sm:$0xff]
    %v450 = vld [vmem:[#allocation6 + $0x198] sm:$0xff]
    %v451 = vld [vmem:[#allocation6 + $0x1a0] sm:$0xff]
    %v452 = vld [vmem:[#allocation6 + $0x1a8] sm:$0xff]
    %v453 = vld [vmem:[#allocation6 + $0x1b0] sm:$0xff]
    %v454 = vld [vmem:[#allocation6 + $0x1b8] sm:$0xff]
    %v455 = vld [vmem:[#allocation6 + $0x1c0] sm:$0xff]
    %v456 = vld [vmem:[#allocation6 + $0x1c8] sm:$0xff]
    %v457 = vld [vmem:[#allocation6 + $0x1d0] sm:$0xff]
    %v458 = vld [vmem:[#allocation6 + $0x1d8] sm:$0xff]
    %v459 = vld [vmem:[#allocation6 + $0x1e0] sm:$0xff]
    %v460 = vld [vmem:[#allocation6 + $0x1e8] sm:$0xff]
    %v461 = vld [vmem:[#allocation6 + $0x1f0] sm:$0xff]
    %v462 = vld [vmem:[#allocation6 + $0x1f8] sm:$0xff]
    %463 = vmatprep.subr.mxu0 %v400
    %464 = vmatpush1.msra.mxu0 %v399
    %465 = vmatprep.subr.mxu0 %v404
    %466 = vmatpush1.msra.mxu0 %v403
    %467 = vmatprep.subr.mxu0 %v408
    %468 = vmatpush1.msra.mxu0 %v407
    %469 = vmatprep.subr.mxu0 %v412
    %470 = vmatpush1.msra.mxu0 %v411
    %471 = vmatprep.subr.mxu0 %v416
    %472 = vmatpush1.msra.mxu0 %v415
    %473 = vmatprep.subr.mxu0 %v420
    %474 = vmatpush1.msra.mxu0 %v419
    %475 = vmatprep.subr.mxu0 %v424
    %476 = vmatpush1.msra.mxu0 %v423
    %477 = vmatprep.subr.mxu0 %v428
    %478 = vmatpush1.msra.mxu0 %v427
    %479 = vmatprep.subr.mxu0 %v432
    %480 = vmatpush1.msra.mxu0 %v431
    %481 = vmatprep.subr.mxu0 %v436
    %482 = vmatpush1.msra.mxu0 %v435
    %483 = vmatprep.subr.mxu0 %v440
    %484 = vmatpush1.msra.mxu0 %v439
    %485 = vmatprep.subr.mxu0 %v444
    %486 = vmatpush1.msra.mxu0 %v443
    %487 = vmatprep.subr.mxu0 %v448
    %488 = vmatpush1.msra.mxu0 %v447
    %489 = vmatprep.subr.mxu0 %v452
    %490 = vmatpush1.msra.mxu0 %v451
    %491 = vmatprep.subr.mxu0 %v456
    %492 = vmatpush1.msra.mxu0 %v455
    %493 = vmatprep.subr.mxu0 %v460
    %494 = vmatpush1.msra.mxu0 %v459
    %495 = vmatprep.subr.mxu0 0.0
    %496 = vmatpush1.msra.mxu0 0.0
    %497 = vmatprep.subr.mxu0 0.0
    %498 = vmatpush1.msra.mxu0 0.0
    %499 = vmatprep.subr.mxu0 0.0
    %500 = vmatpush1.msra.mxu0 0.0
    %501 = vmatprep.subr.mxu0 0.0
    %502 = vmatpush1.msra.mxu0 0.0
    %503 = vmatprep.subr.mxu0 0.0
    %504 = vmatpush1.msra.mxu0 0.0
    %505 = vmatprep.subr.mxu0 0.0
    %506 = vmatpush1.msra.mxu0 0.0
    %507 = vmatprep.subr.mxu0 0.0
    %508 = vmatpush1.msra.mxu0 0.0
    %509 = vmatprep.subr.mxu0 0.0
    %510 = vmatpush1.msra.mxu0 0.0
    %511 = vmatprep.subr.mxu0 0.0
    %512 = vmatpush1.msra.mxu0 0.0
    %513 = vmatprep.subr.mxu0 0.0
    %514 = vmatpush1.msra.mxu0 0.0
    %515 = vmatprep.subr.mxu0 0.0
    %516 = vmatpush1.msra.mxu0 0.0
    %517 = vmatprep.subr.mxu0 0.0
    %518 = vmatpush1.msra.mxu0 0.0
    %519 = vmatprep.subr.mxu0 0.0
    %520 = vmatpush1.msra.mxu0 0.0
    %521 = vmatprep.subr.mxu0 0.0
    %522 = vmatpush1.msra.mxu0 0.0
    %523 = vmatprep.subr.mxu0 0.0
    %524 = vmatpush1.msra.mxu0 0.0
    %525 = vmatprep.subr.mxu0 0.0
    %526 = vmatpush1.msra.mxu0 0.0
    %527 = vmatprep.mubr.f32.mxu0 0.0
    %528 = vmatmul.mubr.f32.gmra.mrb[0].mxu0 0.0
    %v529 = vpop.f32.mrb[0].mxu0
    %v530 = vadd.f32 0.0, %v529
    %v531 = vpop.f32.mrb[0].mxu0
    %v532 = vadd.f32 0.0, %v531
    %533 = vdwg.mxu0
    %534 = vmatprep.subr.mxu0 %v402
    %535 = vmatpush1.msra.mxu0 %v401
    %536 = vmatprep.subr.mxu0 %v406
    %537 = vmatpush1.msra.mxu0 %v405
    %538 = vmatprep.subr.mxu0 %v410
    %539 = vmatpush1.msra.mxu0 %v409
    %540 = vmatprep.subr.mxu0 %v414
    %541 = vmatpush1.msra.mxu0 %v413
    %542 = vmatprep.subr.mxu0 %v418
    %543 = vmatpush1.msra.mxu0 %v417
    %544 = vmatprep.subr.mxu0 %v422
    %545 = vmatpush1.msra.mxu0 %v421
    %546 = vmatprep.subr.mxu0 %v426
    %547 = vmatpush1.msra.mxu0 %v425
    %548 = vmatprep.subr.mxu0 %v430
    %549 = vmatpush1.msra.mxu0 %v429
    %550 = vmatprep.subr.mxu0 %v434
    %551 = vmatpush1.msra.mxu0 %v433
    %552 = vmatprep.subr.mxu0 %v438
    %553 = vmatpush1.msra.mxu0 %v437
    %554 = vmatprep.subr.mxu0 %v442
    %555 = vmatpush1.msra.mxu0 %v441
    %556 = vmatprep.subr.mxu0 %v446
    %557 = vmatpush1.msra.mxu0 %v445
    %558 = vmatprep.subr.mxu0 %v450
    %559 = vmatpush1.msra.mxu0 %v449
    %560 = vmatprep.subr.mxu0 %v454
    %561 = vmatpush1.msra.mxu0 %v453
    %562 = vmatprep.subr.mxu0 %v458
    %563 = vmatpush1.msra.mxu0 %v457
    %564 = vmatprep.subr.mxu0 %v462
    %565 = vmatpush1.msra.mxu0 %v461
    %566 = vmatprep.subr.mxu0 0.0
    %567 = vmatpush1.msra.mxu0 0.0
    %568 = vmatprep.subr.mxu0 0.0
    %569 = vmatpush1.msra.mxu0 0.0
    %570 = vmatprep.subr.mxu0 0.0
    %571 = vmatpush1.msra.mxu0 0.0
    %572 = vmatprep.subr.mxu0 0.0
    %573 = vmatpush1.msra.mxu0 0.0
    %574 = vmatprep.subr.mxu0 0.0
    %575 = vmatpush1.msra.mxu0 0.0
    %576 = vmatprep.subr.mxu0 0.0
    %577 = vmatpush1.msra.mxu0 0.0
    %578 = vmatprep.subr.mxu0 0.0
    %579 = vmatpush1.msra.mxu0 0.0
    %580 = vmatprep.subr.mxu0 0.0
    %581 = vmatpush1.msra.mxu0 0.0
    %582 = vmatprep.subr.mxu0 0.0
    %583 = vmatpush1.msra.mxu0 0.0
    %584 = vmatprep.subr.mxu0 0.0
    %585 = vmatpush1.msra.mxu0 0.0
    %586 = vmatprep.subr.mxu0 0.0
    %587 = vmatpush1.msra.mxu0 0.0
    %588 = vmatprep.subr.mxu0 0.0
    %589 = vmatpush1.msra.mxu0 0.0
    %590 = vmatprep.subr.mxu0 0.0
    %591 = vmatpush1.msra.mxu0 0.0
    %592 = vmatprep.subr.mxu0 0.0
    %593 = vmatpush1.msra.mxu0 0.0
    %594 = vmatprep.subr.mxu0 0.0
    %595 = vmatpush1.msra.mxu0 0.0
    %596 = vmatprep.subr.mxu0 0.0
    %597 = vmatpush1.msra.mxu0 0.0
    %598 = vmatprep.mubr.f32.mxu0 0.0
    %599 = vmatmul.mubr.f32.gmra.mrb[0].mxu0 0.0
    %v600 = vpop.f32.mrb[0].mxu0
    %v601 = vadd.f32 0.0, %v600
    %v602 = vpop.f32.mrb[0].mxu0
    %v603 = vadd.f32 0.0, %v602
    %604 = vdwg.mxu0
    %v605 = vadd.f32 %v395, %v530
    %v606 = vadd.f32 %v396, %v532
    %v607 = vadd.f32 %v397, %v601
    %v608 = vadd.f32 %v398, %v603
    %v609 = vxor.u32 %v605, 2147483648
    %v610 = vmul.f32 %v609, 1.442695
    %v611 = vpow.pop %v610
    %v612 = vadd.f32 %v611, 1.0
    %v613 = vrcp.pop %v612
    %v614 = vmul.f32 1.0, %v613
    %v615 = vxor.u32 %v606, 2147483648
    %v616 = vmul.f32 %v615, 1.442695
    %v617 = vpow.pop %v616
    %v618 = vadd.f32 %v617, 1.0
    %v619 = vrcp.pop %v618
    %v620 = vmul.f32 1.0, %v619
    %v621 = vtanh.pop %v607
    %v622 = vxor.u32 %v608, 2147483648
    %v623 = vmul.f32 %v622, 1.442695
    %v624 = vpow.pop %v623
    %v625 = vadd.f32 %v624, 1.0
    %v626 = vrcp.pop %v625
    %v627 = vmul.f32 1.0, %v626
    %v628 = vmul.f32 %v620, 0.0
    %v629 = vmul.f32 %v614, %v621
    %v630 = vadd.f32 %v628, %v629
    %v631 = vtanh.pop %v630
    %v632 = vmul.f32 %v627, %v631
    %633 = vst [vmem:[#allocation3] sm:$0xff] %v632
    %s634 = smul.u32 1, 4
    %s635 = smul.addr %s634, 8
    %s636 = scalar_lea.vmem [#allocation2], %s635
    %v637 = vld [vmem:[%s636] sm:$0xff]
    %v638 = vld [vmem:[%s636 + $0x8] sm:$0xff]
    %v639 = vld [vmem:[%s636 + $0x10] sm:$0xff]
    %v640 = vld [vmem:[%s636 + $0x18] sm:$0xff]
    %v641 = vld [vmem:[#allocation6] sm:$0xff]
    %v642 = vld [vmem:[#allocation6 + $0x8] sm:$0xff]
    %v643 = vld [vmem:[#allocation6 + $0x10] sm:$0xff]
    %v644 = vld [vmem:[#allocation6 + $0x18] sm:$0xff]
    %v645 = vld [vmem:[#allocation6 + $0x20] sm:$0xff]
    %v646 = vld [vmem:[#allocation6 + $0x28] sm:$0xff]
    %v647 = vld [vmem:[#allocation6 + $0x30] sm:$0xff]
    %v648 = vld [vmem:[#allocation6 + $0x38] sm:$0xff]
    %v649 = vld [vmem:[#allocation6 + $0x40] sm:$0xff]
    %v650 = vld [vmem:[#allocation6 + $0x48] sm:$0xff]
    %v651 = vld [vmem:[#allocation6 + $0x50] sm:$0xff]
    %v652 = vld [vmem:[#allocation6 + $0x58] sm:$0xff]
    %v653 = vld [vmem:[#allocation6 + $0x60] sm:$0xff]
    %v654 = vld [vmem:[#allocation6 + $0x68] sm:$0xff]
    %v655 = vld [vmem:[#allocation6 + $0x70] sm:$0xff]
    %v656 = vld [vmem:[#allocation6 + $0x78] sm:$0xff]
    %v657 = vld [vmem:[#allocation6 + $0x80] sm:$0xff]
    %v658 = vld [vmem:[#allocation6 + $0x88] sm:$0xff]
    %v659 = vld [vmem:[#allocation6 + $0x90] sm:$0xff]
    %v660 = vld [vmem:[#allocation6 + $0x98] sm:$0xff]
    %v661 = vld [vmem:[#allocation6 + $0xa0] sm:$0xff]
    %v662 = vld [vmem:[#allocation6 + $0xa8] sm:$0xff]
    %v663 = vld [vmem:[#allocation6 + $0xb0] sm:$0xff]
    %v664 = vld [vmem:[#allocation6 + $0xb8] sm:$0xff]
    %v665 = vld [vmem:[#allocation6 + $0xc0] sm:$0xff]
    %v666 = vld [vmem:[#allocation6 + $0xc8] sm:$0xff]
    %v667 = vld [vmem:[#allocation6 + $0xd0] sm:$0xff]
    %v668 = vld [vmem:[#allocation6 + $0xd8] sm:$0xff]
    %v669 = vld [vmem:[#allocation6 + $0xe0] sm:$0xff]
    %v670 = vld [vmem:[#allocation6 + $0xe8] sm:$0xff]
    %v671 = vld [vmem:[#allocation6 + $0xf0] sm:$0xff]
    %v672 = vld [vmem:[#allocation6 + $0xf8] sm:$0xff]
    %v673 = vld [vmem:[#allocation6 + $0x100] sm:$0xff]
    %v674 = vld [vmem:[#allocation6 + $0x108] sm:$0xff]
    %v675 = vld [vmem:[#allocation6 + $0x110] sm:$0xff]
    %v676 = vld [vmem:[#allocation6 + $0x118] sm:$0xff]
    %v677 = vld [vmem:[#allocation6 + $0x120] sm:$0xff]
    %v678 = vld [vmem:[#allocation6 + $0x128] sm:$0xff]
    %v679 = vld [vmem:[#allocation6 + $0x130] sm:$0xff]
    %v680 = vld [vmem:[#allocation6 + $0x138] sm:$0xff]
    %v681 = vld [vmem:[#allocation6 + $0x140] sm:$0xff]
    %v682 = vld [vmem:[#allocation6 + $0x148] sm:$0xff]
    %v683 = vld [vmem:[#allocation6 + $0x150] sm:$0xff]
    %v684 = vld [vmem:[#allocation6 + $0x158] sm:$0xff]
    %v685 = vld [vmem:[#allocation6 + $0x160] sm:$0xff]
    %v686 = vld [vmem:[#allocation6 + $0x168] sm:$0xff]
    %v687 = vld [vmem:[#allocation6 + $0x170] sm:$0xff]
    %v688 = vld [vmem:[#allocation6 + $0x178] sm:$0xff]
    %v689 = vld [vmem:[#allocation6 + $0x180] sm:$0xff]
    %v690 = vld [vmem:[#allocation6 + $0x188] sm:$0xff]
    %v691 = vld [vmem:[#allocation6 + $0x190] sm:$0xff]
    %v692 = vld [vmem:[#allocation6 + $0x198] sm:$0xff]
    %v693 = vld [vmem:[#allocation6 + $0x1a0] sm:$0xff]
    %v694 = vld [vmem:[#allocation6 + $0x1a8] sm:$0xff]
    %v695 = vld [vmem:[#allocation6 + $0x1b0] sm:$0xff]
    %v696 = vld [vmem:[#allocation6 + $0x1b8] sm:$0xff]
    %v697 = vld [vmem:[#allocation6 + $0x1c0] sm:$0xff]
    %v698 = vld [vmem:[#allocation6 + $0x1c8] sm:$0xff]
    %v699 = vld [vmem:[#allocation6 + $0x1d0] sm:$0xff]
    %v700 = vld [vmem:[#allocation6 + $0x1d8] sm:$0xff]
    %v701 = vld [vmem:[#allocation6 + $0x1e0] sm:$0xff]
    %v702 = vld [vmem:[#allocation6 + $0x1e8] sm:$0xff]
    %v703 = vld [vmem:[#allocation6 + $0x1f0] sm:$0xff]
    %v704 = vld [vmem:[#allocation6 + $0x1f8] sm:$0xff]
    %705 = vmatprep.subr.mxu0 %v642
    %706 = vmatpush1.msra.mxu0 %v641
    %707 = vmatprep.subr.mxu0 %v646
    %708 = vmatpush1.msra.mxu0 %v645
    %709 = vmatprep.subr.mxu0 %v650
    %710 = vmatpush1.msra.mxu0 %v649
    %711 = vmatprep.subr.mxu0 %v654
    %712 = vmatpush1.msra.mxu0 %v653
    %713 = vmatprep.subr.mxu0 %v658
    %714 = vmatpush1.msra.mxu0 %v657
    %715 = vmatprep.subr.mxu0 %v662
    %716 = vmatpush1.msra.mxu0 %v661
    %717 = vmatprep.subr.mxu0 %v666
    %718 = vmatpush1.msra.mxu0 %v665
    %719 = vmatprep.subr.mxu0 %v670
    %720 = vmatpush1.msra.mxu0 %v669
    %721 = vmatprep.subr.mxu0 %v674
    %722 = vmatpush1.msra.mxu0 %v673
    %723 = vmatprep.subr.mxu0 %v678
    %724 = vmatpush1.msra.mxu0 %v677
    %725 = vmatprep.subr.mxu0 %v682
    %726 = vmatpush1.msra.mxu0 %v681
    %727 = vmatprep.subr.mxu0 %v686
    %728 = vmatpush1.msra.mxu0 %v685
    %729 = vmatprep.subr.mxu0 %v690
    %730 = vmatpush1.msra.mxu0 %v689
    %731 = vmatprep.subr.mxu0 %v694
    %732 = vmatpush1.msra.mxu0 %v693
    %733 = vmatprep.subr.mxu0 %v698
    %734 = vmatpush1.msra.mxu0 %v697
    %735 = vmatprep.subr.mxu0 %v702
    %736 = vmatpush1.msra.mxu0 %v701
    %737 = vmatprep.subr.mxu0 0.0
    %738 = vmatpush1.msra.mxu0 0.0
    %739 = vmatprep.subr.mxu0 0.0
    %740 = vmatpush1.msra.mxu0 0.0
    %741 = vmatprep.subr.mxu0 0.0
    %742 = vmatpush1.msra.mxu0 0.0
    %743 = vmatprep.subr.mxu0 0.0
    %744 = vmatpush1.msra.mxu0 0.0
    %745 = vmatprep.subr.mxu0 0.0
    %746 = vmatpush1.msra.mxu0 0.0
    %747 = vmatprep.subr.mxu0 0.0
    %748 = vmatpush1.msra.mxu0 0.0
    %749 = vmatprep.subr.mxu0 0.0
    %750 = vmatpush1.msra.mxu0 0.0
    %751 = vmatprep.subr.mxu0 0.0
    %752 = vmatpush1.msra.mxu0 0.0
    %753 = vmatprep.subr.mxu0 0.0
    %754 = vmatpush1.msra.mxu0 0.0
    %755 = vmatprep.subr.mxu0 0.0
    %756 = vmatpush1.msra.mxu0 0.0
    %757 = vmatprep.subr.mxu0 0.0
    %758 = vmatpush1.msra.mxu0 0.0
    %759 = vmatprep.subr.mxu0 0.0
    %760 = vmatpush1.msra.mxu0 0.0
    %761 = vmatprep.subr.mxu0 0.0
    %762 = vmatpush1.msra.mxu0 0.0
    %763 = vmatprep.subr.mxu0 0.0
    %764 = vmatpush1.msra.mxu0 0.0
    %765 = vmatprep.subr.mxu0 0.0
    %766 = vmatpush1.msra.mxu0 0.0
    %767 = vmatprep.subr.mxu0 0.0
    %768 = vmatpush1.msra.mxu0 0.0
    %769 = vmatprep.mubr.f32.mxu0 0.0
    %770 = vmatmul.mubr.f32.gmra.mrb[0].mxu0 %v632
    %v771 = vpop.f32.mrb[0].mxu0
    %v772 = vadd.f32 0.0, %v771
    %v773 = vpop.f32.mrb[0].mxu0
    %v774 = vadd.f32 0.0, %v773
    %775 = vdwg.mxu0
    %776 = vmatprep.subr.mxu0 %v644
    %777 = vmatpush1.msra.mxu0 %v643
    %778 = vmatprep.subr.mxu0 %v648
    %779 = vmatpush1.msra.mxu0 %v647
    %780 = vmatprep.subr.mxu0 %v652
    %781 = vmatpush1.msra.mxu0 %v651
    %782 = vmatprep.subr.mxu0 %v656
    %783 = vmatpush1.msra.mxu0 %v655
    %784 = vmatprep.subr.mxu0 %v660
    %785 = vmatpush1.msra.mxu0 %v659
    %786 = vmatprep.subr.mxu0 %v664
    %787 = vmatpush1.msra.mxu0 %v663
    %788 = vmatprep.subr.mxu0 %v668
    %789 = vmatpush1.msra.mxu0 %v667
    %790 = vmatprep.subr.mxu0 %v672
    %791 = vmatpush1.msra.mxu0 %v671
    %792 = vmatprep.subr.mxu0 %v676
    %793 = vmatpush1.msra.mxu0 %v675
    %794 = vmatprep.subr.mxu0 %v680
    %795 = vmatpush1.msra.mxu0 %v679
    %796 = vmatprep.subr.mxu0 %v684
    %797 = vmatpush1.msra.mxu0 %v683
    %798 = vmatprep.subr.mxu0 %v688
    %799 = vmatpush1.msra.mxu0 %v687
    %800 = vmatprep.subr.mxu0 %v692
    %801 = vmatpush1.msra.mxu0 %v691
    %802 = vmatprep.subr.mxu0 %v696
    %803 = vmatpush1.msra.mxu0 %v695
    %804 = vmatprep.subr.mxu0 %v700
    %805 = vmatpush1.msra.mxu0 %v699
    %806 = vmatprep.subr.mxu0 %v704
    %807 = vmatpush1.msra.mxu0 %v703
    %808 = vmatprep.subr.mxu0 0.0
    %809 = vmatpush1.msra.mxu0 0.0
    %810 = vmatprep.subr.mxu0 0.0
    %811 = vmatpush1.msra.mxu0 0.0
    %812 = vmatprep.subr.mxu0 0.0
    %813 = vmatpush1.msra.mxu0 0.0
    %814 = vmatprep.subr.mxu0 0.0
    %815 = vmatpush1.msra.mxu0 0.0
    %816 = vmatprep.subr.mxu0 0.0
    %817 = vmatpush1.msra.mxu0 0.0
    %818 = vmatprep.subr.mxu0 0.0
    %819 = vmatpush1.msra.mxu0 0.0
    %820 = vmatprep.subr.mxu0 0.0
    %821 = vmatpush1.msra.mxu0 0.0
    %822 = vmatprep.subr.mxu0 0.0
    %823 = vmatpush1.msra.mxu0 0.0
    %824 = vmatprep.subr.mxu0 0.0
    %825 = vmatpush1.msra.mxu0 0.0
    %826 = vmatprep.subr.mxu0 0.0
    %827 = vmatpush1.msra.mxu0 0.0
    %828 = vmatprep.subr.mxu0 0.0
    %829 = vmatpush1.msra.mxu0 0.0
    %830 = vmatprep.subr.mxu0 0.0
    %831 = vmatpush1.msra.mxu0 0.0
    %832 = vmatprep.subr.mxu0 0.0
    %833 = vmatpush1.msra.mxu0 0.0
    %834 = vmatprep.subr.mxu0 0.0
    %835 = vmatpush1.msra.mxu0 0.0
    %836 = vmatprep.subr.mxu0 0.0
    %837 = vmatpush1.msra.mxu0 0.0
    %838 = vmatprep.subr.mxu0 0.0
    %839 = vmatpush1.msra.mxu0 0.0
    %840 = vmatprep.mubr.f32.mxu0 0.0
    %841 = vmatmul.mubr.f32.gmra.mrb[0].mxu0 %v632
    %v842 = vpop.f32.mrb[0].mxu0
    %v843 = vadd.f32 0.0, %v842
    %v844 = vpop.f32.mrb[0].mxu0
    %v845 = vadd.f32 0.0, %v844
    %846 = vdwg.mxu0
    %v847 = vadd.f32 %v637, %v772
    %v848 = vadd.f32 %v638, %v774
    %v849 = vadd.f32 %v639, %v843
    %v850 = vadd.f32 %v640, %v845
    %v851 = vxor.u32 %v847, 2147483648
    %v852 = vmul.f32 %v851, 1.442695
    %v853 = vpow.pop %v852
    %v854 = vadd.f32 %v853, 1.0
    %v855 = vrcp.pop %v854
    %v856 = vmul.f32 1.0, %v855
    %v857 = vxor.u32 %v848, 2147483648
    %v858 = vmul.f32 %v857, 1.442695
    %v859 = vpow.pop %v858
    %v860 = vadd.f32 %v859, 1.0
    %v861 = vrcp.pop %v860
    %v862 = vmul.f32 1.0, %v861
    %v863 = vtanh.pop %v849
    %v864 = vxor.u32 %v850, 2147483648
    %v865 = vmul.f32 %v864, 1.442695
    %v866 = vpow.pop %v865
    %v867 = vadd.f32 %v866, 1.0
    %v868 = vrcp.pop %v867
    %v869 = vmul.f32 1.0, %v868
    %v870 = vmul.f32 %v862, %v630
    %v871 = vmul.f32 %v856, %v863
    %v872 = vadd.f32 %v870, %v871
    %v873 = vtanh.pop %v872
    %v874 = vmul.f32 %v869, %v873
    %s875 = scalar_lea.vmem [#allocation3], 8
    %876 = vst [vmem:[%s875] sm:$0xff] %v874
    %s877 = smul.u32 2, 4
    %s878 = smul.addr %s877, 8
    %s879 = scalar_lea.vmem [#allocation2], %s878
    %v880 = vld [vmem:[%s879] sm:$0xff]
    %v881 = vld [vmem:[%s879 + $0x8] sm:$0xff]
    %v882 = vld [vmem:[%s879 + $0x10] sm:$0xff]
    %v883 = vld [vmem:[%s879 + $0x18] sm:$0xff]
    %v884 = vld [vmem:[#allocation6] sm:$0xff]
    %v885 = vld [vmem:[#allocation6 + $0x8] sm:$0xff]
    %v886 = vld [vmem:[#allocation6 + $0x10] sm:$0xff]
    %v887 = vld [vmem:[#allocation6 + $0x18] sm:$0xff]
    %v888 = vld [vmem:[#allocation6 + $0x20] sm:$0xff]
    %v889 = vld [vmem:[#allocation6 + $0x28] sm:$0xff]
    %v890 = vld [vmem:[#allocation6 + $0x30] sm:$0xff]
    %v891 = vld [vmem:[#allocation6 + $0x38] sm:$0xff]
    %v892 = vld [vmem:[#allocation6 + $0x40] sm:$0xff]
    %v893 = vld [vmem:[#allocation6 + $0x48] sm:$0xff]
    %v894 = vld [vmem:[#allocation6 + $0x50] sm:$0xff]
    %v895 = vld [vmem:[#allocation6 + $0x58] sm:$0xff]
    %v896 = vld [vmem:[#allocation6 + $0x60] sm:$0xff]
    %v897 = vld [vmem:[#allocation6 + $0x68] sm:$0xff]
    %v898 = vld [vmem:[#allocation6 + $0x70] sm:$0xff]
    %v899 = vld [vmem:[#allocation6 + $0x78] sm:$0xff]
    %v900 = vld [vmem:[#allocation6 + $0x80] sm:$0xff]
    %v901 = vld [vmem:[#allocation6 + $0x88] sm:$0xff]
    %v902 = vld [vmem:[#allocation6 + $0x90] sm:$0xff]
    %v903 = vld [vmem:[#allocation6 + $0x98] sm:$0xff]
    %v904 = vld [vmem:[#allocation6 + $0xa0] sm:$0xff]
    %v905 = vld [vmem:[#allocation6 + $0xa8] sm:$0xff]
    %v906 = vld [vmem:[#allocation6 + $0xb0] sm:$0xff]
    %v907 = vld [vmem:[#allocation6 + $0xb8] sm:$0xff]
    %v908 = vld [vmem:[#allocation6 + $0xc0] sm:$0xff]
    %v909 = vld [vmem:[#allocation6 + $0xc8] sm:$0xff]
    %v910 = vld [vmem:[#allocation6 + $0xd0] sm:$0xff]
    %v911 = vld [vmem:[#allocation6 + $0xd8] sm:$0xff]
    %v912 = vld [vmem:[#allocation6 + $0xe0] sm:$0xff]
    %v913 = vld [vmem:[#allocation6 + $0xe8] sm:$0xff]
    %v914 = vld [vmem:[#allocation6 + $0xf0] sm:$0xff]
    %v915 = vld [vmem:[#allocation6 + $0xf8] sm:$0xff]
    %v916 = vld [vmem:[#allocation6 + $0x100] sm:$0xff]
    %v917 = vld [vmem:[#allocation6 + $0x108] sm:$0xff]
    %v918 = vld [vmem:[#allocation6 + $0x110] sm:$0xff]
    %v919 = vld [vmem:[#allocation6 + $0x118] sm:$0xff]
    %v920 = vld [vmem:[#allocation6 + $0x120] sm:$0xff]
    %v921 = vld [vmem:[#allocation6 + $0x128] sm:$0xff]
    %v922 = vld [vmem:[#allocation6 + $0x130] sm:$0xff]
    %v923 = vld [vmem:[#allocation6 + $0x138] sm:$0xff]
    %v924 = vld [vmem:[#allocation6 + $0x140] sm:$0xff]
    %v925 = vld [vmem:[#allocation6 + $0x148] sm:$0xff]
    %v926 = vld [vmem:[#allocation6 + $0x150] sm:$0xff]
    %v927 = vld [vmem:[#allocation6 + $0x158] sm:$0xff]
    %v928 = vld [vmem:[#allocation6 + $0x160] sm:$0xff]
    %v929 = vld [vmem:[#allocation6 + $0x168] sm:$0xff]
    %v930 = vld [vmem:[#allocation6 + $0x170] sm:$0xff]
    %v931 = vld [vmem:[#allocation6 + $0x178] sm:$0xff]
    %v932 = vld [vmem:[#allocation6 + $0x180] sm:$0xff]
    %v933 = vld [vmem:[#allocation6 + $0x188] sm:$0xff]
    %v934 = vld [vmem:[#allocation6 + $0x190] sm:$0xff]
    %v935 = vld [vmem:[#allocation6 + $0x198] sm:$0xff]
    %v936 = vld [vmem:[#allocation6 + $0x1a0] sm:$0xff]
    %v937 = vld [vmem:[#allocation6 + $0x1a8] sm:$0xff]
    %v938 = vld [vmem:[#allocation6 + $0x1b0] sm:$0xff]
    %v939 = vld [vmem:[#allocation6 + $0x1b8] sm:$0xff]
    %v940 = vld [vmem:[#allocation6 + $0x1c0] sm:$0xff]
    %v941 = vld [vmem:[#allocation6 + $0x1c8] sm:$0xff]
    %v942 = vld [vmem:[#allocation6 + $0x1d0] sm:$0xff]
    %v943 = vld [vmem:[#allocation6 + $0x1d8] sm:$0xff]
    %v944 = vld [vmem:[#allocation6 + $0x1e0] sm:$0xff]
    %v945 = vld [vmem:[#allocation6 + $0x1e8] sm:$0xff]
    %v946 = vld [vmem:[#allocation6 + $0x1f0] sm:$0xff]
    %v947 = vld [vmem:[#allocation6 + $0x1f8] sm:$0xff]
    %948 = vmatprep.subr.mxu0 %v885
    %949 = vmatpush1.msra.mxu0 %v884
    %950 = vmatprep.subr.mxu0 %v889
    %951 = vmatpush1.msra.mxu0 %v888
    %952 = vmatprep.subr.mxu0 %v893
    %953 = vmatpush1.msra.mxu0 %v892
    %954 = vmatprep.subr.mxu0 %v897
    %955 = vmatpush1.msra.mxu0 %v896
    %956 = vmatprep.subr.mxu0 %v901
    %957 = vmatpush1.msra.mxu0 %v900
    %958 = vmatprep.subr.mxu0 %v905
    %959 = vmatpush1.msra.mxu0 %v904
    %960 = vmatprep.subr.mxu0 %v909
    %961 = vmatpush1.msra.mxu0 %v908
    %962 = vmatprep.subr.mxu0 %v913
    %963 = vmatpush1.msra.mxu0 %v912
    %964 = vmatprep.subr.mxu0 %v917
    %965 = vmatpush1.msra.mxu0 %v916
    %966 = vmatprep.subr.mxu0 %v921
    %967 = vmatpush1.msra.mxu0 %v920
    %968 = vmatprep.subr.mxu0 %v925
    %969 = vmatpush1.msra.mxu0 %v924
    %970 = vmatprep.subr.mxu0 %v929
    %971 = vmatpush1.msra.mxu0 %v928
    %972 = vmatprep.subr.mxu0 %v933
    %973 = vmatpush1.msra.mxu0 %v932
    %974 = vmatprep.subr.mxu0 %v937
    %975 = vmatpush1.msra.mxu0 %v936
    %976 = vmatprep.subr.mxu0 %v941
    %977 = vmatpush1.msra.mxu0 %v940
    %978 = vmatprep.subr.mxu0 %v945
    %979 = vmatpush1.msra.mxu0 %v944
    %980 = vmatprep.subr.mxu0 0.0
    %981 = vmatpush1.msra.mxu0 0.0
    %982 = vmatprep.subr.mxu0 0.0
    %983 = vmatpush1.msra.mxu0 0.0
    %984 = vmatprep.subr.mxu0 0.0
    %985 = vmatpush1.msra.mxu0 0.0
    %986 = vmatprep.subr.mxu0 0.0
    %987 = vmatpush1.msra.mxu0 0.0
    %988 = vmatprep.subr.mxu0 0.0
    %989 = vmatpush1.msra.mxu0 0.0
    %990 = vmatprep.subr.mxu0 0.0
    %991 = vmatpush1.msra.mxu0 0.0
    %992 = vmatprep.subr.mxu0 0.0
    %993 = vmatpush1.msra.mxu0 0.0
    %994 = vmatprep.subr.mxu0 0.0
    %995 = vmatpush1.msra.mxu0 0.0
    %996 = vmatprep.subr.mxu0 0.0
    %997 = vmatpush1.msra.mxu0 0.0
    %998 = vmatprep.subr.mxu0 0.0
    %999 = vmatpush1.msra.mxu0 0.0
    %1000 = vmatprep.subr.mxu0 0.0
    %1001 = vmatpush1.msra.mxu0 0.0
    %1002 = vmatprep.subr.mxu0 0.0
    %1003 = vmatpush1.msra.mxu0 0.0
    %1004 = vmatprep.subr.mxu0 0.0
    %1005 = vmatpush1.msra.mxu0 0.0
    %1006 = vmatprep.subr.mxu0 0.0
    %1007 = vmatpush1.msra.mxu0 0.0
    %1008 = vmatprep.subr.mxu0 0.0
    %1009 = vmatpush1.msra.mxu0 0.0
    %1010 = vmatprep.subr.mxu0 0.0
    %1011 = vmatpush1.msra.mxu0 0.0
    %1012 = vmatprep.mubr.f32.mxu0 0.0
    %1013 = vmatmul.mubr.f32.gmra.mrb[0].mxu0 %v874
    %v1014 = vpop.f32.mrb[0].mxu0
    %v1015 = vadd.f32 0.0, %v1014
    %v1016 = vpop.f32.mrb[0].mxu0
    %v1017 = vadd.f32 0.0, %v1016
    %1018 = vdwg.mxu0
    %1019 = vmatprep.subr.mxu0 %v887
    %1020 = vmatpush1.msra.mxu0 %v886
    %1021 = vmatprep.subr.mxu0 %v891
    %1022 = vmatpush1.msra.mxu0 %v890
    %1023 = vmatprep.subr.mxu0 %v895
    %1024 = vmatpush1.msra.mxu0 %v894
    %1025 = vmatprep.subr.mxu0 %v899
    %1026 = vmatpush1.msra.mxu0 %v898
    %1027 = vmatprep.subr.mxu0 %v903
    %1028 = vmatpush1.msra.mxu0 %v902
    %1029 = vmatprep.subr.mxu0 %v907
    %1030 = vmatpush1.msra.mxu0 %v906
    %1031 = vmatprep.subr.mxu0 %v911
    %1032 = vmatpush1.msra.mxu0 %v910
    %1033 = vmatprep.subr.mxu0 %v915
    %1034 = vmatpush1.msra.mxu0 %v914
    %1035 = vmatprep.subr.mxu0 %v919
    %1036 = vmatpush1.msra.mxu0 %v918
    %1037 = vmatprep.subr.mxu0 %v923
    %1038 = vmatpush1.msra.mxu0 %v922
    %1039 = vmatprep.subr.mxu0 %v927
    %1040 = vmatpush1.msra.mxu0 %v926
    %1041 = vmatprep.subr.mxu0 %v931
    %1042 = vmatpush1.msra.mxu0 %v930
    %1043 = vmatprep.subr.mxu0 %v935
    %1044 = vmatpush1.msra.mxu0 %v934
    %1045 = vmatprep.subr.mxu0 %v939
    %1046 = vmatpush1.msra.mxu0 %v938
    %1047 = vmatprep.subr.mxu0 %v943
    %1048 = vmatpush1.msra.mxu0 %v942
    %1049 = vmatprep.subr.mxu0 %v947
    %1050 = vmatpush1.msra.mxu0 %v946
    %1051 = vmatprep.subr.mxu0 0.0
    %1052 = vmatpush1.msra.mxu0 0.0
    %1053 = vmatprep.subr.mxu0 0.0
    %1054 = vmatpush1.msra.mxu0 0.0
    %1055 = vmatprep.subr.mxu0 0.0
    %1056 = vmatpush1.msra.mxu0 0.0
    %1057 = vmatprep.subr.mxu0 0.0
    %1058 = vmatpush1.msra.mxu0 0.0
    %1059 = vmatprep.subr.mxu0 0.0
    %1060 = vmatpush1.msra.mxu0 0.0
    %1061 = vmatprep.subr.mxu0 0.0
    %1062 = vmatpush1.msra.mxu0 0.0
    %1063 = vmatprep.subr.mxu0 0.0
    %1064 = vmatpush1.msra.mxu0 0.0
    %1065 = vmatprep.subr.mxu0 0.0
    %1066 = vmatpush1.msra.mxu0 0.0
    %1067 = vmatprep.subr.mxu0 0.0
    %1068 = vmatpush1.msra.mxu0 0.0
    %1069 = vmatprep.subr.mxu0 0.0
    %1070 = vmatpush1.msra.mxu0 0.0
    %1071 = vmatprep.subr.mxu0 0.0
    %1072 = vmatpush1.msra.mxu0 0.0
    %1073 = vmatprep.subr.mxu0 0.0
    %1074 = vmatpush1.msra.mxu0 0.0
    %1075 = vmatprep.subr.mxu0 0.0
    %1076 = vmatpush1.msra.mxu0 0.0
    %1077 = vmatprep.subr.mxu0 0.0
    %1078 = vmatpush1.msra.mxu0 0.0
    %1079 = vmatprep.subr.mxu0 0.0
    %1080 = vmatpush1.msra.mxu0 0.0
    %1081 = vmatprep.subr.mxu0 0.0
    %1082 = vmatpush1.msra.mxu0 0.0
    %1083 = vmatprep.mubr.f32.mxu0 0.0
    %1084 = vmatmul.mubr.f32.gmra.mrb[0].mxu0 %v874
    %v1085 = vpop.f32.mrb[0].mxu0
    %v1086 = vadd.f32 0.0, %v1085
    %v1087 = vpop.f32.mrb[0].mxu0
    %v1088 = vadd.f32 0.0, %v1087
    %1089 = vdwg.mxu0
    %v1090 = vadd.f32 %v880, %v1015
    %v1091 = vadd.f32 %v881, %v1017
    %v1092 = vadd.f32 %v882, %v1086
    %v1093 = vadd.f32 %v883, %v1088
    %v1094 = vxor.u32 %v1090, 2147483648
    %v1095 = vmul.f32 %v1094, 1.442695
    %v1096 = vpow.pop %v1095
    %v1097 = vadd.f32 %v1096, 1.0
    %v1098 = vrcp.pop %v1097
    %v1099 = vmul.f32 1.0, %v1098
    %v1100 = vxor.u32 %v1091, 2147483648
    %v1101 = vmul.f32 %v1100, 1.442695
    %v1102 = vpow.pop %v1101
    %v1103 = vadd.f32 %v1102, 1.0
    %v1104 = vrcp.pop %v1103
    %v1105 = vmul.f32 1.0, %v1104
    %v1106 = vtanh.pop %v1092
    %v1107 = vxor.u32 %v1093, 2147483648
    %v1108 = vmul.f32 %v1107, 1.442695
    %v1109 = vpow.pop %v1108
    %v1110 = vadd.f32 %v1109, 1.0
    %v1111 = vrcp.pop %v1110
    %v1112 = vmul.f32 1.0, %v1111
    %v1113 = vmul.f32 %v1105, %v872
    %v1114 = vmul.f32 %v1099, %v1106
    %v1115 = vadd.f32 %v1113, %v1114
    %v1116 = vtanh.pop %v1115
    %v1117 = vmul.f32 %v1112, %v1116
    %s1118 = scalar_lea.vmem [#allocation3], 16
    %1119 = vst [vmem:[%s1118] sm:$0xff] %v1117
    %s1120 = smul.u32 3, 4
    %s1121 = smul.addr %s1120, 8
    %s1122 = scalar_lea.vmem [#allocation2], %s1121
    %v1123 = vld [vmem:[%s1122] sm:$0xff]
    %v1124 = vld [vmem:[%s1122 + $0x8] sm:$0xff]
    %v1125 = vld [vmem:[%s1122 + $0x10] sm:$0xff]
    %v1126 = vld [vmem:[%s1122 + $0x18] sm:$0xff]
    %v1127 = vld [vmem:[#allocation6] sm:$0xff]
    %v1128 = vld [vmem:[#allocation6 + $0x8] sm:$0xff]
    %v1129 = vld [vmem:[#allocation6 + $0x10] sm:$0xff]
    %v1130 = vld [vmem:[#allocation6 + $0x18] sm:$0xff]
    %v1131 = vld [vmem:[#allocation6 + $0x20] sm:$0xff]
    %v1132 = vld [vmem:[#allocation6 + $0x28] sm:$0xff]
    %v1133 = vld [vmem:[#allocation6 + $0x30] sm:$0xff]
    %v1134 = vld [vmem:[#allocation6 + $0x38] sm:$0xff]
    %v1135 = vld [vmem:[#allocation6 + $0x40] sm:$0xff]
    %v1136 = vld [vmem:[#allocation6 + $0x48] sm:$0xff]
    %v1137 = vld [vmem:[#allocation6 + $0x50] sm:$0xff]
    %v1138 = vld [vmem:[#allocation6 + $0x58] sm:$0xff]
    %v1139 = vld [vmem:[#allocation6 + $0x60] sm:$0xff]
    %v1140 = vld [vmem:[#allocation6 + $0x68] sm:$0xff]
    %v1141 = vld [vmem:[#allocation6 + $0x70] sm:$0xff]
    %v1142 = vld [vmem:[#allocation6 + $0x78] sm:$0xff]
    %v1143 = vld [vmem:[#allocation6 + $0x80] sm:$0xff]
    %v1144 = vld [vmem:[#allocation6 + $0x88] sm:$0xff]
    %v1145 = vld [vmem:[#allocation6 + $0x90] sm:$0xff]
    %v1146 = vld [vmem:[#allocation6 + $0x98] sm:$0xff]
    %v1147 = vld [vmem:[#allocation6 + $0xa0] sm:$0xff]
    %v1148 = vld [vmem:[#allocation6 + $0xa8] sm:$0xff]
    %v1149 = vld [vmem:[#allocation6 + $0xb0] sm:$0xff]
    %v1150 = vld [vmem:[#allocation6 + $0xb8] sm:$0xff]
    %v1151 = vld [vmem:[#allocation6 + $0xc0] sm:$0xff]
    %v1152 = vld [vmem:[#allocation6 + $0xc8] sm:$0xff]
    %v1153 = vld [vmem:[#allocation6 + $0xd0] sm:$0xff]
    %v1154 = vld [vmem:[#allocation6 + $0xd8] sm:$0xff]
    %v1155 = vld [vmem:[#allocation6 + $0xe0] sm:$0xff]
    %v1156 = vld [vmem:[#allocation6 + $0xe8] sm:$0xff]
    %v1157 = vld [vmem:[#allocation6 + $0xf0] sm:$0xff]
    %v1158 = vld [vmem:[#allocation6 + $0xf8] sm:$0xff]
    %v1159 = vld [vmem:[#allocation6 + $0x100] sm:$0xff]
    %v1160 = vld [vmem:[#allocation6 + $0x108] sm:$0xff]
    %v1161 = vld [vmem:[#allocation6 + $0x110] sm:$0xff]
    %v1162 = vld [vmem:[#allocation6 + $0x118] sm:$0xff]
    %v1163 = vld [vmem:[#allocation6 + $0x120] sm:$0xff]
    %v1164 = vld [vmem:[#allocation6 + $0x128] sm:$0xff]
    %v1165 = vld [vmem:[#allocation6 + $0x130] sm:$0xff]
    %v1166 = vld [vmem:[#allocation6 + $0x138] sm:$0xff]
    %v1167 = vld [vmem:[#allocation6 + $0x140] sm:$0xff]
    %v1168 = vld [vmem:[#allocation6 + $0x148] sm:$0xff]
    %v1169 = vld [vmem:[#allocation6 + $0x150] sm:$0xff]
    %v1170 = vld [vmem:[#allocation6 + $0x158] sm:$0xff]
    %v1171 = vld [vmem:[#allocation6 + $0x160] sm:$0xff]
    %v1172 = vld [vmem:[#allocation6 + $0x168] sm:$0xff]
    %v1173 = vld [vmem:[#allocation6 + $0x170] sm:$0xff]
    %v1174 = vld [vmem:[#allocation6 + $0x178] sm:$0xff]
    %v1175 = vld [vmem:[#allocation6 + $0x180] sm:$0xff]
    %v1176 = vld [vmem:[#allocation6 + $0x188] sm:$0xff]
    %v1177 = vld [vmem:[#allocation6 + $0x190] sm:$0xff]
    %v1178 = vld [vmem:[#allocation6 + $0x198] sm:$0xff]
    %v1179 = vld [vmem:[#allocation6 + $0x1a0] sm:$0xff]
    %v1180 = vld [vmem:[#allocation6 + $0x1a8] sm:$0xff]
    %v1181 = vld [vmem:[#allocation6 + $0x1b0] sm:$0xff]
    %v1182 = vld [vmem:[#allocation6 + $0x1b8] sm:$0xff]
    %v1183 = vld [vmem:[#allocation6 + $0x1c0] sm:$0xff]
    %v1184 = vld [vmem:[#allocation6 + $0x1c8] sm:$0xff]
    %v1185 = vld [vmem:[#allocation6 + $0x1d0] sm:$0xff]
    %v1186 = vld [vmem:[#allocation6 + $0x1d8] sm:$0xff]
    %v1187 = vld [vmem:[#allocation6 + $0x1e0] sm:$0xff]
    %v1188 = vld [vmem:[#allocation6 + $0x1e8] sm:$0xff]
    %v1189 = vld [vmem:[#allocation6 + $0x1f0] sm:$0xff]
    %v1190 = vld [vmem:[#allocation6 + $0x1f8] sm:$0xff]
    %1191 = vmatprep.subr.mxu0 %v1128
    %1192 = vmatpush1.msra.mxu0 %v1127
    %1193 = vmatprep.subr.mxu0 %v1132
    %1194 = vmatpush1.msra.mxu0 %v1131
    %1195 = vmatprep.subr.mxu0 %v1136
    %1196 = vmatpush1.msra.mxu0 %v1135
    %1197 = vmatprep.subr.mxu0 %v1140
    %1198 = vmatpush1.msra.mxu0 %v1139
    %1199 = vmatprep.subr.mxu0 %v1144
    %1200 = vmatpush1.msra.mxu0 %v1143
    %1201 = vmatprep.subr.mxu0 %v1148
    %1202 = vmatpush1.msra.mxu0 %v1147
    %1203 = vmatprep.subr.mxu0 %v1152
    %1204 = vmatpush1.msra.mxu0 %v1151
    %1205 = vmatprep.subr.mxu0 %v1156
    %1206 = vmatpush1.msra.mxu0 %v1155
    %1207 = vmatprep.subr.mxu0 %v1160
    %1208 = vmatpush1.msra.mxu0 %v1159
    %1209 = vmatprep.subr.mxu0 %v1164
    %1210 = vmatpush1.msra.mxu0 %v1163
    %1211 = vmatprep.subr.mxu0 %v1168
    %1212 = vmatpush1.msra.mxu0 %v1167
    %1213 = vmatprep.subr.mxu0 %v1172
    %1214 = vmatpush1.msra.mxu0 %v1171
    %1215 = vmatprep.subr.mxu0 %v1176
    %1216 = vmatpush1.msra.mxu0 %v1175
    %1217 = vmatprep.subr.mxu0 %v1180
    %1218 = vmatpush1.msra.mxu0 %v1179
    %1219 = vmatprep.subr.mxu0 %v1184
    %1220 = vmatpush1.msra.mxu0 %v1183
    %1221 = vmatprep.subr.mxu0 %v1188
    %1222 = vmatpush1.msra.mxu0 %v1187
    %1223 = vmatprep.subr.mxu0 0.0
    %1224 = vmatpush1.msra.mxu0 0.0
    %1225 = vmatprep.subr.mxu0 0.0
    %1226 = vmatpush1.msra.mxu0 0.0
    %1227 = vmatprep.subr.mxu0 0.0
    %1228 = vmatpush1.msra.mxu0 0.0
    %1229 = vmatprep.subr.mxu0 0.0
    %1230 = vmatpush1.msra.mxu0 0.0
    %1231 = vmatprep.subr.mxu0 0.0
    %1232 = vmatpush1.msra.mxu0 0.0
    %1233 = vmatprep.subr.mxu0 0.0
    %1234 = vmatpush1.msra.mxu0 0.0
    %1235 = vmatprep.subr.mxu0 0.0
    %1236 = vmatpush1.msra.mxu0 0.0
    %1237 = vmatprep.subr.mxu0 0.0
    %1238 = vmatpush1.msra.mxu0 0.0
    %1239 = vmatprep.subr.mxu0 0.0
    %1240 = vmatpush1.msra.mxu0 0.0
    %1241 = vmatprep.subr.mxu0 0.0
    %1242 = vmatpush1.msra.mxu0 0.0
    %1243 = vmatprep.subr.mxu0 0.0
    %1244 = vmatpush1.msra.mxu0 0.0
    %1245 = vmatprep.subr.mxu0 0.0
    %1246 = vmatpush1.msra.mxu0 0.0
    %1247 = vmatprep.subr.mxu0 0.0
    %1248 = vmatpush1.msra.mxu0 0.0
    %1249 = vmatprep.subr.mxu0 0.0
    %1250 = vmatpush1.msra.mxu0 0.0
    %1251 = vmatprep.subr.mxu0 0.0
    %1252 = vmatpush1.msra.mxu0 0.0
    %1253 = vmatprep.subr.mxu0 0.0
    %1254 = vmatpush1.msra.mxu0 0.0
    %1255 = vmatprep.mubr.f32.mxu0 0.0
    %1256 = vmatmul.mubr.f32.gmra.mrb[0].mxu0 %v1117
    %v1257 = vpop.f32.mrb[0].mxu0
    %v1258 = vadd.f32 0.0, %v1257
    %v1259 = vpop.f32.mrb[0].mxu0
    %v1260 = vadd.f32 0.0, %v1259
    %1261 = vdwg.mxu0
    %1262 = vmatprep.subr.mxu0 %v1130
    %1263 = vmatpush1.msra.mxu0 %v1129
    %1264 = vmatprep.subr.mxu0 %v1134
    %1265 = vmatpush1.msra.mxu0 %v1133
    %1266 = vmatprep.subr.mxu0 %v1138
    %1267 = vmatpush1.msra.mxu0 %v1137
    %1268 = vmatprep.subr.mxu0 %v1142
    %1269 = vmatpush1.msra.mxu0 %v1141
    %1270 = vmatprep.subr.mxu0 %v1146
    %1271 = vmatpush1.msra.mxu0 %v1145
    %1272 = vmatprep.subr.mxu0 %v1150
    %1273 = vmatpush1.msra.mxu0 %v1149
    %1274 = vmatprep.subr.mxu0 %v1154
    %1275 = vmatpush1.msra.mxu0 %v1153
    %1276 = vmatprep.subr.mxu0 %v1158
    %1277 = vmatpush1.msra.mxu0 %v1157
    %1278 = vmatprep.subr.mxu0 %v1162
    %1279 = vmatpush1.msra.mxu0 %v1161
    %1280 = vmatprep.subr.mxu0 %v1166
    %1281 = vmatpush1.msra.mxu0 %v1165
    %1282 = vmatprep.subr.mxu0 %v1170
    %1283 = vmatpush1.msra.mxu0 %v1169
    %1284 = vmatprep.subr.mxu0 %v1174
    %1285 = vmatpush1.msra.mxu0 %v1173
    %1286 = vmatprep.subr.mxu0 %v1178
    %1287 = vmatpush1.msra.mxu0 %v1177
    %1288 = vmatprep.subr.mxu0 %v1182
    %1289 = vmatpush1.msra.mxu0 %v1181
    %1290 = vmatprep.subr.mxu0 %v1186
    %1291 = vmatpush1.msra.mxu0 %v1185
    %1292 = vmatprep.subr.mxu0 %v1190
    %1293 = vmatpush1.msra.mxu0 %v1189
    %1294 = vmatprep.subr.mxu0 0.0
    %1295 = vmatpush1.msra.mxu0 0.0
    %1296 = vmatprep.subr.mxu0 0.0
    %1297 = vmatpush1.msra.mxu0 0.0
    %1298 = vmatprep.subr.mxu0 0.0
    %1299 = vmatpush1.msra.mxu0 0.0
    %1300 = vmatprep.subr.mxu0 0.0
    %1301 = vmatpush1.msra.mxu0 0.0
    %1302 = vmatprep.subr.mxu0 0.0
    %1303 = vmatpush1.msra.mxu0 0.0
    %1304 = vmatprep.subr.mxu0 0.0
    %1305 = vmatpush1.msra.mxu0 0.0
    %1306 = vmatprep.subr.mxu0 0.0
    %1307 = vmatpush1.msra.mxu0 0.0
    %1308 = vmatprep.subr.mxu0 0.0
    %1309 = vmatpush1.msra.mxu0 0.0
    %1310 = vmatprep.subr.mxu0 0.0
    %1311 = vmatpush1.msra.mxu0 0.0
    %1312 = vmatprep.subr.mxu0 0.0
    %1313 = vmatpush1.msra.mxu0 0.0
    %1314 = vmatprep.subr.mxu0 0.0
    %1315 = vmatpush1.msra.mxu0 0.0
    %1316 = vmatprep.subr.mxu0 0.0
    %1317 = vmatpush1.msra.mxu0 0.0
    %1318 = vmatprep.subr.mxu0 0.0
    %1319 = vmatpush1.msra.mxu0 0.0
    %1320 = vmatprep.subr.mxu0 0.0
    %1321 = vmatpush1.msra.mxu0 0.0
    %1322 = vmatprep.subr.mxu0 0.0
    %1323 = vmatpush1.msra.mxu0 0.0
    %1324 = vmatprep.subr.mxu0 0.0
    %1325 = vmatpush1.msra.mxu0 0.0
    %1326 = vmatprep.mubr.f32.mxu0 0.0
    %1327 = vmatmul.mubr.f32.gmra.mrb[0].mxu0 %v1117
    %v1328 = vpop.f32.mrb[0].mxu0
    %v1329 = vadd.f32 0.0, %v1328
    %v1330 = vpop.f32.mrb[0].mxu0
    %v1331 = vadd.f32 0.0, %v1330
    %1332 = vdwg.mxu0
    %v1333 = vadd.f32 %v1123, %v1258
    %v1334 = vadd.f32 %v1124, %v1260
    %v1335 = vadd.f32 %v1125, %v1329
    %v1336 = vadd.f32 %v1126, %v1331
    %v1337 = vxor.u32 %v1333, 2147483648
    %v1338 = vmul.f32 %v1337, 1.442695
    %v1339 = vpow.pop %v1338
    %v1340 = vadd.f32 %v1339, 1.0
    %v1341 = vrcp.pop %v1340
    %v1342 = vmul.f32 1.0, %v1341
    %v1343 = vxor.u32 %v1334, 2147483648
    %v1344 = vmul.f32 %v1343, 1.442695
    %v1345 = vpow.pop %v1344
    %v1346 = vadd.f32 %v1345, 1.0
    %v1347 = vrcp.pop %v1346
    %v1348 = vmul.f32 1.0, %v1347
    %v1349 = vtanh.pop %v1335
    %v1350 = vxor.u32 %v1336, 2147483648
    %v1351 = vmul.f32 %v1350, 1.442695
    %v1352 = vpow.pop %v1351
    %v1353 = vadd.f32 %v1352, 1.0
    %v1354 = vrcp.pop %v1353
    %v1355 = vmul.f32 1.0, %v1354
    %v1356 = vmul.f32 %v1348, %v1115
    %v1357 = vmul.f32 %v1342, %v1349
    %v1358 = vadd.f32 %v1356, %v1357
    %v1359 = vtanh.pop %v1358
    %v1360 = vmul.f32 %v1355, %v1359
    %s1361 = scalar_lea.vmem [#allocation3], 24
    %1362 = vst [vmem:[%s1361] sm:$0xff] %v1360
    %s1363 = smul.u32 4, 4
    %s1364 = smul.addr %s1363, 8
    %s1365 = scalar_lea.vmem [#allocation2], %s1364
    %v1366 = vld [vmem:[%s1365] sm:$0xff]
    %v1367 = vld [vmem:[%s1365 + $0x8] sm:$0xff]
    %v1368 = vld [vmem:[%s1365 + $0x10] sm:$0xff]
    %v1369 = vld [vmem:[%s1365 + $0x18] sm:$0xff]
    %v1370 = vld [vmem:[#allocation6] sm:$0xff]
    %v1371 = vld [vmem:[#allocation6 + $0x8] sm:$0xff]
    %v1372 = vld [vmem:[#allocation6 + $0x10] sm:$0xff]
    %v1373 = vld [vmem:[#allocation6 + $0x18] sm:$0xff]
    %v1374 = vld [vmem:[#allocation6 + $0x20] sm:$0xff]
    %v1375 = vld [vmem:[#allocation6 + $0x28] sm:$0xff]
    %v1376 = vld [vmem:[#allocation6 + $0x30] sm:$0xff]
    %v1377 = vld [vmem:[#allocation6 + $0x38] sm:$0xff]
    %v1378 = vld [vmem:[#allocation6 + $0x40] sm:$0xff]
    %v1379 = vld [vmem:[#allocation6 + $0x48] sm:$0xff]
    %v1380 = vld [vmem:[#allocation6 + $0x50] sm:$0xff]
    %v1381 = vld [vmem:[#allocation6 + $0x58] sm:$0xff]
    %v1382 = vld [vmem:[#allocation6 + $0x60] sm:$0xff]
    %v1383 = vld [vmem:[#allocation6 + $0x68] sm:$0xff]
    %v1384 = vld [vmem:[#allocation6 + $0x70] sm:$0xff]
    %v1385 = vld [vmem:[#allocation6 + $0x78] sm:$0xff]
    %v1386 = vld [vmem:[#allocation6 + $0x80] sm:$0xff]
    %v1387 = vld [vmem:[#allocation6 + $0x88] sm:$0xff]
    %v1388 = vld [vmem:[#allocation6 + $0x90] sm:$0xff]
    %v1389 = vld [vmem:[#allocation6 + $0x98] sm:$0xff]
    %v1390 = vld [vmem:[#allocation6 + $0xa0] sm:$0xff]
    %v1391 = vld [vmem:[#allocation6 + $0xa8] sm:$0xff]
    %v1392 = vld [vmem:[#allocation6 + $0xb0] sm:$0xff]
    %v1393 = vld [vmem:[#allocation6 + $0xb8] sm:$0xff]
    %v1394 = vld [vmem:[#allocation6 + $0xc0] sm:$0xff]
    %v1395 = vld [vmem:[#allocation6 + $0xc8] sm:$0xff]
    %v1396 = vld [vmem:[#allocation6 + $0xd0] sm:$0xff]
    %v1397 = vld [vmem:[#allocation6 + $0xd8] sm:$0xff]
    %v1398 = vld [vmem:[#allocation6 + $0xe0] sm:$0xff]
    %v1399 = vld [vmem:[#allocation6 + $0xe8] sm:$0xff]
    %v1400 = vld [vmem:[#allocation6 + $0xf0] sm:$0xff]
    %v1401 = vld [vmem:[#allocation6 + $0xf8] sm:$0xff]
    %v1402 = vld [vmem:[#allocation6 + $0x100] sm:$0xff]
    %v1403 = vld [vmem:[#allocation6 + $0x108] sm:$0xff]
    %v1404 = vld [vmem:[#allocation6 + $0x110] sm:$0xff]
    %v1405 = vld [vmem:[#allocation6 + $0x118] sm:$0xff]
    %v1406 = vld [vmem:[#allocation6 + $0x120] sm:$0xff]
    %v1407 = vld [vmem:[#allocation6 + $0x128] sm:$0xff]
    %v1408 = vld [vmem:[#allocation6 + $0x130] sm:$0xff]
    %v1409 = vld [vmem:[#allocation6 + $0x138] sm:$0xff]
    %v1410 = vld [vmem:[#allocation6 + $0x140] sm:$0xff]
    %v1411 = vld [vmem:[#allocation6 + $0x148] sm:$0xff]
    %v1412 = vld [vmem:[#allocation6 + $0x150] sm:$0xff]
    %v1413 = vld [vmem:[#allocation6 + $0x158] sm:$0xff]
    %v1414 = vld [vmem:[#allocation6 + $0x160] sm:$0xff]
    %v1415 = vld [vmem:[#allocation6 + $0x168] sm:$0xff]
    %v1416 = vld [vmem:[#allocation6 + $0x170] sm:$0xff]
    %v1417 = vld [vmem:[#allocation6 + $0x178] sm:$0xff]
    %v1418 = vld [vmem:[#allocation6 + $0x180] sm:$0xff]
    %v1419 = vld [vmem:[#allocation6 + $0x188] sm:$0xff]
    %v1420 = vld [vmem:[#allocation6 + $0x190] sm:$0xff]
    %v1421 = vld [vmem:[#allocation6 + $0x198] sm:$0xff]
    %v1422 = vld [vmem:[#allocation6 + $0x1a0] sm:$0xff]
    %v1423 = vld [vmem:[#allocation6 + $0x1a8] sm:$0xff]
    %v1424 = vld [vmem:[#allocation6 + $0x1b0] sm:$0xff]
    %v1425 = vld [vmem:[#allocation6 + $0x1b8] sm:$0xff]
    %v1426 = vld [vmem:[#allocation6 + $0x1c0] sm:$0xff]
    %v1427 = vld [vmem:[#allocation6 + $0x1c8] sm:$0xff]
    %v1428 = vld [vmem:[#allocation6 + $0x1d0] sm:$0xff]
    %v1429 = vld [vmem:[#allocation6 + $0x1d8] sm:$0xff]
    %v1430 = vld [vmem:[#allocation6 + $0x1e0] sm:$0xff]
    %v1431 = vld [vmem:[#allocation6 + $0x1e8] sm:$0xff]
    %v1432 = vld [vmem:[#allocation6 + $0x1f0] sm:$0xff]
    %v1433 = vld [vmem:[#allocation6 + $0x1f8] sm:$0xff]
    %1434 = vmatprep.subr.mxu0 %v1371
    %1435 = vmatpush1.msra.mxu0 %v1370
    %1436 = vmatprep.subr.mxu0 %v1375
    %1437 = vmatpush1.msra.mxu0 %v1374
    %1438 = vmatprep.subr.mxu0 %v1379
    %1439 = vmatpush1.msra.mxu0 %v1378
    %1440 = vmatprep.subr.mxu0 %v1383
    %1441 = vmatpush1.msra.mxu0 %v1382
    %1442 = vmatprep.subr.mxu0 %v1387
    %1443 = vmatpush1.msra.mxu0 %v1386
    %1444 = vmatprep.subr.mxu0 %v1391
    %1445 = vmatpush1.msra.mxu0 %v1390
    %1446 = vmatprep.subr.mxu0 %v1395
    %1447 = vmatpush1.msra.mxu0 %v1394
    %1448 = vmatprep.subr.mxu0 %v1399
    %1449 = vmatpush1.msra.mxu0 %v1398
    %1450 = vmatprep.subr.mxu0 %v1403
    %1451 = vmatpush1.msra.mxu0 %v1402
    %1452 = vmatprep.subr.mxu0 %v1407
    %1453 = vmatpush1.msra.mxu0 %v1406
    %1454 = vmatprep.subr.mxu0 %v1411
    %1455 = vmatpush1.msra.mxu0 %v1410
    %1456 = vmatprep.subr.mxu0 %v1415
    %1457 = vmatpush1.msra.mxu0 %v1414
    %1458 = vmatprep.subr.mxu0 %v1419
    %1459 = vmatpush1.msra.mxu0 %v1418
    %1460 = vmatprep.subr.mxu0 %v1423
    %1461 = vmatpush1.msra.mxu0 %v1422
    %1462 = vmatprep.subr.mxu0 %v1427
    %1463 = vmatpush1.msra.mxu0 %v1426
    %1464 = vmatprep.subr.mxu0 %v1431
    %1465 = vmatpush1.msra.mxu0 %v1430
    %1466 = vmatprep.subr.mxu0 0.0
    %1467 = vmatpush1.msra.mxu0 0.0
    %1468 = vmatprep.subr.mxu0 0.0
    %1469 = vmatpush1.msra.mxu0 0.0
    %1470 = vmatprep.subr.mxu0 0.0
    %1471 = vmatpush1.msra.mxu0 0.0
    %1472 = vmatprep.subr.mxu0 0.0
    %1473 = vmatpush1.msra.mxu0 0.0
    %1474 = vmatprep.subr.mxu0 0.0
    %1475 = vmatpush1.msra.mxu0 0.0
    %1476 = vmatprep.subr.mxu0 0.0
    %1477 = vmatpush1.msra.mxu0 0.0
    %1478 = vmatprep.subr.mxu0 0.0
    %1479 = vmatpush1.msra.mxu0 0.0
    %1480 = vmatprep.subr.mxu0 0.0
    %1481 = vmatpush1.msra.mxu0 0.0
    %1482 = vmatprep.subr.mxu0 0.0
    %1483 = vmatpush1.msra.mxu0 0.0
    %1484 = vmatprep.subr.mxu0 0.0
    %1485 = vmatpush1.msra.mxu0 0.0
    %1486 = vmatprep.subr.mxu0 0.0
    %1487 = vmatpush1.msra.mxu0 0.0
    %1488 = vmatprep.subr.mxu0 0.0
    %1489 = vmatpush1.msra.mxu0 0.0
    %1490 = vmatprep.subr.mxu0 0.0
    %1491 = vmatpush1.msra.mxu0 0.0
    %1492 = vmatprep.subr.mxu0 0.0
    %1493 = vmatpush1.msra.mxu0 0.0
    %1494 = vmatprep.subr.mxu0 0.0
    %1495 = vmatpush1.msra.mxu0 0.0
    %1496 = vmatprep.subr.mxu0 0.0
    %1497 = vmatpush1.msra.mxu0 0.0
    %1498 = vmatprep.mubr.f32.mxu0 0.0
    %1499 = vmatmul.mubr.f32.gmra.mrb[0].mxu0 %v1360
    %v1500 = vpop.f32.mrb[0].mxu0
    %v1501 = vadd.f32 0.0, %v1500
    %v1502 = vpop.f32.mrb[0].mxu0
    %v1503 = vadd.f32 0.0, %v1502
    %1504 = vdwg.mxu0
    %1505 = vmatprep.subr.mxu0 %v1373
    %1506 = vmatpush1.msra.mxu0 %v1372
    %1507 = vmatprep.subr.mxu0 %v1377
    %1508 = vmatpush1.msra.mxu0 %v1376
    %1509 = vmatprep.subr.mxu0 %v1381
    %1510 = vmatpush1.msra.mxu0 %v1380
    %1511 = vmatprep.subr.mxu0 %v1385
    %1512 = vmatpush1.msra.mxu0 %v1384
    %1513 = vmatprep.subr.mxu0 %v1389
    %1514 = vmatpush1.msra.mxu0 %v1388
    %1515 = vmatprep.subr.mxu0 %v1393
    %1516 = vmatpush1.msra.mxu0 %v1392
    %1517 = vmatprep.subr.mxu0 %v1397
    %1518 = vmatpush1.msra.mxu0 %v1396
    %1519 = vmatprep.subr.mxu0 %v1401
    %1520 = vmatpush1.msra.mxu0 %v1400
    %1521 = vmatprep.subr.mxu0 %v1405
    %1522 = vmatpush1.msra.mxu0 %v1404
    %1523 = vmatprep.subr.mxu0 %v1409
    %1524 = vmatpush1.msra.mxu0 %v1408
    %1525 = vmatprep.subr.mxu0 %v1413
    %1526 = vmatpush1.msra.mxu0 %v1412
    %1527 = vmatprep.subr.mxu0 %v1417
    %1528 = vmatpush1.msra.mxu0 %v1416
    %1529 = vmatprep.subr.mxu0 %v1421
    %1530 = vmatpush1.msra.mxu0 %v1420
    %1531 = vmatprep.subr.mxu0 %v1425
    %1532 = vmatpush1.msra.mxu0 %v1424
    %1533 = vmatprep.subr.mxu0 %v1429
    %1534 = vmatpush1.msra.mxu0 %v1428
    %1535 = vmatprep.subr.mxu0 %v1433
    %1536 = vmatpush1.msra.mxu0 %v1432
    %1537 = vmatprep.subr.mxu0 0.0
    %1538 = vmatpush1.msra.mxu0 0.0
    %1539 = vmatprep.subr.mxu0 0.0
    %1540 = vmatpush1.msra.mxu0 0.0
    %1541 = vmatprep.subr.mxu0 0.0
    %1542 = vmatpush1.msra.mxu0 0.0
    %1543 = vmatprep.subr.mxu0 0.0
    %1544 = vmatpush1.msra.mxu0 0.0
    %1545 = vmatprep.subr.mxu0 0.0
    %1546 = vmatpush1.msra.mxu0 0.0
    %1547 = vmatprep.subr.mxu0 0.0
    %1548 = vmatpush1.msra.mxu0 0.0
    %1549 = vmatprep.subr.mxu0 0.0
    %1550 = vmatpush1.msra.mxu0 0.0
    %1551 = vmatprep.subr.mxu0 0.0
    %1552 = vmatpush1.msra.mxu0 0.0
    %1553 = vmatprep.subr.mxu0 0.0
    %1554 = vmatpush1.msra.mxu0 0.0
    %1555 = vmatprep.subr.mxu0 0.0
    %1556 = vmatpush1.msra.mxu0 0.0
    %1557 = vmatprep.subr.mxu0 0.0
    %1558 = vmatpush1.msra.mxu0 0.0
    %1559 = vmatprep.subr.mxu0 0.0
    %1560 = vmatpush1.msra.mxu0 0.0
    %1561 = vmatprep.subr.mxu0 0.0
    %1562 = vmatpush1.msra.mxu0 0.0
    %1563 = vmatprep.subr.mxu0 0.0
    %1564 = vmatpush1.msra.mxu0 0.0
    %1565 = vmatprep.subr.mxu0 0.0
    %1566 = vmatpush1.msra.mxu0 0.0
    %1567 = vmatprep.subr.mxu0 0.0
    %1568 = vmatpush1.msra.mxu0 0.0
    %1569 = vmatprep.mubr.f32.mxu0 0.0
    %1570 = vmatmul.mubr.f32.gmra.mrb[0].mxu0 %v1360
    %v1571 = vpop.f32.mrb[0].mxu0
    %v1572 = vadd.f32 0.0, %v1571
    %v1573 = vpop.f32.mrb[0].mxu0
    %v1574 = vadd.f32 0.0, %v1573
    %1575 = vdwg.mxu0
    %v1576 = vadd.f32 %v1366, %v1501
    %v1577 = vadd.f32 %v1367, %v1503
    %v1578 = vadd.f32 %v1368, %v1572
    %v1579 = vadd.f32 %v1369, %v1574
    %v1580 = vxor.u32 %v1576, 2147483648
    %v1581 = vmul.f32 %v1580, 1.442695
    %v1582 = vpow.pop %v1581
    %v1583 = vadd.f32 %v1582, 1.0
    %v1584 = vrcp.pop %v1583
    %v1585 = vmul.f32 1.0, %v1584
    %v1586 = vxor.u32 %v1577, 2147483648
    %v1587 = vmul.f32 %v1586, 1.442695
    %v1588 = vpow.pop %v1587
    %v1589 = vadd.f32 %v1588, 1.0
    %v1590 = vrcp.pop %v1589
    %v1591 = vmul.f32 1.0, %v1590
    %v1592 = vtanh.pop %v1578
    %v1593 = vxor.u32 %v1579, 2147483648
    %v1594 = vmul.f32 %v1593, 1.442695
    %v1595 = vpow.pop %v1594
    %v1596 = vadd.f32 %v1595, 1.0
    %v1597 = vrcp.pop %v1596
    %v1598 = vmul.f32 1.0, %v1597
    %v1599 = vmul.f32 %v1591, %v1358
    %v1600 = vmul.f32 %v1585, %v1592
    %v1601 = vadd.f32 %v1599, %v1600
    %v1602 = vtanh.pop %v1601
    %v1603 = vmul.f32 %v1598, %v1602
    %s1604 = scalar_lea.vmem [#allocation3], 32
    %1605 = vst [vmem:[%s1604] sm:$0xff] %v1603
    %s1606 = smul.u32 5, 4
    %s1607 = smul.addr %s1606, 8
    %s1608 = scalar_lea.vmem [#allocation2], %s1607
    %v1609 = vld [vmem:[%s1608] sm:$0xff]
    %v1610 = vld [vmem:[%s1608 + $0x8] sm:$0xff]
    %v1611 = vld [vmem:[%s1608 + $0x10] sm:$0xff]
    %v1612 = vld [vmem:[%s1608 + $0x18] sm:$0xff]
    %v1613 = vld [vmem:[#allocation6] sm:$0xff]
    %v1614 = vld [vmem:[#allocation6 + $0x8] sm:$0xff]
    %v1615 = vld [vmem:[#allocation6 + $0x10] sm:$0xff]
    %v1616 = vld [vmem:[#allocation6 + $0x18] sm:$0xff]
    %v1617 = vld [vmem:[#allocation6 + $0x20] sm:$0xff]
    %v1618 = vld [vmem:[#allocation6 + $0x28] sm:$0xff]
    %v1619 = vld [vmem:[#allocation6 + $0x30] sm:$0xff]
    %v1620 = vld [vmem:[#allocation6 + $0x38] sm:$0xff]
    %v1621 = vld [vmem:[#allocation6 + $0x40] sm:$0xff]
    %v1622 = vld [vmem:[#allocation6 + $0x48] sm:$0xff]
    %v1623 = vld [vmem:[#allocation6 + $0x50] sm:$0xff]
    %v1624 = vld [vmem:[#allocation6 + $0x58] sm:$0xff]
    %v1625 = vld [vmem:[#allocation6 + $0x60] sm:$0xff]
    %v1626 = vld [vmem:[#allocation6 + $0x68] sm:$0xff]
    %v1627 = vld [vmem:[#allocation6 + $0x70] sm:$0xff]
    %v1628 = vld [vmem:[#allocation6 + $0x78] sm:$0xff]
    %v1629 = vld [vmem:[#allocation6 + $0x80] sm:$0xff]
    %v1630 = vld [vmem:[#allocation6 + $0x88] sm:$0xff]
    %v1631 = vld [vmem:[#allocation6 + $0x90] sm:$0xff]
    %v1632 = vld [vmem:[#allocation6 + $0x98] sm:$0xff]
    %v1633 = vld [vmem:[#allocation6 + $0xa0] sm:$0xff]
    %v1634 = vld [vmem:[#allocation6 + $0xa8] sm:$0xff]
    %v1635 = vld [vmem:[#allocation6 + $0xb0] sm:$0xff]
    %v1636 = vld [vmem:[#allocation6 + $0xb8] sm:$0xff]
    %v1637 = vld [vmem:[#allocation6 + $0xc0] sm:$0xff]
    %v1638 = vld [vmem:[#allocation6 + $0xc8] sm:$0xff]
    %v1639 = vld [vmem:[#allocation6 + $0xd0] sm:$0xff]
    %v1640 = vld [vmem:[#allocation6 + $0xd8] sm:$0xff]
    %v1641 = vld [vmem:[#allocation6 + $0xe0] sm:$0xff]
    %v1642 = vld [vmem:[#allocation6 + $0xe8] sm:$0xff]
    %v1643 = vld [vmem:[#allocation6 + $0xf0] sm:$0xff]
    %v1644 = vld [vmem:[#allocation6 + $0xf8] sm:$0xff]
    %v1645 = vld [vmem:[#allocation6 + $0x100] sm:$0xff]
    %v1646 = vld [vmem:[#allocation6 + $0x108] sm:$0xff]
    %v1647 = vld [vmem:[#allocation6 + $0x110] sm:$0xff]
    %v1648 = vld [vmem:[#allocation6 + $0x118] sm:$0xff]
    %v1649 = vld [vmem:[#allocation6 + $0x120] sm:$0xff]
    %v1650 = vld [vmem:[#allocation6 + $0x128] sm:$0xff]
    %v1651 = vld [vmem:[#allocation6 + $0x130] sm:$0xff]
    %v1652 = vld [vmem:[#allocation6 + $0x138] sm:$0xff]
    %v1653 = vld [vmem:[#allocation6 + $0x140] sm:$0xff]
    %v1654 = vld [vmem:[#allocation6 + $0x148] sm:$0xff]
    %v1655 = vld [vmem:[#allocation6 + $0x150] sm:$0xff]
    %v1656 = vld [vmem:[#allocation6 + $0x158] sm:$0xff]
    %v1657 = vld [vmem:[#allocation6 + $0x160] sm:$0xff]
    %v1658 = vld [vmem:[#allocation6 + $0x168] sm:$0xff]
    %v1659 = vld [vmem:[#allocation6 + $0x170] sm:$0xff]
    %v1660 = vld [vmem:[#allocation6 + $0x178] sm:$0xff]
    %v1661 = vld [vmem:[#allocation6 + $0x180] sm:$0xff]
    %v1662 = vld [vmem:[#allocation6 + $0x188] sm:$0xff]
    %v1663 = vld [vmem:[#allocation6 + $0x190] sm:$0xff]
    %v1664 = vld [vmem:[#allocation6 + $0x198] sm:$0xff]
    %v1665 = vld [vmem:[#allocation6 + $0x1a0] sm:$0xff]
    %v1666 = vld [vmem:[#allocation6 + $0x1a8] sm:$0xff]
    %v1667 = vld [vmem:[#allocation6 + $0x1b0] sm:$0xff]
    %v1668 = vld [vmem:[#allocation6 + $0x1b8] sm:$0xff]
    %v1669 = vld [vmem:[#allocation6 + $0x1c0] sm:$0xff]
    %v1670 = vld [vmem:[#allocation6 + $0x1c8] sm:$0xff]
    %v1671 = vld [vmem:[#allocation6 + $0x1d0] sm:$0xff]
    %v1672 = vld [vmem:[#allocation6 + $0x1d8] sm:$0xff]
    %v1673 = vld [vmem:[#allocation6 + $0x1e0] sm:$0xff]
    %v1674 = vld [vmem:[#allocation6 + $0x1e8] sm:$0xff]
    %v1675 = vld [vmem:[#allocation6 + $0x1f0] sm:$0xff]
    %v1676 = vld [vmem:[#allocation6 + $0x1f8] sm:$0xff]
    %1677 = vmatprep.subr.mxu0 %v1614
    %1678 = vmatpush1.msra.mxu0 %v1613
    %1679 = vmatprep.subr.mxu0 %v1618
    %1680 = vmatpush1.msra.mxu0 %v1617
    %1681 = vmatprep.subr.mxu0 %v1622
    %1682 = vmatpush1.msra.mxu0 %v1621
    %1683 = vmatprep.subr.mxu0 %v1626
    %1684 = vmatpush1.msra.mxu0 %v1625
    %1685 = vmatprep.subr.mxu0 %v1630
    %1686 = vmatpush1.msra.mxu0 %v1629
    %1687 = vmatprep.subr.mxu0 %v1634
    %1688 = vmatpush1.msra.mxu0 %v1633
    %1689 = vmatprep.subr.mxu0 %v1638
    %1690 = vmatpush1.msra.mxu0 %v1637
    %1691 = vmatprep.subr.mxu0 %v1642
    %1692 = vmatpush1.msra.mxu0 %v1641
    %1693 = vmatprep.subr.mxu0 %v1646
    %1694 = vmatpush1.msra.mxu0 %v1645
    %1695 = vmatprep.subr.mxu0 %v1650
    %1696 = vmatpush1.msra.mxu0 %v1649
    %1697 = vmatprep.subr.mxu0 %v1654
    %1698 = vmatpush1.msra.mxu0 %v1653
    %1699 = vmatprep.subr.mxu0 %v1658
    %1700 = vmatpush1.msra.mxu0 %v1657
    %1701 = vmatprep.subr.mxu0 %v1662
    %1702 = vmatpush1.msra.mxu0 %v1661
    %1703 = vmatprep.subr.mxu0 %v1666
    %1704 = vmatpush1.msra.mxu0 %v1665
    %1705 = vmatprep.subr.mxu0 %v1670
    %1706 = vmatpush1.msra.mxu0 %v1669
    %1707 = vmatprep.subr.mxu0 %v1674
    %1708 = vmatpush1.msra.mxu0 %v1673
    %1709 = vmatprep.subr.mxu0 0.0
    %1710 = vmatpush1.msra.mxu0 0.0
    %1711 = vmatprep.subr.mxu0 0.0
    %1712 = vmatpush1.msra.mxu0 0.0
    %1713 = vmatprep.subr.mxu0 0.0
    %1714 = vmatpush1.msra.mxu0 0.0
    %1715 = vmatprep.subr.mxu0 0.0
    %1716 = vmatpush1.msra.mxu0 0.0
    %1717 = vmatprep.subr.mxu0 0.0
    %1718 = vmatpush1.msra.mxu0 0.0
    %1719 = vmatprep.subr.mxu0 0.0
    %1720 = vmatpush1.msra.mxu0 0.0
    %1721 = vmatprep.subr.mxu0 0.0
    %1722 = vmatpush1.msra.mxu0 0.0
    %1723 = vmatprep.subr.mxu0 0.0
    %1724 = vmatpush1.msra.mxu0 0.0
    %1725 = vmatprep.subr.mxu0 0.0
    %1726 = vmatpush1.msra.mxu0 0.0
    %1727 = vmatprep.subr.mxu0 0.0
    %1728 = vmatpush1.msra.mxu0 0.0
    %1729 = vmatprep.subr.mxu0 0.0
    %1730 = vmatpush1.msra.mxu0 0.0
    %1731 = vmatprep.subr.mxu0 0.0
    %1732 = vmatpush1.msra.mxu0 0.0
    %1733 = vmatprep.subr.mxu0 0.0
    %1734 = vmatpush1.msra.mxu0 0.0
    %1735 = vmatprep.subr.mxu0 0.0
    %1736 = vmatpush1.msra.mxu0 0.0
    %1737 = vmatprep.subr.mxu0 0.0
    %1738 = vmatpush1.msra.mxu0 0.0
    %1739 = vmatprep.subr.mxu0 0.0
    %1740 = vmatpush1.msra.mxu0 0.0
    %1741 = vmatprep.mubr.f32.mxu0 0.0
    %1742 = vmatmul.mubr.f32.gmra.mrb[0].mxu0 %v1603
    %v1743 = vpop.f32.mrb[0].mxu0
    %v1744 = vadd.f32 0.0, %v1743
    %v1745 = vpop.f32.mrb[0].mxu0
    %v1746 = vadd.f32 0.0, %v1745
    %1747 = vdwg.mxu0
    %1748 = vmatprep.subr.mxu0 %v1616
    %1749 = vmatpush1.msra.mxu0 %v1615
    %1750 = vmatprep.subr.mxu0 %v1620
    %1751 = vmatpush1.msra.mxu0 %v1619
    %1752 = vmatprep.subr.mxu0 %v1624
    %1753 = vmatpush1.msra.mxu0 %v1623
    %1754 = vmatprep.subr.mxu0 %v1628
    %1755 = vmatpush1.msra.mxu0 %v1627
    %1756 = vmatprep.subr.mxu0 %v1632
    %1757 = vmatpush1.msra.mxu0 %v1631
    %1758 = vmatprep.subr.mxu0 %v1636
    %1759 = vmatpush1.msra.mxu0 %v1635
    %1760 = vmatprep.subr.mxu0 %v1640
    %1761 = vmatpush1.msra.mxu0 %v1639
    %1762 = vmatprep.subr.mxu0 %v1644
    %1763 = vmatpush1.msra.mxu0 %v1643
    %1764 = vmatprep.subr.mxu0 %v1648
    %1765 = vmatpush1.msra.mxu0 %v1647
    %1766 = vmatprep.subr.mxu0 %v1652
    %1767 = vmatpush1.msra.mxu0 %v1651
    %1768 = vmatprep.subr.mxu0 %v1656
    %1769 = vmatpush1.msra.mxu0 %v1655
    %1770 = vmatprep.subr.mxu0 %v1660
    %1771 = vmatpush1.msra.mxu0 %v1659
    %1772 = vmatprep.subr.mxu0 %v1664
    %1773 = vmatpush1.msra.mxu0 %v1663
    %1774 = vmatprep.subr.mxu0 %v1668
    %1775 = vmatpush1.msra.mxu0 %v1667
    %1776 = vmatprep.subr.mxu0 %v1672
    %1777 = vmatpush1.msra.mxu0 %v1671
    %1778 = vmatprep.subr.mxu0 %v1676
    %1779 = vmatpush1.msra.mxu0 %v1675
    %1780 = vmatprep.subr.mxu0 0.0
    %1781 = vmatpush1.msra.mxu0 0.0
    %1782 = vmatprep.subr.mxu0 0.0
    %1783 = vmatpush1.msra.mxu0 0.0
    %1784 = vmatprep.subr.mxu0 0.0
    %1785 = vmatpush1.msra.mxu0 0.0
    %1786 = vmatprep.subr.mxu0 0.0
    %1787 = vmatpush1.msra.mxu0 0.0
    %1788 = vmatprep.subr.mxu0 0.0
    %1789 = vmatpush1.msra.mxu0 0.0
    %1790 = vmatprep.subr.mxu0 0.0
    %1791 = vmatpush1.msra.mxu0 0.0
    %1792 = vmatprep.subr.mxu0 0.0
    %1793 = vmatpush1.msra.mxu0 0.0
    %1794 = vmatprep.subr.mxu0 0.0
    %1795 = vmatpush1.msra.mxu0 0.0
    %1796 = vmatprep.subr.mxu0 0.0
    %1797 = vmatpush1.msra.mxu0 0.0
    %1798 = vmatprep.subr.mxu0 0.0
    %1799 = vmatpush1.msra.mxu0 0.0
    %1800 = vmatprep.subr.mxu0 0.0
    %1801 = vmatpush1.msra.mxu0 0.0
    %1802 = vmatprep.subr.mxu0 0.0
    %1803 = vmatpush1.msra.mxu0 0.0
    %1804 = vmatprep.subr.mxu0 0.0
    %1805 = vmatpush1.msra.mxu0 0.0
    %1806 = vmatprep.subr.mxu0 0.0
    %1807 = vmatpush1.msra.mxu0 0.0
    %1808 = vmatprep.subr.mxu0 0.0
    %1809 = vmatpush1.msra.mxu0 0.0
    %1810 = vmatprep.subr.mxu0 0.0
    %1811 = vmatpush1.msra.mxu0 0.0
    %1812 = vmatprep.mubr.f32.mxu0 0.0
    %1813 = vmatmul.mubr.f32.gmra.mrb[0].mxu0 %v1603
    %v1814 = vpop.f32.mrb[0].mxu0
    %v1815 = vadd.f32 0.0, %v1814
    %v1816 = vpop.f32.mrb[0].mxu0
    %v1817 = vadd.f32 0.0, %v1816
    %1818 = vdwg.mxu0
    %v1819 = vadd.f32 %v1609, %v1744
    %v1820 = vadd.f32 %v1610, %v1746
    %v1821 = vadd.f32 %v1611, %v1815
    %v1822 = vadd.f32 %v1612, %v1817
    %v1823 = vxor.u32 %v1819, 2147483648
    %v1824 = vmul.f32 %v1823, 1.442695
    %v1825 = vpow.pop %v1824
    %v1826 = vadd.f32 %v1825, 1.0
    %v1827 = vrcp.pop %v1826
    %v1828 = vmul.f32 1.0, %v1827
    %v1829 = vxor.u32 %v1820, 2147483648
    %v1830 = vmul.f32 %v1829, 1.442695
    %v1831 = vpow.pop %v1830
    %v1832 = vadd.f32 %v1831, 1.0
    %v1833 = vrcp.pop %v1832
    %v1834 = vmul.f32 1.0, %v1833
    %v1835 = vtanh.pop %v1821
    %v1836 = vxor.u32 %v1822, 2147483648
    %v1837 = vmul.f32 %v1836, 1.442695
    %v1838 = vpow.pop %v1837
    %v1839 = vadd.f32 %v1838, 1.0
    %v1840 = vrcp.pop %v1839
    %v1841 = vmul.f32 1.0, %v1840
    %v1842 = vmul.f32 %v1834, %v1601
    %v1843 = vmul.f32 %v1828, %v1835
    %v1844 = vadd.f32 %v1842, %v1843
    %v1845 = vtanh.pop %v1844
    %v1846 = vmul.f32 %v1841, %v1845
    %s1847 = scalar_lea.vmem [#allocation3], 40
    %1848 = vst [vmem:[%s1847] sm:$0xff] %v1846
    %s1849 = smul.u32 6, 4
    %s1850 = smul.addr %s1849, 8
    %s1851 = scalar_lea.vmem [#allocation2], %s1850
    %v1852 = vld [vmem:[%s1851] sm:$0xff]
    %v1853 = vld [vmem:[%s1851 + $0x8] sm:$0xff]
    %v1854 = vld [vmem:[%s1851 + $0x10] sm:$0xff]
    %v1855 = vld [vmem:[%s1851 + $0x18] sm:$0xff]
    %v1856 = vld [vmem:[#allocation6] sm:$0xff]
    %v1857 = vld [vmem:[#allocation6 + $0x8] sm:$0xff]
    %v1858 = vld [vmem:[#allocation6 + $0x10] sm:$0xff]
    %v1859 = vld [vmem:[#allocation6 + $0x18] sm:$0xff]
    %v1860 = vld [vmem:[#allocation6 + $0x20] sm:$0xff]
    %v1861 = vld [vmem:[#allocation6 + $0x28] sm:$0xff]
    %v1862 = vld [vmem:[#allocation6 + $0x30] sm:$0xff]
    %v1863 = vld [vmem:[#allocation6 + $0x38] sm:$0xff]
    %v1864 = vld [vmem:[#allocation6 + $0x40] sm:$0xff]
    %v1865 = vld [vmem:[#allocation6 + $0x48] sm:$0xff]
    %v1866 = vld [vmem:[#allocation6 + $0x50] sm:$0xff]
    %v1867 = vld [vmem:[#allocation6 + $0x58] sm:$0xff]
    %v1868 = vld [vmem:[#allocation6 + $0x60] sm:$0xff]
    %v1869 = vld [vmem:[#allocation6 + $0x68] sm:$0xff]
    %v1870 = vld [vmem:[#allocation6 + $0x70] sm:$0xff]
    %v1871 = vld [vmem:[#allocation6 + $0x78] sm:$0xff]
    %v1872 = vld [vmem:[#allocation6 + $0x80] sm:$0xff]
    %v1873 = vld [vmem:[#allocation6 + $0x88] sm:$0xff]
    %v1874 = vld [vmem:[#allocation6 + $0x90] sm:$0xff]
    %v1875 = vld [vmem:[#allocation6 + $0x98] sm:$0xff]
    %v1876 = vld [vmem:[#allocation6 + $0xa0] sm:$0xff]
    %v1877 = vld [vmem:[#allocation6 + $0xa8] sm:$0xff]
    %v1878 = vld [vmem:[#allocation6 + $0xb0] sm:$0xff]
    %v1879 = vld [vmem:[#allocation6 + $0xb8] sm:$0xff]
    %v1880 = vld [vmem:[#allocation6 + $0xc0] sm:$0xff]
    %v1881 = vld [vmem:[#allocation6 + $0xc8] sm:$0xff]
    %v1882 = vld [vmem:[#allocation6 + $0xd0] sm:$0xff]
    %v1883 = vld [vmem:[#allocation6 + $0xd8] sm:$0xff]
    %v1884 = vld [vmem:[#allocation6 + $0xe0] sm:$0xff]
    %v1885 = vld [vmem:[#allocation6 + $0xe8] sm:$0xff]
    %v1886 = vld [vmem:[#allocation6 + $0xf0] sm:$0xff]
    %v1887 = vld [vmem:[#allocation6 + $0xf8] sm:$0xff]
    %v1888 = vld [vmem:[#allocation6 + $0x100] sm:$0xff]
    %v1889 = vld [vmem:[#allocation6 + $0x108] sm:$0xff]
    %v1890 = vld [vmem:[#allocation6 + $0x110] sm:$0xff]
    %v1891 = vld [vmem:[#allocation6 + $0x118] sm:$0xff]
    %v1892 = vld [vmem:[#allocation6 + $0x120] sm:$0xff]
    %v1893 = vld [vmem:[#allocation6 + $0x128] sm:$0xff]
    %v1894 = vld [vmem:[#allocation6 + $0x130] sm:$0xff]
    %v1895 = vld [vmem:[#allocation6 + $0x138] sm:$0xff]
    %v1896 = vld [vmem:[#allocation6 + $0x140] sm:$0xff]
    %v1897 = vld [vmem:[#allocation6 + $0x148] sm:$0xff]
    %v1898 = vld [vmem:[#allocation6 + $0x150] sm:$0xff]
    %v1899 = vld [vmem:[#allocation6 + $0x158] sm:$0xff]
    %v1900 = vld [vmem:[#allocation6 + $0x160] sm:$0xff]
    %v1901 = vld [vmem:[#allocation6 + $0x168] sm:$0xff]
    %v1902 = vld [vmem:[#allocation6 + $0x170] sm:$0xff]
    %v1903 = vld [vmem:[#allocation6 + $0x178] sm:$0xff]
    %v1904 = vld [vmem:[#allocation6 + $0x180] sm:$0xff]
    %v1905 = vld [vmem:[#allocation6 + $0x188] sm:$0xff]
    %v1906 = vld [vmem:[#allocation6 + $0x190] sm:$0xff]
    %v1907 = vld [vmem:[#allocation6 + $0x198] sm:$0xff]
    %v1908 = vld [vmem:[#allocation6 + $0x1a0] sm:$0xff]
    %v1909 = vld [vmem:[#allocation6 + $0x1a8] sm:$0xff]
    %v1910 = vld [vmem:[#allocation6 + $0x1b0] sm:$0xff]
    %v1911 = vld [vmem:[#allocation6 + $0x1b8] sm:$0xff]
    %v1912 = vld [vmem:[#allocation6 + $0x1c0] sm:$0xff]
    %v1913 = vld [vmem:[#allocation6 + $0x1c8] sm:$0xff]
    %v1914 = vld [vmem:[#allocation6 + $0x1d0] sm:$0xff]
    %v1915 = vld [vmem:[#allocation6 + $0x1d8] sm:$0xff]
    %v1916 = vld [vmem:[#allocation6 + $0x1e0] sm:$0xff]
    %v1917 = vld [vmem:[#allocation6 + $0x1e8] sm:$0xff]
    %v1918 = vld [vmem:[#allocation6 + $0x1f0] sm:$0xff]
    %v1919 = vld [vmem:[#allocation6 + $0x1f8] sm:$0xff]
    %1920 = vmatprep.subr.mxu0 %v1857
    %1921 = vmatpush1.msra.mxu0 %v1856
    %1922 = vmatprep.subr.mxu0 %v1861
    %1923 = vmatpush1.msra.mxu0 %v1860
    %1924 = vmatprep.subr.mxu0 %v1865
    %1925 = vmatpush1.msra.mxu0 %v1864
    %1926 = vmatprep.subr.mxu0 %v1869
    %1927 = vmatpush1.msra.mxu0 %v1868
    %1928 = vmatprep.subr.mxu0 %v1873
    %1929 = vmatpush1.msra.mxu0 %v1872
    %1930 = vmatprep.subr.mxu0 %v1877
    %1931 = vmatpush1.msra.mxu0 %v1876
    %1932 = vmatprep.subr.mxu0 %v1881
    %1933 = vmatpush1.msra.mxu0 %v1880
    %1934 = vmatprep.subr.mxu0 %v1885
    %1935 = vmatpush1.msra.mxu0 %v1884
    %1936 = vmatprep.subr.mxu0 %v1889
    %1937 = vmatpush1.msra.mxu0 %v1888
    %1938 = vmatprep.subr.mxu0 %v1893
    %1939 = vmatpush1.msra.mxu0 %v1892
    %1940 = vmatprep.subr.mxu0 %v1897
    %1941 = vmatpush1.msra.mxu0 %v1896
    %1942 = vmatprep.subr.mxu0 %v1901
    %1943 = vmatpush1.msra.mxu0 %v1900
    %1944 = vmatprep.subr.mxu0 %v1905
    %1945 = vmatpush1.msra.mxu0 %v1904
    %1946 = vmatprep.subr.mxu0 %v1909
    %1947 = vmatpush1.msra.mxu0 %v1908
    %1948 = vmatprep.subr.mxu0 %v1913
    %1949 = vmatpush1.msra.mxu0 %v1912
    %1950 = vmatprep.subr.mxu0 %v1917
    %1951 = vmatpush1.msra.mxu0 %v1916
    %1952 = vmatprep.subr.mxu0 0.0
    %1953 = vmatpush1.msra.mxu0 0.0
    %1954 = vmatprep.subr.mxu0 0.0
    %1955 = vmatpush1.msra.mxu0 0.0
    %1956 = vmatprep.subr.mxu0 0.0
    %1957 = vmatpush1.msra.mxu0 0.0
    %1958 = vmatprep.subr.mxu0 0.0
    %1959 = vmatpush1.msra.mxu0 0.0
    %1960 = vmatprep.subr.mxu0 0.0
    %1961 = vmatpush1.msra.mxu0 0.0
    %1962 = vmatprep.subr.mxu0 0.0
    %1963 = vmatpush1.msra.mxu0 0.0
    %1964 = vmatprep.subr.mxu0 0.0
    %1965 = vmatpush1.msra.mxu0 0.0
    %1966 = vmatprep.subr.mxu0 0.0
    %1967 = vmatpush1.msra.mxu0 0.0
    %1968 = vmatprep.subr.mxu0 0.0
    %1969 = vmatpush1.msra.mxu0 0.0
    %1970 = vmatprep.subr.mxu0 0.0
    %1971 = vmatpush1.msra.mxu0 0.0
    %1972 = vmatprep.subr.mxu0 0.0
    %1973 = vmatpush1.msra.mxu0 0.0
    %1974 = vmatprep.subr.mxu0 0.0
    %1975 = vmatpush1.msra.mxu0 0.0
    %1976 = vmatprep.subr.mxu0 0.0
    %1977 = vmatpush1.msra.mxu0 0.0
    %1978 = vmatprep.subr.mxu0 0.0
    %1979 = vmatpush1.msra.mxu0 0.0
    %1980 = vmatprep.subr.mxu0 0.0
    %1981 = vmatpush1.msra.mxu0 0.0
    %1982 = vmatprep.subr.mxu0 0.0
    %1983 = vmatpush1.msra.mxu0 0.0
    %1984 = vmatprep.mubr.f32.mxu0 0.0
    %1985 = vmatmul.mubr.f32.gmra.mrb[0].mxu0 %v1846
    %v1986 = vpop.f32.mrb[0].mxu0
    %v1987 = vadd.f32 0.0, %v1986
    %v1988 = vpop.f32.mrb[0].mxu0
    %v1989 = vadd.f32 0.0, %v1988
    %1990 = vdwg.mxu0
    %1991 = vmatprep.subr.mxu0 %v1859
    %1992 = vmatpush1.msra.mxu0 %v1858
    %1993 = vmatprep.subr.mxu0 %v1863
    %1994 = vmatpush1.msra.mxu0 %v1862
    %1995 = vmatprep.subr.mxu0 %v1867
    %1996 = vmatpush1.msra.mxu0 %v1866
    %1997 = vmatprep.subr.mxu0 %v1871
    %1998 = vmatpush1.msra.mxu0 %v1870
    %1999 = vmatprep.subr.mxu0 %v1875
    %2000 = vmatpush1.msra.mxu0 %v1874
    %2001 = vmatprep.subr.mxu0 %v1879
    %2002 = vmatpush1.msra.mxu0 %v1878
    %2003 = vmatprep.subr.mxu0 %v1883
    %2004 = vmatpush1.msra.mxu0 %v1882
    %2005 = vmatprep.subr.mxu0 %v1887
    %2006 = vmatpush1.msra.mxu0 %v1886
    %2007 = vmatprep.subr.mxu0 %v1891
    %2008 = vmatpush1.msra.mxu0 %v1890
    %2009 = vmatprep.subr.mxu0 %v1895
    %2010 = vmatpush1.msra.mxu0 %v1894
    %2011 = vmatprep.subr.mxu0 %v1899
    %2012 = vmatpush1.msra.mxu0 %v1898
    %2013 = vmatprep.subr.mxu0 %v1903
    %2014 = vmatpush1.msra.mxu0 %v1902
    %2015 = vmatprep.subr.mxu0 %v1907
    %2016 = vmatpush1.msra.mxu0 %v1906
    %2017 = vmatprep.subr.mxu0 %v1911
    %2018 = vmatpush1.msra.mxu0 %v1910
    %2019 = vmatprep.subr.mxu0 %v1915
    %2020 = vmatpush1.msra.mxu0 %v1914
    %2021 = vmatprep.subr.mxu0 %v1919
    %2022 = vmatpush1.msra.mxu0 %v1918
    %2023 = vmatprep.subr.mxu0 0.0
    %2024 = vmatpush1.msra.mxu0 0.0
    %2025 = vmatprep.subr.mxu0 0.0
    %2026 = vmatpush1.msra.mxu0 0.0
    %2027 = vmatprep.subr.mxu0 0.0
    %2028 = vmatpush1.msra.mxu0 0.0
    %2029 = vmatprep.subr.mxu0 0.0
    %2030 = vmatpush1.msra.mxu0 0.0
    %2031 = vmatprep.subr.mxu0 0.0
    %2032 = vmatpush1.msra.mxu0 0.0
    %2033 = vmatprep.subr.mxu0 0.0
    %2034 = vmatpush1.msra.mxu0 0.0
    %2035 = vmatprep.subr.mxu0 0.0
    %2036 = vmatpush1.msra.mxu0 0.0
    %2037 = vmatprep.subr.mxu0 0.0
    %2038 = vmatpush1.msra.mxu0 0.0
    %2039 = vmatprep.subr.mxu0 0.0
    %2040 = vmatpush1.msra.mxu0 0.0
    %2041 = vmatprep.subr.mxu0 0.0
    %2042 = vmatpush1.msra.mxu0 0.0
    %2043 = vmatprep.subr.mxu0 0.0
    %2044 = vmatpush1.msra.mxu0 0.0
    %2045 = vmatprep.subr.mxu0 0.0
    %2046 = vmatpush1.msra.mxu0 0.0
    %2047 = vmatprep.subr.mxu0 0.0
    %2048 = vmatpush1.msra.mxu0 0.0
    %2049 = vmatprep.subr.mxu0 0.0
    %2050 = vmatpush1.msra.mxu0 0.0
    %2051 = vmatprep.subr.mxu0 0.0
    %2052 = vmatpush1.msra.mxu0 0.0
    %2053 = vmatprep.subr.mxu0 0.0
    %2054 = vmatpush1.msra.mxu0 0.0
    %2055 = vmatprep.mubr.f32.mxu0 0.0
    %2056 = vmatmul.mubr.f32.gmra.mrb[0].mxu0 %v1846
    %v2057 = vpop.f32.mrb[0].mxu0
    %v2058 = vadd.f32 0.0, %v2057
    %v2059 = vpop.f32.mrb[0].mxu0
    %v2060 = vadd.f32 0.0, %v2059
    %2061 = vdwg.mxu0
    %v2062 = vadd.f32 %v1852, %v1987
    %v2063 = vadd.f32 %v1853, %v1989
    %v2064 = vadd.f32 %v1854, %v2058
    %v2065 = vadd.f32 %v1855, %v2060
    %v2066 = vxor.u32 %v2062, 2147483648
    %v2067 = vmul.f32 %v2066, 1.442695
    %v2068 = vpow.pop %v2067
    %v2069 = vadd.f32 %v2068, 1.0
    %v2070 = vrcp.pop %v2069
    %v2071 = vmul.f32 1.0, %v2070
    %v2072 = vxor.u32 %v2063, 2147483648
    %v2073 = vmul.f32 %v2072, 1.442695
    %v2074 = vpow.pop %v2073
    %v2075 = vadd.f32 %v2074, 1.0
    %v2076 = vrcp.pop %v2075
    %v2077 = vmul.f32 1.0, %v2076
    %v2078 = vtanh.pop %v2064
    %v2079 = vxor.u32 %v2065, 2147483648
    %v2080 = vmul.f32 %v2079, 1.442695
    %v2081 = vpow.pop %v2080
    %v2082 = vadd.f32 %v2081, 1.0
    %v2083 = vrcp.pop %v2082
    %v2084 = vmul.f32 1.0, %v2083
    %v2085 = vmul.f32 %v2077, %v1844
    %v2086 = vmul.f32 %v2071, %v2078
    %v2087 = vadd.f32 %v2085, %v2086
    %v2088 = vtanh.pop %v2087
    %v2089 = vmul.f32 %v2084, %v2088
    %s2090 = scalar_lea.vmem [#allocation3], 48
    %2091 = vst [vmem:[%s2090] sm:$0xff] %v2089
    %s2092 = smul.u32 7, 4
    %s2093 = smul.addr %s2092, 8
    %s2094 = scalar_lea.vmem [#allocation2], %s2093
    %v2095 = vld [vmem:[%s2094] sm:$0xff]
    %v2096 = vld [vmem:[%s2094 + $0x8] sm:$0xff]
    %v2097 = vld [vmem:[%s2094 + $0x10] sm:$0xff]
    %v2098 = vld [vmem:[%s2094 + $0x18] sm:$0xff]
    %v2099 = vld [vmem:[#allocation6] sm:$0xff]
    %v2100 = vld [vmem:[#allocation6 + $0x8] sm:$0xff]
    %v2101 = vld [vmem:[#allocation6 + $0x10] sm:$0xff]
    %v2102 = vld [vmem:[#allocation6 + $0x18] sm:$0xff]
    %v2103 = vld [vmem:[#allocation6 + $0x20] sm:$0xff]
    %v2104 = vld [vmem:[#allocation6 + $0x28] sm:$0xff]
    %v2105 = vld [vmem:[#allocation6 + $0x30] sm:$0xff]
    %v2106 = vld [vmem:[#allocation6 + $0x38] sm:$0xff]
    %v2107 = vld [vmem:[#allocation6 + $0x40] sm:$0xff]
    %v2108 = vld [vmem:[#allocation6 + $0x48] sm:$0xff]
    %v2109 = vld [vmem:[#allocation6 + $0x50] sm:$0xff]
    %v2110 = vld [vmem:[#allocation6 + $0x58] sm:$0xff]
    %v2111 = vld [vmem:[#allocation6 + $0x60] sm:$0xff]
    %v2112 = vld [vmem:[#allocation6 + $0x68] sm:$0xff]
    %v2113 = vld [vmem:[#allocation6 + $0x70] sm:$0xff]
    %v2114 = vld [vmem:[#allocation6 + $0x78] sm:$0xff]
    %v2115 = vld [vmem:[#allocation6 + $0x80] sm:$0xff]
    %v2116 = vld [vmem:[#allocation6 + $0x88] sm:$0xff]
    %v2117 = vld [vmem:[#allocation6 + $0x90] sm:$0xff]
    %v2118 = vld [vmem:[#allocation6 + $0x98] sm:$0xff]
    %v2119 = vld [vmem:[#allocation6 + $0xa0] sm:$0xff]
    %v2120 = vld [vmem:[#allocation6 + $0xa8] sm:$0xff]
    %v2121 = vld [vmem:[#allocation6 + $0xb0] sm:$0xff]
    %v2122 = vld [vmem:[#allocation6 + $0xb8] sm:$0xff]
    %v2123 = vld [vmem:[#allocation6 + $0xc0] sm:$0xff]
    %v2124 = vld [vmem:[#allocation6 + $0xc8] sm:$0xff]
    %v2125 = vld [vmem:[#allocation6 + $0xd0] sm:$0xff]
    %v2126 = vld [vmem:[#allocation6 + $0xd8] sm:$0xff]
    %v2127 = vld [vmem:[#allocation6 + $0xe0] sm:$0xff]
    %v2128 = vld [vmem:[#allocation6 + $0xe8] sm:$0xff]
    %v2129 = vld [vmem:[#allocation6 + $0xf0] sm:$0xff]
    %v2130 = vld [vmem:[#allocation6 + $0xf8] sm:$0xff]
    %v2131 = vld [vmem:[#allocation6 + $0x100] sm:$0xff]
    %v2132 = vld [vmem:[#allocation6 + $0x108] sm:$0xff]
    %v2133 = vld [vmem:[#allocation6 + $0x110] sm:$0xff]
    %v2134 = vld [vmem:[#allocation6 + $0x118] sm:$0xff]
    %v2135 = vld [vmem:[#allocation6 + $0x120] sm:$0xff]
    %v2136 = vld [vmem:[#allocation6 + $0x128] sm:$0xff]
    %v2137 = vld [vmem:[#allocation6 + $0x130] sm:$0xff]
    %v2138 = vld [vmem:[#allocation6 + $0x138] sm:$0xff]
    %v2139 = vld [vmem:[#allocation6 + $0x140] sm:$0xff]
    %v2140 = vld [vmem:[#allocation6 + $0x148] sm:$0xff]
    %v2141 = vld [vmem:[#allocation6 + $0x150] sm:$0xff]
    %v2142 = vld [vmem:[#allocation6 + $0x158] sm:$0xff]
    %v2143 = vld [vmem:[#allocation6 + $0x160] sm:$0xff]
    %v2144 = vld [vmem:[#allocation6 + $0x168] sm:$0xff]
    %v2145 = vld [vmem:[#allocation6 + $0x170] sm:$0xff]
    %v2146 = vld [vmem:[#allocation6 + $0x178] sm:$0xff]
    %v2147 = vld [vmem:[#allocation6 + $0x180] sm:$0xff]
    %v2148 = vld [vmem:[#allocation6 + $0x188] sm:$0xff]
    %v2149 = vld [vmem:[#allocation6 + $0x190] sm:$0xff]
    %v2150 = vld [vmem:[#allocation6 + $0x198] sm:$0xff]
    %v2151 = vld [vmem:[#allocation6 + $0x1a0] sm:$0xff]
    %v2152 = vld [vmem:[#allocation6 + $0x1a8] sm:$0xff]
    %v2153 = vld [vmem:[#allocation6 + $0x1b0] sm:$0xff]
    %v2154 = vld [vmem:[#allocation6 + $0x1b8] sm:$0xff]
    %v2155 = vld [vmem:[#allocation6 + $0x1c0] sm:$0xff]
    %v2156 = vld [vmem:[#allocation6 + $0x1c8] sm:$0xff]
    %v2157 = vld [vmem:[#allocation6 + $0x1d0] sm:$0xff]
    %v2158 = vld [vmem:[#allocation6 + $0x1d8] sm:$0xff]
    %v2159 = vld [vmem:[#allocation6 + $0x1e0] sm:$0xff]
    %v2160 = vld [vmem:[#allocation6 + $0x1e8] sm:$0xff]
    %v2161 = vld [vmem:[#allocation6 + $0x1f0] sm:$0xff]
    %v2162 = vld [vmem:[#allocation6 + $0x1f8] sm:$0xff]
    %2163 = vmatprep.subr.mxu0 %v2100
    %2164 = vmatpush1.msra.mxu0 %v2099
    %2165 = vmatprep.subr.mxu0 %v2104
    %2166 = vmatpush1.msra.mxu0 %v2103
    %2167 = vmatprep.subr.mxu0 %v2108
    %2168 = vmatpush1.msra.mxu0 %v2107
    %2169 = vmatprep.subr.mxu0 %v2112
    %2170 = vmatpush1.msra.mxu0 %v2111
    %2171 = vmatprep.subr.mxu0 %v2116
    %2172 = vmatpush1.msra.mxu0 %v2115
    %2173 = vmatprep.subr.mxu0 %v2120
    %2174 = vmatpush1.msra.mxu0 %v2119
    %2175 = vmatprep.subr.mxu0 %v2124
    %2176 = vmatpush1.msra.mxu0 %v2123
    %2177 = vmatprep.subr.mxu0 %v2128
    %2178 = vmatpush1.msra.mxu0 %v2127
    %2179 = vmatprep.subr.mxu0 %v2132
    %2180 = vmatpush1.msra.mxu0 %v2131
    %2181 = vmatprep.subr.mxu0 %v2136
    %2182 = vmatpush1.msra.mxu0 %v2135
    %2183 = vmatprep.subr.mxu0 %v2140
    %2184 = vmatpush1.msra.mxu0 %v2139
    %2185 = vmatprep.subr.mxu0 %v2144
    %2186 = vmatpush1.msra.mxu0 %v2143
    %2187 = vmatprep.subr.mxu0 %v2148
    %2188 = vmatpush1.msra.mxu0 %v2147
    %2189 = vmatprep.subr.mxu0 %v2152
    %2190 = vmatpush1.msra.mxu0 %v2151
    %2191 = vmatprep.subr.mxu0 %v2156
    %2192 = vmatpush1.msra.mxu0 %v2155
    %2193 = vmatprep.subr.mxu0 %v2160
    %2194 = vmatpush1.msra.mxu0 %v2159
    %2195 = vmatprep.subr.mxu0 0.0
    %2196 = vmatpush1.msra.mxu0 0.0
    %2197 = vmatprep.subr.mxu0 0.0
    %2198 = vmatpush1.msra.mxu0 0.0
    %2199 = vmatprep.subr.mxu0 0.0
    %2200 = vmatpush1.msra.mxu0 0.0
    %2201 = vmatprep.subr.mxu0 0.0
    %2202 = vmatpush1.msra.mxu0 0.0
    %2203 = vmatprep.subr.mxu0 0.0
    %2204 = vmatpush1.msra.mxu0 0.0
    %2205 = vmatprep.subr.mxu0 0.0
    %2206 = vmatpush1.msra.mxu0 0.0
    %2207 = vmatprep.subr.mxu0 0.0
    %2208 = vmatpush1.msra.mxu0 0.0
    %2209 = vmatprep.subr.mxu0 0.0
    %2210 = vmatpush1.msra.mxu0 0.0
    %2211 = vmatprep.subr.mxu0 0.0
    %2212 = vmatpush1.msra.mxu0 0.0
    %2213 = vmatprep.subr.mxu0 0.0
    %2214 = vmatpush1.msra.mxu0 0.0
    %2215 = vmatprep.subr.mxu0 0.0
    %2216 = vmatpush1.msra.mxu0 0.0
    %2217 = vmatprep.subr.mxu0 0.0
    %2218 = vmatpush1.msra.mxu0 0.0
    %2219 = vmatprep.subr.mxu0 0.0
    %2220 = vmatpush1.msra.mxu0 0.0
    %2221 = vmatprep.subr.mxu0 0.0
    %2222 = vmatpush1.msra.mxu0 0.0
    %2223 = vmatprep.subr.mxu0 0.0
    %2224 = vmatpush1.msra.mxu0 0.0
    %2225 = vmatprep.subr.mxu0 0.0
    %2226 = vmatpush1.msra.mxu0 0.0
    %2227 = vmatprep.mubr.f32.mxu0 0.0
    %2228 = vmatmul.mubr.f32.gmra.mrb[0].mxu0 %v2089
    %v2229 = vpop.f32.mrb[0].mxu0
    %v2230 = vadd.f32 0.0, %v2229
    %v2231 = vpop.f32.mrb[0].mxu0
    %v2232 = vadd.f32 0.0, %v2231
    %2233 = vdwg.mxu0
    %2234 = vmatprep.subr.mxu0 %v2102
    %2235 = vmatpush1.msra.mxu0 %v2101
    %2236 = vmatprep.subr.mxu0 %v2106
    %2237 = vmatpush1.msra.mxu0 %v2105
    %2238 = vmatprep.subr.mxu0 %v2110
    %2239 = vmatpush1.msra.mxu0 %v2109
    %2240 = vmatprep.subr.mxu0 %v2114
    %2241 = vmatpush1.msra.mxu0 %v2113
    %2242 = vmatprep.subr.mxu0 %v2118
    %2243 = vmatpush1.msra.mxu0 %v2117
    %2244 = vmatprep.subr.mxu0 %v2122
    %2245 = vmatpush1.msra.mxu0 %v2121
    %2246 = vmatprep.subr.mxu0 %v2126
    %2247 = vmatpush1.msra.mxu0 %v2125
    %2248 = vmatprep.subr.mxu0 %v2130
    %2249 = vmatpush1.msra.mxu0 %v2129
    %2250 = vmatprep.subr.mxu0 %v2134
    %2251 = vmatpush1.msra.mxu0 %v2133
    %2252 = vmatprep.subr.mxu0 %v2138
    %2253 = vmatpush1.msra.mxu0 %v2137
    %2254 = vmatprep.subr.mxu0 %v2142
    %2255 = vmatpush1.msra.mxu0 %v2141
    %2256 = vmatprep.subr.mxu0 %v2146
    %2257 = vmatpush1.msra.mxu0 %v2145
    %2258 = vmatprep.subr.mxu0 %v2150
    %2259 = vmatpush1.msra.mxu0 %v2149
    %2260 = vmatprep.subr.mxu0 %v2154
    %2261 = vmatpush1.msra.mxu0 %v2153
    %2262 = vmatprep.subr.mxu0 %v2158
    %2263 = vmatpush1.msra.mxu0 %v2157
    %2264 = vmatprep.subr.mxu0 %v2162
    %2265 = vmatpush1.msra.mxu0 %v2161
    %2266 = vmatprep.subr.mxu0 0.0
    %2267 = vmatpush1.msra.mxu0 0.0
    %2268 = vmatprep.subr.mxu0 0.0
    %2269 = vmatpush1.msra.mxu0 0.0
    %2270 = vmatprep.subr.mxu0 0.0
    %2271 = vmatpush1.msra.mxu0 0.0
    %2272 = vmatprep.subr.mxu0 0.0
    %2273 = vmatpush1.msra.mxu0 0.0
    %2274 = vmatprep.subr.mxu0 0.0
    %2275 = vmatpush1.msra.mxu0 0.0
    %2276 = vmatprep.subr.mxu0 0.0
    %2277 = vmatpush1.msra.mxu0 0.0
    %2278 = vmatprep.subr.mxu0 0.0
    %2279 = vmatpush1.msra.mxu0 0.0
    %2280 = vmatprep.subr.mxu0 0.0
    %2281 = vmatpush1.msra.mxu0 0.0
    %2282 = vmatprep.subr.mxu0 0.0
    %2283 = vmatpush1.msra.mxu0 0.0
    %2284 = vmatprep.subr.mxu0 0.0
    %2285 = vmatpush1.msra.mxu0 0.0
    %2286 = vmatprep.subr.mxu0 0.0
    %2287 = vmatpush1.msra.mxu0 0.0
    %2288 = vmatprep.subr.mxu0 0.0
    %2289 = vmatpush1.msra.mxu0 0.0
    %2290 = vmatprep.subr.mxu0 0.0
    %2291 = vmatpush1.msra.mxu0 0.0
    %2292 = vmatprep.subr.mxu0 0.0
    %2293 = vmatpush1.msra.mxu0 0.0
    %2294 = vmatprep.subr.mxu0 0.0
    %2295 = vmatpush1.msra.mxu0 0.0
    %2296 = vmatprep.subr.mxu0 0.0
    %2297 = vmatpush1.msra.mxu0 0.0
    %2298 = vmatprep.mubr.f32.mxu0 0.0
    %2299 = vmatmul.mubr.f32.gmra.mrb[0].mxu0 %v2089
    %v2300 = vpop.f32.mrb[0].mxu0
    %v2301 = vadd.f32 0.0, %v2300
    %v2302 = vpop.f32.mrb[0].mxu0
    %v2303 = vadd.f32 0.0, %v2302
    %2304 = vdwg.mxu0
    %v2305 = vadd.f32 %v2095, %v2230
    %v2306 = vadd.f32 %v2096, %v2232
    %v2307 = vadd.f32 %v2097, %v2301
    %v2308 = vadd.f32 %v2098, %v2303
    %v2309 = vxor.u32 %v2305, 2147483648
    %v2310 = vmul.f32 %v2309, 1.442695
    %v2311 = vpow.pop %v2310
    %v2312 = vadd.f32 %v2311, 1.0
    %v2313 = vrcp.pop %v2312
    %v2314 = vmul.f32 1.0, %v2313
    %v2315 = vxor.u32 %v2306, 2147483648
    %v2316 = vmul.f32 %v2315, 1.442695
    %v2317 = vpow.pop %v2316
    %v2318 = vadd.f32 %v2317, 1.0
    %v2319 = vrcp.pop %v2318
    %v2320 = vmul.f32 1.0, %v2319
    %v2321 = vtanh.pop %v2307
    %v2322 = vxor.u32 %v2308, 2147483648
    %v2323 = vmul.f32 %v2322, 1.442695
    %v2324 = vpow.pop %v2323
    %v2325 = vadd.f32 %v2324, 1.0
    %v2326 = vrcp.pop %v2325
    %v2327 = vmul.f32 1.0, %v2326
    %v2328 = vmul.f32 %v2320, %v2087
    %v2329 = vmul.f32 %v2314, %v2321
    %v2330 = vadd.f32 %v2328, %v2329
    %v2331 = vtanh.pop %v2330
    %v2332 = vmul.f32 %v2327, %v2331
    %s2333 = scalar_lea.vmem [#allocation3], 56
    %2334 = vst [vmem:[%s2333] sm:$0xff] %v2332
    %v2335 = vld [vmem:[#allocation3] sm:$0xff]
    %v2336 = vld [vmem:[#allocation3 + $0x8] sm:$0xff]
    %v2337 = vld [vmem:[#allocation3 + $0x10] sm:$0xff]
    %v2338 = vld [vmem:[#allocation3 + $0x18] sm:$0xff]
    %v2339 = vld [vmem:[#allocation3 + $0x20] sm:$0xff]
    %v2340 = vld [vmem:[#allocation3 + $0x28] sm:$0xff]
    %v2341 = vld [vmem:[#allocation3 + $0x30] sm:$0xff]
    %v2342 = vld [vmem:[#allocation3 + $0x38] sm:$0xff]
    %v2343 = vld [vmem:[#allocation8] sm:$0xff]
    %v2344 = vld [vmem:[#allocation8 + $0x8] sm:$0xff]
    %v2345 = vld [vmem:[#allocation8 + $0x10] sm:$0xff]
    %v2346 = vld [vmem:[#allocation8 + $0x18] sm:$0xff]
    %v2347 = vld [vmem:[#allocation8 + $0x20] sm:$0xff]
    %v2348 = vld [vmem:[#allocation8 + $0x28] sm:$0xff]
    %v2349 = vld [vmem:[#allocation8 + $0x30] sm:$0xff]
    %v2350 = vld [vmem:[#allocation8 + $0x38] sm:$0xff]
    %v2351 = vld [vmem:[#allocation8 + $0x40] sm:$0xff]
    %v2352 = vld [vmem:[#allocation8 + $0x48] sm:$0xff]
    %v2353 = vld [vmem:[#allocation8 + $0x50] sm:$0xff]
    %v2354 = vld [vmem:[#allocation8 + $0x58] sm:$0xff]
    %v2355 = vld [vmem:[#allocation8 + $0x60] sm:$0xff]
    %v2356 = vld [vmem:[#allocation8 + $0x68] sm:$0xff]
    %v2357 = vld [vmem:[#allocation8 + $0x70] sm:$0xff]
    %v2358 = vld [vmem:[#allocation8 + $0x78] sm:$0xff]
    %v2359 = vld [vmem:[#allocation8 + $0x80] sm:$0xff]
    %v2360 = vld [vmem:[#allocation8 + $0x88] sm:$0xff]
    %v2361 = vld [vmem:[#allocation8 + $0x90] sm:$0xff]
    %v2362 = vld [vmem:[#allocation8 + $0x98] sm:$0xff]
    %v2363 = vld [vmem:[#allocation8 + $0xa0] sm:$0xff]
    %v2364 = vld [vmem:[#allocation8 + $0xa8] sm:$0xff]
    %v2365 = vld [vmem:[#allocation8 + $0xb0] sm:$0xff]
    %v2366 = vld [vmem:[#allocation8 + $0xb8] sm:$0xff]
    %v2367 = vld [vmem:[#allocation8 + $0xc0] sm:$0xff]
    %v2368 = vld [vmem:[#allocation8 + $0xc8] sm:$0xff]
    %v2369 = vld [vmem:[#allocation8 + $0xd0] sm:$0xff]
    %v2370 = vld [vmem:[#allocation8 + $0xd8] sm:$0xff]
    %v2371 = vld [vmem:[#allocation8 + $0xe0] sm:$0xff]
    %v2372 = vld [vmem:[#allocation8 + $0xe8] sm:$0xff]
    %v2373 = vld [vmem:[#allocation8 + $0xf0] sm:$0xff]
    %v2374 = vld [vmem:[#allocation8 + $0xf8] sm:$0xff]
    %v2375 = vld [vmem:[#allocation8 + $0x100] sm:$0xff]
    %v2376 = vld [vmem:[#allocation8 + $0x108] sm:$0xff]
    %v2377 = vld [vmem:[#allocation8 + $0x110] sm:$0xff]
    %v2378 = vld [vmem:[#allocation8 + $0x118] sm:$0xff]
    %v2379 = vld [vmem:[#allocation8 + $0x120] sm:$0xff]
    %v2380 = vld [vmem:[#allocation8 + $0x128] sm:$0xff]
    %v2381 = vld [vmem:[#allocation8 + $0x130] sm:$0xff]
    %v2382 = vld [vmem:[#allocation8 + $0x138] sm:$0xff]
    %v2383 = vld [vmem:[#allocation8 + $0x140] sm:$0xff]
    %v2384 = vld [vmem:[#allocation8 + $0x148] sm:$0xff]
    %v2385 = vld [vmem:[#allocation8 + $0x150] sm:$0xff]
    %v2386 = vld [vmem:[#allocation8 + $0x158] sm:$0xff]
    %v2387 = vld [vmem:[#allocation8 + $0x160] sm:$0xff]
    %v2388 = vld [vmem:[#allocation8 + $0x168] sm:$0xff]
    %v2389 = vld [vmem:[#allocation8 + $0x170] sm:$0xff]
    %v2390 = vld [vmem:[#allocation8 + $0x178] sm:$0xff]
    %v2391 = vld [vmem:[#allocation8 + $0x180] sm:$0xff]
    %v2392 = vld [vmem:[#allocation8 + $0x188] sm:$0xff]
    %v2393 = vld [vmem:[#allocation8 + $0x190] sm:$0xff]
    %v2394 = vld [vmem:[#allocation8 + $0x198] sm:$0xff]
    %v2395 = vld [vmem:[#allocation8 + $0x1a0] sm:$0xff]
    %v2396 = vld [vmem:[#allocation8 + $0x1a8] sm:$0xff]
    %v2397 = vld [vmem:[#allocation8 + $0x1b0] sm:$0xff]
    %v2398 = vld [vmem:[#allocation8 + $0x1b8] sm:$0xff]
    %v2399 = vld [vmem:[#allocation8 + $0x1c0] sm:$0xff]
    %v2400 = vld [vmem:[#allocation8 + $0x1c8] sm:$0xff]
    %v2401 = vld [vmem:[#allocation8 + $0x1d0] sm:$0xff]
    %v2402 = vld [vmem:[#allocation8 + $0x1d8] sm:$0xff]
    %v2403 = vld [vmem:[#allocation8 + $0x1e0] sm:$0xff]
    %v2404 = vld [vmem:[#allocation8 + $0x1e8] sm:$0xff]
    %v2405 = vld [vmem:[#allocation8 + $0x1f0] sm:$0xff]
    %v2406 = vld [vmem:[#allocation8 + $0x1f8] sm:$0xff]
    %v2407 = vld [vmem:[%s6] sm:$0xf]
    %v2409 = vlaneseq
    %v2410 = vshrl.u32 %v2409, 7
    %v2411 = vsub.s32 0, %v2410
    %v2412 = vrot.slane %v2407, %v2411
    %v2413 = vlaneseq
    %v2414 = vshrl.u32 %v2413, 7
    %v2415 = vsub.s32 1, %v2414
    %v2416 = vrot.slane %v2407, %v2415
    %v2417 = vlaneseq
    %v2418 = vshrl.u32 %v2417, 7
    %v2419 = vsub.s32 2, %v2418
    %v2420 = vrot.slane %v2407, %v2419
    %v2421 = vlaneseq
    %v2422 = vshrl.u32 %v2421, 7
    %v2423 = vsub.s32 3, %v2422
    %v2424 = vrot.slane %v2407, %v2423
    %2429 = vmatprep.subr.mxu0 %v2344
    %2430 = vmatpush1.msra.mxu0 %v2343
    %2431 = vmatprep.subr.mxu0 %v2348
    %2432 = vmatpush1.msra.mxu0 %v2347
    %2433 = vmatprep.subr.mxu0 %v2352
    %2434 = vmatpush1.msra.mxu0 %v2351
    %2435 = vmatprep.subr.mxu0 %v2356
    %2436 = vmatpush1.msra.mxu0 %v2355
    %2437 = vmatprep.subr.mxu0 %v2360
    %2438 = vmatpush1.msra.mxu0 %v2359
    %2439 = vmatprep.subr.mxu0 %v2364
    %2440 = vmatpush1.msra.mxu0 %v2363
    %2441 = vmatprep.subr.mxu0 %v2368
    %2442 = vmatpush1.msra.mxu0 %v2367
    %2443 = vmatprep.subr.mxu0 %v2372
    %2444 = vmatpush1.msra.mxu0 %v2371
    %2445 = vmatprep.subr.mxu0 %v2376
    %2446 = vmatpush1.msra.mxu0 %v2375
    %2447 = vmatprep.subr.mxu0 %v2380
    %2448 = vmatpush1.msra.mxu0 %v2379
    %2449 = vmatprep.subr.mxu0 %v2384
    %2450 = vmatpush1.msra.mxu0 %v2383
    %2451 = vmatprep.subr.mxu0 %v2388
    %2452 = vmatpush1.msra.mxu0 %v2387
    %2453 = vmatprep.subr.mxu0 %v2392
    %2454 = vmatpush1.msra.mxu0 %v2391
    %2455 = vmatprep.subr.mxu0 %v2396
    %2456 = vmatpush1.msra.mxu0 %v2395
    %2457 = vmatprep.subr.mxu0 %v2400
    %2458 = vmatpush1.msra.mxu0 %v2399
    %2459 = vmatprep.subr.mxu0 %v2404
    %2460 = vmatpush1.msra.mxu0 %v2403
    %2461 = vmatprep.subr.mxu0 0.0
    %2462 = vmatpush1.msra.mxu0 0.0
    %2463 = vmatprep.subr.mxu0 0.0
    %2464 = vmatpush1.msra.mxu0 0.0
    %2465 = vmatprep.subr.mxu0 0.0
    %2466 = vmatpush1.msra.mxu0 0.0
    %2467 = vmatprep.subr.mxu0 0.0
    %2468 = vmatpush1.msra.mxu0 0.0
    %2469 = vmatprep.subr.mxu0 0.0
    %2470 = vmatpush1.msra.mxu0 0.0
    %2471 = vmatprep.subr.mxu0 0.0
    %2472 = vmatpush1.msra.mxu0 0.0
    %2473 = vmatprep.subr.mxu0 0.0
    %2474 = vmatpush1.msra.mxu0 0.0
    %2475 = vmatprep.subr.mxu0 0.0
    %2476 = vmatpush1.msra.mxu0 0.0
    %2477 = vmatprep.subr.mxu0 0.0
    %2478 = vmatpush1.msra.mxu0 0.0
    %2479 = vmatprep.subr.mxu0 0.0
    %2480 = vmatpush1.msra.mxu0 0.0
    %2481 = vmatprep.subr.mxu0 0.0
    %2482 = vmatpush1.msra.mxu0 0.0
    %2483 = vmatprep.subr.mxu0 0.0
    %2484 = vmatpush1.msra.mxu0 0.0
    %2485 = vmatprep.subr.mxu0 0.0
    %2486 = vmatpush1.msra.mxu0 0.0
    %2487 = vmatprep.subr.mxu0 0.0
    %2488 = vmatpush1.msra.mxu0 0.0
    %2489 = vmatprep.subr.mxu0 0.0
    %2490 = vmatpush1.msra.mxu0 0.0
    %2491 = vmatprep.subr.mxu0 0.0
    %2492 = vmatpush1.msra.mxu0 0.0
    %2493 = vmatprep.mubr.f32.mxu0 0.0
    %2494 = vmatmul.mubr.f32.gmra.mrb[0].mxu0 %v2335
    %v2495 = vpop.f32.mrb[0].mxu0
    %v2496 = vadd.f32 %v2412, %v2495
    %v2497 = vpop.f32.mrb[0].mxu0
    %v2498 = vadd.f32 %v2416, %v2497
    %2499 = vmatprep.mubr.f32.mxu0 0.0
    %2500 = vmatmul.mubr.f32.gmra.mrb[0].mxu0 %v2336
    %v2501 = vpop.f32.mrb[0].mxu0
    %v2502 = vadd.f32 %v2412, %v2501
    %v2503 = vpop.f32.mrb[0].mxu0
    %v2504 = vadd.f32 %v2416, %v2503
    %2505 = vmatprep.mubr.f32.mxu0 0.0
    %2506 = vmatmul.mubr.f32.gmra.mrb[0].mxu0 %v2337
    %v2507 = vpop.f32.mrb[0].mxu0
    %v2508 = vadd.f32 %v2412, %v2507
    %v2509 = vpop.f32.mrb[0].mxu0
    %v2510 = vadd.f32 %v2416, %v2509
    %2511 = vmatprep.mubr.f32.mxu0 0.0
    %2512 = vmatmul.mubr.f32.gmra.mrb[0].mxu0 %v2338
    %v2513 = vpop.f32.mrb[0].mxu0
    %v2514 = vadd.f32 %v2412, %v2513
    %v2515 = vpop.f32.mrb[0].mxu0
    %v2516 = vadd.f32 %v2416, %v2515
    %2517 = vmatprep.mubr.f32.mxu0 0.0
    %2518 = vmatmul.mubr.f32.gmra.mrb[0].mxu0 %v2339
    %v2519 = vpop.f32.mrb[0].mxu0
    %v2520 = vadd.f32 %v2412, %v2519
    %v2521 = vpop.f32.mrb[0].mxu0
    %v2522 = vadd.f32 %v2416, %v2521
    %2523 = vmatprep.mubr.f32.mxu0 0.0
    %2524 = vmatmul.mubr.f32.gmra.mrb[0].mxu0 %v2340
    %v2525 = vpop.f32.mrb[0].mxu0
    %v2526 = vadd.f32 %v2412, %v2525
    %v2527 = vpop.f32.mrb[0].mxu0
    %v2528 = vadd.f32 %v2416, %v2527
    %2529 = vmatprep.mubr.f32.mxu0 0.0
    %2530 = vmatmul.mubr.f32.gmra.mrb[0].mxu0 %v2341
    %v2531 = vpop.f32.mrb[0].mxu0
    %v2532 = vadd.f32 %v2412, %v2531
    %v2533 = vpop.f32.mrb[0].mxu0
    %v2534 = vadd.f32 %v2416, %v2533
    %2535 = vmatprep.mubr.f32.mxu0 0.0
    %2536 = vmatmul.mubr.f32.gmra.mrb[0].mxu0 %v2342
    %v2537 = vpop.f32.mrb[0].mxu0
    %v2538 = vadd.f32 %v2412, %v2537
    %v2539 = vpop.f32.mrb[0].mxu0
    %v2540 = vadd.f32 %v2416, %v2539
    %2541 = vdwg.mxu0
    %2542 = vmatprep.subr.mxu0 %v2346
    %2543 = vmatpush1.msra.mxu0 %v2345
    %2544 = vmatprep.subr.mxu0 %v2350
    %2545 = vmatpush1.msra.mxu0 %v2349
    %2546 = vmatprep.subr.mxu0 %v2354
    %2547 = vmatpush1.msra.mxu0 %v2353
    %2548 = vmatprep.subr.mxu0 %v2358
    %2549 = vmatpush1.msra.mxu0 %v2357
    %2550 = vmatprep.subr.mxu0 %v2362
    %2551 = vmatpush1.msra.mxu0 %v2361
    %2552 = vmatprep.subr.mxu0 %v2366
    %2553 = vmatpush1.msra.mxu0 %v2365
    %2554 = vmatprep.subr.mxu0 %v2370
    %2555 = vmatpush1.msra.mxu0 %v2369
    %2556 = vmatprep.subr.mxu0 %v2374
    %2557 = vmatpush1.msra.mxu0 %v2373
    %2558 = vmatprep.subr.mxu0 %v2378
    %2559 = vmatpush1.msra.mxu0 %v2377
    %2560 = vmatprep.subr.mxu0 %v2382
    %2561 = vmatpush1.msra.mxu0 %v2381
    %2562 = vmatprep.subr.mxu0 %v2386
    %2563 = vmatpush1.msra.mxu0 %v2385
    %2564 = vmatprep.subr.mxu0 %v2390
    %2565 = vmatpush1.msra.mxu0 %v2389
    %2566 = vmatprep.subr.mxu0 %v2394
    %2567 = vmatpush1.msra.mxu0 %v2393
    %2568 = vmatprep.subr.mxu0 %v2398
    %2569 = vmatpush1.msra.mxu0 %v2397
    %2570 = vmatprep.subr.mxu0 %v2402
    %2571 = vmatpush1.msra.mxu0 %v2401
    %2572 = vmatprep.subr.mxu0 %v2406
    %2573 = vmatpush1.msra.mxu0 %v2405
    %2574 = vmatprep.subr.mxu0 0.0
    %2575 = vmatpush1.msra.mxu0 0.0
    %2576 = vmatprep.subr.mxu0 0.0
    %2577 = vmatpush1.msra.mxu0 0.0
    %2578 = vmatprep.subr.mxu0 0.0
    %2579 = vmatpush1.msra.mxu0 0.0
    %2580 = vmatprep.subr.mxu0 0.0
    %2581 = vmatpush1.msra.mxu0 0.0
    %2582 = vmatprep.subr.mxu0 0.0
    %2583 = vmatpush1.msra.mxu0 0.0
    %2584 = vmatprep.subr.mxu0 0.0
    %2585 = vmatpush1.msra.mxu0 0.0
    %2586 = vmatprep.subr.mxu0 0.0
    %2587 = vmatpush1.msra.mxu0 0.0
    %2588 = vmatprep.subr.mxu0 0.0
    %2589 = vmatpush1.msra.mxu0 0.0
    %2590 = vmatprep.subr.mxu0 0.0
    %2591 = vmatpush1.msra.mxu0 0.0
    %2592 = vmatprep.subr.mxu0 0.0
    %2593 = vmatpush1.msra.mxu0 0.0
    %2594 = vmatprep.subr.mxu0 0.0
    %2595 = vmatpush1.msra.mxu0 0.0
    %2596 = vmatprep.subr.mxu0 0.0
    %2597 = vmatpush1.msra.mxu0 0.0
    %2598 = vmatprep.subr.mxu0 0.0
    %2599 = vmatpush1.msra.mxu0 0.0
    %2600 = vmatprep.subr.mxu0 0.0
    %2601 = vmatpush1.msra.mxu0 0.0
    %2602 = vmatprep.subr.mxu0 0.0
    %2603 = vmatpush1.msra.mxu0 0.0
    %2604 = vmatprep.subr.mxu0 0.0
    %2605 = vmatpush1.msra.mxu0 0.0
    %2606 = vmatprep.mubr.f32.mxu0 0.0
    %2607 = vmatmul.mubr.f32.gmra.mrb[0].mxu0 %v2335
    %v2608 = vpop.f32.mrb[0].mxu0
    %v2609 = vadd.f32 %v2420, %v2608
    %v2610 = vpop.f32.mrb[0].mxu0
    %v2611 = vadd.f32 %v2424, %v2610
    %2612 = vmatprep.mubr.f32.mxu0 0.0
    %2613 = vmatmul.mubr.f32.gmra.mrb[0].mxu0 %v2336
    %v2614 = vpop.f32.mrb[0].mxu0
    %v2615 = vadd.f32 %v2420, %v2614
    %v2616 = vpop.f32.mrb[0].mxu0
    %v2617 = vadd.f32 %v2424, %v2616
    %2618 = vmatprep.mubr.f32.mxu0 0.0
    %2619 = vmatmul.mubr.f32.gmra.mrb[0].mxu0 %v2337
    %v2620 = vpop.f32.mrb[0].mxu0
    %v2621 = vadd.f32 %v2420, %v2620
    %v2622 = vpop.f32.mrb[0].mxu0
    %v2623 = vadd.f32 %v2424, %v2622
    %2624 = vmatprep.mubr.f32.mxu0 0.0
    %2625 = vmatmul.mubr.f32.gmra.mrb[0].mxu0 %v2338
    %v2626 = vpop.f32.mrb[0].mxu0
    %v2627 = vadd.f32 %v2420, %v2626
    %v2628 = vpop.f32.mrb[0].mxu0
    %v2629 = vadd.f32 %v2424, %v2628
    %2630 = vmatprep.mubr.f32.mxu0 0.0
    %2631 = vmatmul.mubr.f32.gmra.mrb[0].mxu0 %v2339
    %v2632 = vpop.f32.mrb[0].mxu0
    %v2633 = vadd.f32 %v2420, %v2632
    %v2634 = vpop.f32.mrb[0].mxu0
    %v2635 = vadd.f32 %v2424, %v2634
    %2636 = vmatprep.mubr.f32.mxu0 0.0
    %2637 = vmatmul.mubr.f32.gmra.mrb[0].mxu0 %v2340
    %v2638 = vpop.f32.mrb[0].mxu0
    %v2639 = vadd.f32 %v2420, %v2638
    %v2640 = vpop.f32.mrb[0].mxu0
    %v2641 = vadd.f32 %v2424, %v2640
    %2642 = vmatprep.mubr.f32.mxu0 0.0
    %2643 = vmatmul.mubr.f32.gmra.mrb[0].mxu0 %v2341
    %v2644 = vpop.f32.mrb[0].mxu0
    %v2645 = vadd.f32 %v2420, %v2644
    %v2646 = vpop.f32.mrb[0].mxu0
    %v2647 = vadd.f32 %v2424, %v2646
    %2648 = vmatprep.mubr.f32.mxu0 0.0
    %2649 = vmatmul.mubr.f32.gmra.mrb[0].mxu0 %v2342
    %v2650 = vpop.f32.mrb[0].mxu0
    %v2651 = vadd.f32 %v2420, %v2650
    %v2652 = vpop.f32.mrb[0].mxu0
    %v2653 = vadd.f32 %v2424, %v2652
    %2654 = vdwg.mxu0
    %2655 = vst [vmem:[#allocation2] sm:$0xff] %v2496
    %2656 = vst [vmem:[#allocation2 + $0x8] sm:$0xff] %v2498
    %2657 = vst [vmem:[#allocation2 + $0x10] sm:$0xff] %v2609
    %2658 = vst [vmem:[#allocation2 + $0x18] sm:$0xff] %v2611
    %2659 = vst [vmem:[#allocation2 + $0x20] sm:$0xff] %v2502
    %2660 = vst [vmem:[#allocation2 + $0x28] sm:$0xff] %v2504
    %2661 = vst [vmem:[#allocation2 + $0x30] sm:$0xff] %v2615
    %2662 = vst [vmem:[#allocation2 + $0x38] sm:$0xff] %v2617
    %2663 = vst [vmem:[#allocation2 + $0x40] sm:$0xff] %v2508
    %2664 = vst [vmem:[#allocation2 + $0x48] sm:$0xff] %v2510
    %2665 = vst [vmem:[#allocation2 + $0x50] sm:$0xff] %v2621
    %2666 = vst [vmem:[#allocation2 + $0x58] sm:$0xff] %v2623
    %2667 = vst [vmem:[#allocation2 + $0x60] sm:$0xff] %v2514
    %2668 = vst [vmem:[#allocation2 + $0x68] sm:$0xff] %v2516
    %2669 = vst [vmem:[#allocation2 + $0x70] sm:$0xff] %v2627
    %2670 = vst [vmem:[#allocation2 + $0x78] sm:$0xff] %v2629
    %2671 = vst [vmem:[#allocation2 + $0x80] sm:$0xff] %v2520
    %2672 = vst [vmem:[#allocation2 + $0x88] sm:$0xff] %v2522
    %2673 = vst [vmem:[#allocation2 + $0x90] sm:$0xff] %v2633
    %2674 = vst [vmem:[#allocation2 + $0x98] sm:$0xff] %v2635
    %2675 = vst [vmem:[#allocation2 + $0xa0] sm:$0xff] %v2526
    %2676 = vst [vmem:[#allocation2 + $0xa8] sm:$0xff] %v2528
    %2677 = vst [vmem:[#allocation2 + $0xb0] sm:$0xff] %v2639
    %2678 = vst [vmem:[#allocation2 + $0xb8] sm:$0xff] %v2641
    %2679 = vst [vmem:[#allocation2 + $0xc0] sm:$0xff] %v2532
    %2680 = vst [vmem:[#allocation2 + $0xc8] sm:$0xff] %v2534
    %2681 = vst [vmem:[#allocation2 + $0xd0] sm:$0xff] %v2645
    %2682 = vst [vmem:[#allocation2 + $0xd8] sm:$0xff] %v2647
    %2683 = vst [vmem:[#allocation2 + $0xe0] sm:$0xff] %v2538
    %2684 = vst [vmem:[#allocation2 + $0xe8] sm:$0xff] %v2540
    %2685 = vst [vmem:[#allocation2 + $0xf0] sm:$0xff] %v2651
    %2686 = vst [vmem:[#allocation2 + $0xf8] sm:$0xff] %v2653
    %v2687 = vld [vmem:[%s394] sm:$0xff]
    %v2688 = vld [vmem:[%s394 + $0x8] sm:$0xff]
    %v2689 = vld [vmem:[%s394 + $0x10] sm:$0xff]
    %v2690 = vld [vmem:[%s394 + $0x18] sm:$0xff]
    %v2691 = vld [vmem:[#allocation10] sm:$0xff]
    %v2692 = vld [vmem:[#allocation10 + $0x8] sm:$0xff]
    %v2693 = vld [vmem:[#allocation10 + $0x10] sm:$0xff]
    %v2694 = vld [vmem:[#allocation10 + $0x18] sm:$0xff]
    %v2695 = vld [vmem:[#allocation10 + $0x20] sm:$0xff]
    %v2696 = vld [vmem:[#allocation10 + $0x28] sm:$0xff]
    %v2697 = vld [vmem:[#allocation10 + $0x30] sm:$0xff]
    %v2698 = vld [vmem:[#allocation10 + $0x38] sm:$0xff]
    %v2699 = vld [vmem:[#allocation10 + $0x40] sm:$0xff]
    %v2700 = vld [vmem:[#allocation10 + $0x48] sm:$0xff]
    %v2701 = vld [vmem:[#allocation10 + $0x50] sm:$0xff]
    %v2702 = vld [vmem:[#allocation10 + $0x58] sm:$0xff]
    %v2703 = vld [vmem:[#allocation10 + $0x60] sm:$0xff]
    %v2704 = vld [vmem:[#allocation10 + $0x68] sm:$0xff]
    %v2705 = vld [vmem:[#allocation10 + $0x70] sm:$0xff]
    %v2706 = vld [vmem:[#allocation10 + $0x78] sm:$0xff]
    %v2707 = vld [vmem:[#allocation10 + $0x80] sm:$0xff]
    %v2708 = vld [vmem:[#allocation10 + $0x88] sm:$0xff]
    %v2709 = vld [vmem:[#allocation10 + $0x90] sm:$0xff]
    %v2710 = vld [vmem:[#allocation10 + $0x98] sm:$0xff]
    %v2711 = vld [vmem:[#allocation10 + $0xa0] sm:$0xff]
    %v2712 = vld [vmem:[#allocation10 + $0xa8] sm:$0xff]
    %v2713 = vld [vmem:[#allocation10 + $0xb0] sm:$0xff]
    %v2714 = vld [vmem:[#allocation10 + $0xb8] sm:$0xff]
    %v2715 = vld [vmem:[#allocation10 + $0xc0] sm:$0xff]
    %v2716 = vld [vmem:[#allocation10 + $0xc8] sm:$0xff]
    %v2717 = vld [vmem:[#allocation10 + $0xd0] sm:$0xff]
    %v2718 = vld [vmem:[#allocation10 + $0xd8] sm:$0xff]
    %v2719 = vld [vmem:[#allocation10 + $0xe0] sm:$0xff]
    %v2720 = vld [vmem:[#allocation10 + $0xe8] sm:$0xff]
    %v2721 = vld [vmem:[#allocation10 + $0xf0] sm:$0xff]
    %v2722 = vld [vmem:[#allocation10 + $0xf8] sm:$0xff]
    %v2723 = vld [vmem:[#allocation10 + $0x100] sm:$0xff]
    %v2724 = vld [vmem:[#allocation10 + $0x108] sm:$0xff]
    %v2725 = vld [vmem:[#allocation10 + $0x110] sm:$0xff]
    %v2726 = vld [vmem:[#allocation10 + $0x118] sm:$0xff]
    %v2727 = vld [vmem:[#allocation10 + $0x120] sm:$0xff]
    %v2728 = vld [vmem:[#allocation10 + $0x128] sm:$0xff]
    %v2729 = vld [vmem:[#allocation10 + $0x130] sm:$0xff]
    %v2730 = vld [vmem:[#allocation10 + $0x138] sm:$0xff]
    %v2731 = vld [vmem:[#allocation10 + $0x140] sm:$0xff]
    %v2732 = vld [vmem:[#allocation10 + $0x148] sm:$0xff]
    %v2733 = vld [vmem:[#allocation10 + $0x150] sm:$0xff]
    %v2734 = vld [vmem:[#allocation10 + $0x158] sm:$0xff]
    %v2735 = vld [vmem:[#allocation10 + $0x160] sm:$0xff]
    %v2736 = vld [vmem:[#allocation10 + $0x168] sm:$0xff]
    %v2737 = vld [vmem:[#allocation10 + $0x170] sm:$0xff]
    %v2738 = vld [vmem:[#allocation10 + $0x178] sm:$0xff]
    %v2739 = vld [vmem:[#allocation10 + $0x180] sm:$0xff]
    %v2740 = vld [vmem:[#allocation10 + $0x188] sm:$0xff]
    %v2741 = vld [vmem:[#allocation10 + $0x190] sm:$0xff]
    %v2742 = vld [vmem:[#allocation10 + $0x198] sm:$0xff]
    %v2743 = vld [vmem:[#allocation10 + $0x1a0] sm:$0xff]
    %v2744 = vld [vmem:[#allocation10 + $0x1a8] sm:$0xff]
    %v2745 = vld [vmem:[#allocation10 + $0x1b0] sm:$0xff]
    %v2746 = vld [vmem:[#allocation10 + $0x1b8] sm:$0xff]
    %v2747 = vld [vmem:[#allocation10 + $0x1c0] sm:$0xff]
    %v2748 = vld [vmem:[#allocation10 + $0x1c8] sm:$0xff]
    %v2749 = vld [vmem:[#allocation10 + $0x1d0] sm:$0xff]
    %v2750 = vld [vmem:[#allocation10 + $0x1d8] sm:$0xff]
    %v2751 = vld [vmem:[#allocation10 + $0x1e0] sm:$0xff]
    %v2752 = vld [vmem:[#allocation10 + $0x1e8] sm:$0xff]
    %v2753 = vld [vmem:[#allocation10 + $0x1f0] sm:$0xff]
    %v2754 = vld [vmem:[#allocation10 + $0x1f8] sm:$0xff]
    %2755 = vmatprep.subr.mxu0 %v2692
    %2756 = vmatpush1.msra.mxu0 %v2691
    %2757 = vmatprep.subr.mxu0 %v2696
    %2758 = vmatpush1.msra.mxu0 %v2695
    %2759 = vmatprep.subr.mxu0 %v2700
    %2760 = vmatpush1.msra.mxu0 %v2699
    %2761 = vmatprep.subr.mxu0 %v2704
    %2762 = vmatpush1.msra.mxu0 %v2703
    %2763 = vmatprep.subr.mxu0 %v2708
    %2764 = vmatpush1.msra.mxu0 %v2707
    %2765 = vmatprep.subr.mxu0 %v2712
    %2766 = vmatpush1.msra.mxu0 %v2711
    %2767 = vmatprep.subr.mxu0 %v2716
    %2768 = vmatpush1.msra.mxu0 %v2715
    %2769 = vmatprep.subr.mxu0 %v2720
    %2770 = vmatpush1.msra.mxu0 %v2719
    %2771 = vmatprep.subr.mxu0 %v2724
    %2772 = vmatpush1.msra.mxu0 %v2723
    %2773 = vmatprep.subr.mxu0 %v2728
    %2774 = vmatpush1.msra.mxu0 %v2727
    %2775 = vmatprep.subr.mxu0 %v2732
    %2776 = vmatpush1.msra.mxu0 %v2731
    %2777 = vmatprep.subr.mxu0 %v2736
    %2778 = vmatpush1.msra.mxu0 %v2735
    %2779 = vmatprep.subr.mxu0 %v2740
    %2780 = vmatpush1.msra.mxu0 %v2739
    %2781 = vmatprep.subr.mxu0 %v2744
    %2782 = vmatpush1.msra.mxu0 %v2743
    %2783 = vmatprep.subr.mxu0 %v2748
    %2784 = vmatpush1.msra.mxu0 %v2747
    %2785 = vmatprep.subr.mxu0 %v2752
    %2786 = vmatpush1.msra.mxu0 %v2751
    %2787 = vmatprep.subr.mxu0 0.0
    %2788 = vmatpush1.msra.mxu0 0.0
    %2789 = vmatprep.subr.mxu0 0.0
    %2790 = vmatpush1.msra.mxu0 0.0
    %2791 = vmatprep.subr.mxu0 0.0
    %2792 = vmatpush1.msra.mxu0 0.0
    %2793 = vmatprep.subr.mxu0 0.0
    %2794 = vmatpush1.msra.mxu0 0.0
    %2795 = vmatprep.subr.mxu0 0.0
    %2796 = vmatpush1.msra.mxu0 0.0
    %2797 = vmatprep.subr.mxu0 0.0
    %2798 = vmatpush1.msra.mxu0 0.0
    %2799 = vmatprep.subr.mxu0 0.0
    %2800 = vmatpush1.msra.mxu0 0.0
    %2801 = vmatprep.subr.mxu0 0.0
    %2802 = vmatpush1.msra.mxu0 0.0
    %2803 = vmatprep.subr.mxu0 0.0
    %2804 = vmatpush1.msra.mxu0 0.0
    %2805 = vmatprep.subr.mxu0 0.0
    %2806 = vmatpush1.msra.mxu0 0.0
    %2807 = vmatprep.subr.mxu0 0.0
    %2808 = vmatpush1.msra.mxu0 0.0
    %2809 = vmatprep.subr.mxu0 0.0
    %2810 = vmatpush1.msra.mxu0 0.0
    %2811 = vmatprep.subr.mxu0 0.0
    %2812 = vmatpush1.msra.mxu0 0.0
    %2813 = vmatprep.subr.mxu0 0.0
    %2814 = vmatpush1.msra.mxu0 0.0
    %2815 = vmatprep.subr.mxu0 0.0
    %2816 = vmatpush1.msra.mxu0 0.0
    %2817 = vmatprep.subr.mxu0 0.0
    %2818 = vmatpush1.msra.mxu0 0.0
    %2819 = vmatprep.mubr.f32.mxu0 0.0
    %2820 = vmatmul.mubr.f32.gmra.mrb[0].mxu0 0.0
    %v2821 = vpop.f32.mrb[0].mxu0
    %v2822 = vadd.f32 0.0, %v2821
    %v2823 = vpop.f32.mrb[0].mxu0
    %v2824 = vadd.f32 0.0, %v2823
    %2825 = vdwg.mxu0
    %2826 = vmatprep.subr.mxu0 %v2694
    %2827 = vmatpush1.msra.mxu0 %v2693
    %2828 = vmatprep.subr.mxu0 %v2698
    %2829 = vmatpush1.msra.mxu0 %v2697
    %2830 = vmatprep.subr.mxu0 %v2702
    %2831 = vmatpush1.msra.mxu0 %v2701
    %2832 = vmatprep.subr.mxu0 %v2706
    %2833 = vmatpush1.msra.mxu0 %v2705
    %2834 = vmatprep.subr.mxu0 %v2710
    %2835 = vmatpush1.msra.mxu0 %v2709
    %2836 = vmatprep.subr.mxu0 %v2714
    %2837 = vmatpush1.msra.mxu0 %v2713
    %2838 = vmatprep.subr.mxu0 %v2718
    %2839 = vmatpush1.msra.mxu0 %v2717
    %2840 = vmatprep.subr.mxu0 %v2722
    %2841 = vmatpush1.msra.mxu0 %v2721
    %2842 = vmatprep.subr.mxu0 %v2726
    %2843 = vmatpush1.msra.mxu0 %v2725
    %2844 = vmatprep.subr.mxu0 %v2730
    %2845 = vmatpush1.msra.mxu0 %v2729
    %2846 = vmatprep.subr.mxu0 %v2734
    %2847 = vmatpush1.msra.mxu0 %v2733
    %2848 = vmatprep.subr.mxu0 %v2738
    %2849 = vmatpush1.msra.mxu0 %v2737
    %2850 = vmatprep.subr.mxu0 %v2742
    %2851 = vmatpush1.msra.mxu0 %v2741
    %2852 = vmatprep.subr.mxu0 %v2746
    %2853 = vmatpush1.msra.mxu0 %v2745
    %2854 = vmatprep.subr.mxu0 %v2750
    %2855 = vmatpush1.msra.mxu0 %v2749
    %2856 = vmatprep.subr.mxu0 %v2754
    %2857 = vmatpush1.msra.mxu0 %v2753
    %2858 = vmatprep.subr.mxu0 0.0
    %2859 = vmatpush1.msra.mxu0 0.0
    %2860 = vmatprep.subr.mxu0 0.0
    %2861 = vmatpush1.msra.mxu0 0.0
    %2862 = vmatprep.subr.mxu0 0.0
    %2863 = vmatpush1.msra.mxu0 0.0
    %2864 = vmatprep.subr.mxu0 0.0
    %2865 = vmatpush1.msra.mxu0 0.0
    %2866 = vmatprep.subr.mxu0 0.0
    %2867 = vmatpush1.msra.mxu0 0.0
    %2868 = vmatprep.subr.mxu0 0.0
    %2869 = vmatpush1.msra.mxu0 0.0
    %2870 = vmatprep.subr.mxu0 0.0
    %2871 = vmatpush1.msra.mxu0 0.0
    %2872 = vmatprep.subr.mxu0 0.0
    %2873 = vmatpush1.msra.mxu0 0.0
    %2874 = vmatprep.subr.mxu0 0.0
    %2875 = vmatpush1.msra.mxu0 0.0
    %2876 = vmatprep.subr.mxu0 0.0
    %2877 = vmatpush1.msra.mxu0 0.0
    %2878 = vmatprep.subr.mxu0 0.0
    %2879 = vmatpush1.msra.mxu0 0.0
    %2880 = vmatprep.subr.mxu0 0.0
    %2881 = vmatpush1.msra.mxu0 0.0
    %2882 = vmatprep.subr.mxu0 0.0
    %2883 = vmatpush1.msra.mxu0 0.0
    %2884 = vmatprep.subr.mxu0 0.0
    %2885 = vmatpush1.msra.mxu0 0.0
    %2886 = vmatprep.subr.mxu0 0.0
    %2887 = vmatpush1.msra.mxu0 0.0
    %2888 = vmatprep.subr.mxu0 0.0
    %2889 = vmatpush1.msra.mxu0 0.0
    %2890 = vmatprep.mubr.f32.mxu0 0.0
    %2891 = vmatmul.mubr.f32.gmra.mrb[0].mxu0 0.0
    %v2892 = vpop.f32.mrb[0].mxu0
    %v2893 = vadd.f32 0.0, %v2892
    %v2894 = vpop.f32.mrb[0].mxu0
    %v2895 = vadd.f32 0.0, %v2894
    %2896 = vdwg.mxu0
    %v2897 = vadd.f32 %v2687, %v2822
    %v2898 = vadd.f32 %v2688, %v2824
    %v2899 = vadd.f32 %v2689, %v2893
    %v2900 = vadd.f32 %v2690, %v2895
    %v2901 = vxor.u32 %v2897, 2147483648
    %v2902 = vmul.f32 %v2901, 1.442695
    %v2903 = vpow.pop %v2902
    %v2904 = vadd.f32 %v2903, 1.0
    %v2905 = vrcp.pop %v2904
    %v2906 = vmul.f32 1.0, %v2905
    %v2907 = vxor.u32 %v2898, 2147483648
    %v2908 = vmul.f32 %v2907, 1.442695
    %v2909 = vpow.pop %v2908
    %v2910 = vadd.f32 %v2909, 1.0
    %v2911 = vrcp.pop %v2910
    %v2912 = vmul.f32 1.0, %v2911
    %v2913 = vtanh.pop %v2899
    %v2914 = vxor.u32 %v2900, 2147483648
    %v2915 = vmul.f32 %v2914, 1.442695
    %v2916 = vpow.pop %v2915
    %v2917 = vadd.f32 %v2916, 1.0
    %v2918 = vrcp.pop %v2917
    %v2919 = vmul.f32 1.0, %v2918
    %v2920 = vmul.f32 %v2912, 0.0
    %v2921 = vmul.f32 %v2906, %v2913
    %v2922 = vadd.f32 %v2920, %v2921
    %v2923 = vtanh.pop %v2922
    %v2924 = vmul.f32 %v2919, %v2923
    %2925 = vst [vmem:[#allocation4] sm:$0xff] %v2924
    %v2926 = vld [vmem:[%s636] sm:$0xff]
    %v2927 = vld [vmem:[%s636 + $0x8] sm:$0xff]
    %v2928 = vld [vmem:[%s636 + $0x10] sm:$0xff]
    %v2929 = vld [vmem:[%s636 + $0x18] sm:$0xff]
    %v2930 = vld [vmem:[#allocation10] sm:$0xff]
    %v2931 = vld [vmem:[#allocation10 + $0x8] sm:$0xff]
    %v2932 = vld [vmem:[#allocation10 + $0x10] sm:$0xff]
    %v2933 = vld [vmem:[#allocation10 + $0x18] sm:$0xff]
    %v2934 = vld [vmem:[#allocation10 + $0x20] sm:$0xff]
    %v2935 = vld [vmem:[#allocation10 + $0x28] sm:$0xff]
    %v2936 = vld [vmem:[#allocation10 + $0x30] sm:$0xff]
    %v2937 = vld [vmem:[#allocation10 + $0x38] sm:$0xff]
    %v2938 = vld [vmem:[#allocation10 + $0x40] sm:$0xff]
    %v2939 = vld [vmem:[#allocation10 + $0x48] sm:$0xff]
    %v2940 = vld [vmem:[#allocation10 + $0x50] sm:$0xff]
    %v2941 = vld [vmem:[#allocation10 + $0x58] sm:$0xff]
    %v2942 = vld [vmem:[#allocation10 + $0x60] sm:$0xff]
    %v2943 = vld [vmem:[#allocation10 + $0x68] sm:$0xff]
    %v2944 = vld [vmem:[#allocation10 + $0x70] sm:$0xff]
    %v2945 = vld [vmem:[#allocation10 + $0x78] sm:$0xff]
    %v2946 = vld [vmem:[#allocation10 + $0x80] sm:$0xff]
    %v2947 = vld [vmem:[#allocation10 + $0x88] sm:$0xff]
    %v2948 = vld [vmem:[#allocation10 + $0x90] sm:$0xff]
    %v2949 = vld [vmem:[#allocation10 + $0x98] sm:$0xff]
    %v2950 = vld [vmem:[#allocation10 + $0xa0] sm:$0xff]
    %v2951 = vld [vmem:[#allocation10 + $0xa8] sm:$0xff]
    %v2952 = vld [vmem:[#allocation10 + $0xb0] sm:$0xff]
    %v2953 = vld [vmem:[#allocation10 + $0xb8] sm:$0xff]
    %v2954 = vld [vmem:[#allocation10 + $0xc0] sm:$0xff]
    %v2955 = vld [vmem:[#allocation10 + $0xc8] sm:$0xff]
    %v2956 = vld [vmem:[#allocation10 + $0xd0] sm:$0xff]
    %v2957 = vld [vmem:[#allocation10 + $0xd8] sm:$0xff]
    %v2958 = vld [vmem:[#allocation10 + $0xe0] sm:$0xff]
    %v2959 = vld [vmem:[#allocation10 + $0xe8] sm:$0xff]
    %v2960 = vld [vmem:[#allocation10 + $0xf0] sm:$0xff]
    %v2961 = vld [vmem:[#allocation10 + $0xf8] sm:$0xff]
    %v2962 = vld [vmem:[#allocation10 + $0x100] sm:$0xff]
    %v2963 = vld [vmem:[#allocation10 + $0x108] sm:$0xff]
    %v2964 = vld [vmem:[#allocation10 + $0x110] sm:$0xff]
    %v2965 = vld [vmem:[#allocation10 + $0x118] sm:$0xff]
    %v2966 = vld [vmem:[#allocation10 + $0x120] sm:$0xff]
    %v2967 = vld [vmem:[#allocation10 + $0x128] sm:$0xff]
    %v2968 = vld [vmem:[#allocation10 + $0x130] sm:$0xff]
    %v2969 = vld [vmem:[#allocation10 + $0x138] sm:$0xff]
    %v2970 = vld [vmem:[#allocation10 + $0x140] sm:$0xff]
    %v2971 = vld [vmem:[#allocation10 + $0x148] sm:$0xff]
    %v2972 = vld [vmem:[#allocation10 + $0x150] sm:$0xff]
    %v2973 = vld [vmem:[#allocation10 + $0x158] sm:$0xff]
    %v2974 = vld [vmem:[#allocation10 + $0x160] sm:$0xff]
    %v2975 = vld [vmem:[#allocation10 + $0x168] sm:$0xff]
    %v2976 = vld [vmem:[#allocation10 + $0x170] sm:$0xff]
    %v2977 = vld [vmem:[#allocation10 + $0x178] sm:$0xff]
    %v2978 = vld [vmem:[#allocation10 + $0x180] sm:$0xff]
    %v2979 = vld [vmem:[#allocation10 + $0x188] sm:$0xff]
    %v2980 = vld [vmem:[#allocation10 + $0x190] sm:$0xff]
    %v2981 = vld [vmem:[#allocation10 + $0x198] sm:$0xff]
    %v2982 = vld [vmem:[#allocation10 + $0x1a0] sm:$0xff]
    %v2983 = vld [vmem:[#allocation10 + $0x1a8] sm:$0xff]
    %v2984 = vld [vmem:[#allocation10 + $0x1b0] sm:$0xff]
    %v2985 = vld [vmem:[#allocation10 + $0x1b8] sm:$0xff]
    %v2986 = vld [vmem:[#allocation10 + $0x1c0] sm:$0xff]
    %v2987 = vld [vmem:[#allocation10 + $0x1c8] sm:$0xff]
    %v2988 = vld [vmem:[#allocation10 + $0x1d0] sm:$0xff]
    %v2989 = vld [vmem:[#allocation10 + $0x1d8] sm:$0xff]
    %v2990 = vld [vmem:[#allocation10 + $0x1e0] sm:$0xff]
    %v2991 = vld [vmem:[#allocation10 + $0x1e8] sm:$0xff]
    %v2992 = vld [vmem:[#allocation10 + $0x1f0] sm:$0xff]
    %v2993 = vld [vmem:[#allocation10 + $0x1f8] sm:$0xff]
    %2994 = vmatprep.subr.mxu0 %v2931
    %2995 = vmatpush1.msra.mxu0 %v2930
    %2996 = vmatprep.subr.mxu0 %v2935
    %2997 = vmatpush1.msra.mxu0 %v2934
    %2998 = vmatprep.subr.mxu0 %v2939
    %2999 = vmatpush1.msra.mxu0 %v2938
    %3000 = vmatprep.subr.mxu0 %v2943
    %3001 = vmatpush1.msra.mxu0 %v2942
    %3002 = vmatprep.subr.mxu0 %v2947
    %3003 = vmatpush1.msra.mxu0 %v2946
    %3004 = vmatprep.subr.mxu0 %v2951
    %3005 = vmatpush1.msra.mxu0 %v2950
    %3006 = vmatprep.subr.mxu0 %v2955
    %3007 = vmatpush1.msra.mxu0 %v2954
    %3008 = vmatprep.subr.mxu0 %v2959
    %3009 = vmatpush1.msra.mxu0 %v2958
    %3010 = vmatprep.subr.mxu0 %v2963
    %3011 = vmatpush1.msra.mxu0 %v2962
    %3012 = vmatprep.subr.mxu0 %v2967
    %3013 = vmatpush1.msra.mxu0 %v2966
    %3014 = vmatprep.subr.mxu0 %v2971
    %3015 = vmatpush1.msra.mxu0 %v2970
    %3016 = vmatprep.subr.mxu0 %v2975
    %3017 = vmatpush1.msra.mxu0 %v2974
    %3018 = vmatprep.subr.mxu0 %v2979
    %3019 = vmatpush1.msra.mxu0 %v2978
    %3020 = vmatprep.subr.mxu0 %v2983
    %3021 = vmatpush1.msra.mxu0 %v2982
    %3022 = vmatprep.subr.mxu0 %v2987
    %3023 = vmatpush1.msra.mxu0 %v2986
    %3024 = vmatprep.subr.mxu0 %v2991
    %3025 = vmatpush1.msra.mxu0 %v2990
    %3026 = vmatprep.subr.mxu0 0.0
    %3027 = vmatpush1.msra.mxu0 0.0
    %3028 = vmatprep.subr.mxu0 0.0
    %3029 = vmatpush1.msra.mxu0 0.0
    %3030 = vmatprep.subr.mxu0 0.0
    %3031 = vmatpush1.msra.mxu0 0.0
    %3032 = vmatprep.subr.mxu0 0.0
    %3033 = vmatpush1.msra.mxu0 0.0
    %3034 = vmatprep.subr.mxu0 0.0
    %3035 = vmatpush1.msra.mxu0 0.0
    %3036 = vmatprep.subr.mxu0 0.0
    %3037 = vmatpush1.msra.mxu0 0.0
    %3038 = vmatprep.subr.mxu0 0.0
    %3039 = vmatpush1.msra.mxu0 0.0
    %3040 = vmatprep.subr.mxu0 0.0
    %3041 = vmatpush1.msra.mxu0 0.0
    %3042 = vmatprep.subr.mxu0 0.0
    %3043 = vmatpush1.msra.mxu0 0.0
    %3044 = vmatprep.subr.mxu0 0.0
    %3045 = vmatpush1.msra.mxu0 0.0
    %3046 = vmatprep.subr.mxu0 0.0
    %3047 = vmatpush1.msra.mxu0 0.0
    %3048 = vmatprep.subr.mxu0 0.0
    %3049 = vmatpush1.msra.mxu0 0.0
    %3050 = vmatprep.subr.mxu0 0.0
    %3051 = vmatpush1.msra.mxu0 0.0
    %3052 = vmatprep.subr.mxu0 0.0
    %3053 = vmatpush1.msra.mxu0 0.0
    %3054 = vmatprep.subr.mxu0 0.0
    %3055 = vmatpush1.msra.mxu0 0.0
    %3056 = vmatprep.subr.mxu0 0.0
    %3057 = vmatpush1.msra.mxu0 0.0
    %3058 = vmatprep.mubr.f32.mxu0 0.0
    %3059 = vmatmul.mubr.f32.gmra.mrb[0].mxu0 %v2924
    %v3060 = vpop.f32.mrb[0].mxu0
    %v3061 = vadd.f32 0.0, %v3060
    %v3062 = vpop.f32.mrb[0].mxu0
    %v3063 = vadd.f32 0.0, %v3062
    %3064 = vdwg.mxu0
    %3065 = vmatprep.subr.mxu0 %v2933
    %3066 = vmatpush1.msra.mxu0 %v2932
    %3067 = vmatprep.subr.mxu0 %v2937
    %3068 = vmatpush1.msra.mxu0 %v2936
    %3069 = vmatprep.subr.mxu0 %v2941
    %3070 = vmatpush1.msra.mxu0 %v2940
    %3071 = vmatprep.subr.mxu0 %v2945
    %3072 = vmatpush1.msra.mxu0 %v2944
    %3073 = vmatprep.subr.mxu0 %v2949
    %3074 = vmatpush1.msra.mxu0 %v2948
    %3075 = vmatprep.subr.mxu0 %v2953
    %3076 = vmatpush1.msra.mxu0 %v2952
    %3077 = vmatprep.subr.mxu0 %v2957
    %3078 = vmatpush1.msra.mxu0 %v2956
    %3079 = vmatprep.subr.mxu0 %v2961
    %3080 = vmatpush1.msra.mxu0 %v2960
    %3081 = vmatprep.subr.mxu0 %v2965
    %3082 = vmatpush1.msra.mxu0 %v2964
    %3083 = vmatprep.subr.mxu0 %v2969
    %3084 = vmatpush1.msra.mxu0 %v2968
    %3085 = vmatprep.subr.mxu0 %v2973
    %3086 = vmatpush1.msra.mxu0 %v2972
    %3087 = vmatprep.subr.mxu0 %v2977
    %3088 = vmatpush1.msra.mxu0 %v2976
    %3089 = vmatprep.subr.mxu0 %v2981
    %3090 = vmatpush1.msra.mxu0 %v2980
    %3091 = vmatprep.subr.mxu0 %v2985
    %3092 = vmatpush1.msra.mxu0 %v2984
    %3093 = vmatprep.subr.mxu0 %v2989
    %3094 = vmatpush1.msra.mxu0 %v2988
    %3095 = vmatprep.subr.mxu0 %v2993
    %3096 = vmatpush1.msra.mxu0 %v2992
    %3097 = vmatprep.subr.mxu0 0.0
    %3098 = vmatpush1.msra.mxu0 0.0
    %3099 = vmatprep.subr.mxu0 0.0
    %3100 = vmatpush1.msra.mxu0 0.0
    %3101 = vmatprep.subr.mxu0 0.0
    %3102 = vmatpush1.msra.mxu0 0.0
    %3103 = vmatprep.subr.mxu0 0.0
    %3104 = vmatpush1.msra.mxu0 0.0
    %3105 = vmatprep.subr.mxu0 0.0
    %3106 = vmatpush1.msra.mxu0 0.0
    %3107 = vmatprep.subr.mxu0 0.0
    %3108 = vmatpush1.msra.mxu0 0.0
    %3109 = vmatprep.subr.mxu0 0.0
    %3110 = vmatpush1.msra.mxu0 0.0
    %3111 = vmatprep.subr.mxu0 0.0
    %3112 = vmatpush1.msra.mxu0 0.0
    %3113 = vmatprep.subr.mxu0 0.0
    %3114 = vmatpush1.msra.mxu0 0.0
    %3115 = vmatprep.subr.mxu0 0.0
    %3116 = vmatpush1.msra.mxu0 0.0
    %3117 = vmatprep.subr.mxu0 0.0
    %3118 = vmatpush1.msra.mxu0 0.0
    %3119 = vmatprep.subr.mxu0 0.0
    %3120 = vmatpush1.msra.mxu0 0.0
    %3121 = vmatprep.subr.mxu0 0.0
    %3122 = vmatpush1.msra.mxu0 0.0
    %3123 = vmatprep.subr.mxu0 0.0
    %3124 = vmatpush1.msra.mxu0 0.0
    %3125 = vmatprep.subr.mxu0 0.0
    %3126 = vmatpush1.msra.mxu0 0.0
    %3127 = vmatprep.subr.mxu0 0.0
    %3128 = vmatpush1.msra.mxu0 0.0
    %3129 = vmatprep.mubr.f32.mxu0 0.0
    %3130 = vmatmul.mubr.f32.gmra.mrb[0].mxu0 %v2924
    %v3131 = vpop.f32.mrb[0].mxu0
    %v3132 = vadd.f32 0.0, %v3131
    %v3133 = vpop.f32.mrb[0].mxu0
    %v3134 = vadd.f32 0.0, %v3133
    %3135 = vdwg.mxu0
    %v3136 = vadd.f32 %v2926, %v3061
    %v3137 = vadd.f32 %v2927, %v3063
    %v3138 = vadd.f32 %v2928, %v3132
    %v3139 = vadd.f32 %v2929, %v3134
    %v3140 = vxor.u32 %v3136, 2147483648
    %v3141 = vmul.f32 %v3140, 1.442695
    %v3142 = vpow.pop %v3141
    %v3143 = vadd.f32 %v3142, 1.0
    %v3144 = vrcp.pop %v3143
    %v3145 = vmul.f32 1.0, %v3144
    %v3146 = vxor.u32 %v3137, 2147483648
    %v3147 = vmul.f32 %v3146, 1.442695
    %v3148 = vpow.pop %v3147
    %v3149 = vadd.f32 %v3148, 1.0
    %v3150 = vrcp.pop %v3149
    %v3151 = vmul.f32 1.0, %v3150
    %v3152 = vtanh.pop %v3138
    %v3153 = vxor.u32 %v3139, 2147483648
    %v3154 = vmul.f32 %v3153, 1.442695
    %v3155 = vpow.pop %v3154
    %v3156 = vadd.f32 %v3155, 1.0
    %v3157 = vrcp.pop %v3156
    %v3158 = vmul.f32 1.0, %v3157
    %v3159 = vmul.f32 %v3151, %v2922
    %v3160 = vmul.f32 %v3145, %v3152
    %v3161 = vadd.f32 %v3159, %v3160
    %v3162 = vtanh.pop %v3161
    %v3163 = vmul.f32 %v3158, %v3162
    %s3164 = scalar_lea.vmem [#allocation4], 8
    %3165 = vst [vmem:[%s3164] sm:$0xff] %v3163
    %v3166 = vld [vmem:[%s879] sm:$0xff]
    %v3167 = vld [vmem:[%s879 + $0x8] sm:$0xff]
    %v3168 = vld [vmem:[%s879 + $0x10] sm:$0xff]
    %v3169 = vld [vmem:[%s879 + $0x18] sm:$0xff]
    %v3170 = vld [vmem:[#allocation10] sm:$0xff]
    %v3171 = vld [vmem:[#allocation10 + $0x8] sm:$0xff]
    %v3172 = vld [vmem:[#allocation10 + $0x10] sm:$0xff]
    %v3173 = vld [vmem:[#allocation10 + $0x18] sm:$0xff]
    %v3174 = vld [vmem:[#allocation10 + $0x20] sm:$0xff]
    %v3175 = vld [vmem:[#allocation10 + $0x28] sm:$0xff]
    %v3176 = vld [vmem:[#allocation10 + $0x30] sm:$0xff]
    %v3177 = vld [vmem:[#allocation10 + $0x38] sm:$0xff]
    %v3178 = vld [vmem:[#allocation10 + $0x40] sm:$0xff]
    %v3179 = vld [vmem:[#allocation10 + $0x48] sm:$0xff]
    %v3180 = vld [vmem:[#allocation10 + $0x50] sm:$0xff]
    %v3181 = vld [vmem:[#allocation10 + $0x58] sm:$0xff]
    %v3182 = vld [vmem:[#allocation10 + $0x60] sm:$0xff]
    %v3183 = vld [vmem:[#allocation10 + $0x68] sm:$0xff]
    %v3184 = vld [vmem:[#allocation10 + $0x70] sm:$0xff]
    %v3185 = vld [vmem:[#allocation10 + $0x78] sm:$0xff]
    %v3186 = vld [vmem:[#allocation10 + $0x80] sm:$0xff]
    %v3187 = vld [vmem:[#allocation10 + $0x88] sm:$0xff]
    %v3188 = vld [vmem:[#allocation10 + $0x90] sm:$0xff]
    %v3189 = vld [vmem:[#allocation10 + $0x98] sm:$0xff]
    %v3190 = vld [vmem:[#allocation10 + $0xa0] sm:$0xff]
    %v3191 = vld [vmem:[#allocation10 + $0xa8] sm:$0xff]
    %v3192 = vld [vmem:[#allocation10 + $0xb0] sm:$0xff]
    %v3193 = vld [vmem:[#allocation10 + $0xb8] sm:$0xff]
    %v3194 = vld [vmem:[#allocation10 + $0xc0] sm:$0xff]
    %v3195 = vld [vmem:[#allocation10 + $0xc8] sm:$0xff]
    %v3196 = vld [vmem:[#allocation10 + $0xd0] sm:$0xff]
    %v3197 = vld [vmem:[#allocation10 + $0xd8] sm:$0xff]
    %v3198 = vld [vmem:[#allocation10 + $0xe0] sm:$0xff]
    %v3199 = vld [vmem:[#allocation10 + $0xe8] sm:$0xff]
    %v3200 = vld [vmem:[#allocation10 + $0xf0] sm:$0xff]
    %v3201 = vld [vmem:[#allocation10 + $0xf8] sm:$0xff]
    %v3202 = vld [vmem:[#allocation10 + $0x100] sm:$0xff]
    %v3203 = vld [vmem:[#allocation10 + $0x108] sm:$0xff]
    %v3204 = vld [vmem:[#allocation10 + $0x110] sm:$0xff]
    %v3205 = vld [vmem:[#allocation10 + $0x118] sm:$0xff]
    %v3206 = vld [vmem:[#allocation10 + $0x120] sm:$0xff]
    %v3207 = vld [vmem:[#allocation10 + $0x128] sm:$0xff]
    %v3208 = vld [vmem:[#allocation10 + $0x130] sm:$0xff]
    %v3209 = vld [vmem:[#allocation10 + $0x138] sm:$0xff]
    %v3210 = vld [vmem:[#allocation10 + $0x140] sm:$0xff]
    %v3211 = vld [vmem:[#allocation10 + $0x148] sm:$0xff]
    %v3212 = vld [vmem:[#allocation10 + $0x150] sm:$0xff]
    %v3213 = vld [vmem:[#allocation10 + $0x158] sm:$0xff]
    %v3214 = vld [vmem:[#allocation10 + $0x160] sm:$0xff]
    %v3215 = vld [vmem:[#allocation10 + $0x168] sm:$0xff]
    %v3216 = vld [vmem:[#allocation10 + $0x170] sm:$0xff]
    %v3217 = vld [vmem:[#allocation10 + $0x178] sm:$0xff]
    %v3218 = vld [vmem:[#allocation10 + $0x180] sm:$0xff]
    %v3219 = vld [vmem:[#allocation10 + $0x188] sm:$0xff]
    %v3220 = vld [vmem:[#allocation10 + $0x190] sm:$0xff]
    %v3221 = vld [vmem:[#allocation10 + $0x198] sm:$0xff]
    %v3222 = vld [vmem:[#allocation10 + $0x1a0] sm:$0xff]
    %v3223 = vld [vmem:[#allocation10 + $0x1a8] sm:$0xff]
    %v3224 = vld [vmem:[#allocation10 + $0x1b0] sm:$0xff]
    %v3225 = vld [vmem:[#allocation10 + $0x1b8] sm:$0xff]
    %v3226 = vld [vmem:[#allocation10 + $0x1c0] sm:$0xff]
    %v3227 = vld [vmem:[#allocation10 + $0x1c8] sm:$0xff]
    %v3228 = vld [vmem:[#allocation10 + $0x1d0] sm:$0xff]
    %v3229 = vld [vmem:[#allocation10 + $0x1d8] sm:$0xff]
    %v3230 = vld [vmem:[#allocation10 + $0x1e0] sm:$0xff]
    %v3231 = vld [vmem:[#allocation10 + $0x1e8] sm:$0xff]
    %v3232 = vld [vmem:[#allocation10 + $0x1f0] sm:$0xff]
    %v3233 = vld [vmem:[#allocation10 + $0x1f8] sm:$0xff]
    %3234 = vmatprep.subr.mxu0 %v3171
    %3235 = vmatpush1.msra.mxu0 %v3170
    %3236 = vmatprep.subr.mxu0 %v3175
    %3237 = vmatpush1.msra.mxu0 %v3174
    %3238 = vmatprep.subr.mxu0 %v3179
    %3239 = vmatpush1.msra.mxu0 %v3178
    %3240 = vmatprep.subr.mxu0 %v3183
    %3241 = vmatpush1.msra.mxu0 %v3182
    %3242 = vmatprep.subr.mxu0 %v3187
    %3243 = vmatpush1.msra.mxu0 %v3186
    %3244 = vmatprep.subr.mxu0 %v3191
    %3245 = vmatpush1.msra.mxu0 %v3190
    %3246 = vmatprep.subr.mxu0 %v3195
    %3247 = vmatpush1.msra.mxu0 %v3194
    %3248 = vmatprep.subr.mxu0 %v3199
    %3249 = vmatpush1.msra.mxu0 %v3198
    %3250 = vmatprep.subr.mxu0 %v3203
    %3251 = vmatpush1.msra.mxu0 %v3202
    %3252 = vmatprep.subr.mxu0 %v3207
    %3253 = vmatpush1.msra.mxu0 %v3206
    %3254 = vmatprep.subr.mxu0 %v3211
    %3255 = vmatpush1.msra.mxu0 %v3210
    %3256 = vmatprep.subr.mxu0 %v3215
    %3257 = vmatpush1.msra.mxu0 %v3214
    %3258 = vmatprep.subr.mxu0 %v3219
    %3259 = vmatpush1.msra.mxu0 %v3218
    %3260 = vmatprep.subr.mxu0 %v3223
    %3261 = vmatpush1.msra.mxu0 %v3222
    %3262 = vmatprep.subr.mxu0 %v3227
    %3263 = vmatpush1.msra.mxu0 %v3226
    %3264 = vmatprep.subr.mxu0 %v3231
    %3265 = vmatpush1.msra.mxu0 %v3230
    %3266 = vmatprep.subr.mxu0 0.0
    %3267 = vmatpush1.msra.mxu0 0.0
    %3268 = vmatprep.subr.mxu0 0.0
    %3269 = vmatpush1.msra.mxu0 0.0
    %3270 = vmatprep.subr.mxu0 0.0
    %3271 = vmatpush1.msra.mxu0 0.0
    %3272 = vmatprep.subr.mxu0 0.0
    %3273 = vmatpush1.msra.mxu0 0.0
    %3274 = vmatprep.subr.mxu0 0.0
    %3275 = vmatpush1.msra.mxu0 0.0
    %3276 = vmatprep.subr.mxu0 0.0
    %3277 = vmatpush1.msra.mxu0 0.0
    %3278 = vmatprep.subr.mxu0 0.0
    %3279 = vmatpush1.msra.mxu0 0.0
    %3280 = vmatprep.subr.mxu0 0.0
    %3281 = vmatpush1.msra.mxu0 0.0
    %3282 = vmatprep.subr.mxu0 0.0
    %3283 = vmatpush1.msra.mxu0 0.0
    %3284 = vmatprep.subr.mxu0 0.0
    %3285 = vmatpush1.msra.mxu0 0.0
    %3286 = vmatprep.subr.mxu0 0.0
    %3287 = vmatpush1.msra.mxu0 0.0
    %3288 = vmatprep.subr.mxu0 0.0
    %3289 = vmatpush1.msra.mxu0 0.0
    %3290 = vmatprep.subr.mxu0 0.0
    %3291 = vmatpush1.msra.mxu0 0.0
    %3292 = vmatprep.subr.mxu0 0.0
    %3293 = vmatpush1.msra.mxu0 0.0
    %3294 = vmatprep.subr.mxu0 0.0
    %3295 = vmatpush1.msra.mxu0 0.0
    %3296 = vmatprep.subr.mxu0 0.0
    %3297 = vmatpush1.msra.mxu0 0.0
    %3298 = vmatprep.mubr.f32.mxu0 0.0
    %3299 = vmatmul.mubr.f32.gmra.mrb[0].mxu0 %v3163
    %v3300 = vpop.f32.mrb[0].mxu0
    %v3301 = vadd.f32 0.0, %v3300
    %v3302 = vpop.f32.mrb[0].mxu0
    %v3303 = vadd.f32 0.0, %v3302
    %3304 = vdwg.mxu0
    %3305 = vmatprep.subr.mxu0 %v3173
    %3306 = vmatpush1.msra.mxu0 %v3172
    %3307 = vmatprep.subr.mxu0 %v3177
    %3308 = vmatpush1.msra.mxu0 %v3176
    %3309 = vmatprep.subr.mxu0 %v3181
    %3310 = vmatpush1.msra.mxu0 %v3180
    %3311 = vmatprep.subr.mxu0 %v3185
    %3312 = vmatpush1.msra.mxu0 %v3184
    %3313 = vmatprep.subr.mxu0 %v3189
    %3314 = vmatpush1.msra.mxu0 %v3188
    %3315 = vmatprep.subr.mxu0 %v3193
    %3316 = vmatpush1.msra.mxu0 %v3192
    %3317 = vmatprep.subr.mxu0 %v3197
    %3318 = vmatpush1.msra.mxu0 %v3196
    %3319 = vmatprep.subr.mxu0 %v3201
    %3320 = vmatpush1.msra.mxu0 %v3200
    %3321 = vmatprep.subr.mxu0 %v3205
    %3322 = vmatpush1.msra.mxu0 %v3204
    %3323 = vmatprep.subr.mxu0 %v3209
    %3324 = vmatpush1.msra.mxu0 %v3208
    %3325 = vmatprep.subr.mxu0 %v3213
    %3326 = vmatpush1.msra.mxu0 %v3212
    %3327 = vmatprep.subr.mxu0 %v3217
    %3328 = vmatpush1.msra.mxu0 %v3216
    %3329 = vmatprep.subr.mxu0 %v3221
    %3330 = vmatpush1.msra.mxu0 %v3220
    %3331 = vmatprep.subr.mxu0 %v3225
    %3332 = vmatpush1.msra.mxu0 %v3224
    %3333 = vmatprep.subr.mxu0 %v3229
    %3334 = vmatpush1.msra.mxu0 %v3228
    %3335 = vmatprep.subr.mxu0 %v3233
    %3336 = vmatpush1.msra.mxu0 %v3232
    %3337 = vmatprep.subr.mxu0 0.0
    %3338 = vmatpush1.msra.mxu0 0.0
    %3339 = vmatprep.subr.mxu0 0.0
    %3340 = vmatpush1.msra.mxu0 0.0
    %3341 = vmatprep.subr.mxu0 0.0
    %3342 = vmatpush1.msra.mxu0 0.0
    %3343 = vmatprep.subr.mxu0 0.0
    %3344 = vmatpush1.msra.mxu0 0.0
    %3345 = vmatprep.subr.mxu0 0.0
    %3346 = vmatpush1.msra.mxu0 0.0
    %3347 = vmatprep.subr.mxu0 0.0
    %3348 = vmatpush1.msra.mxu0 0.0
    %3349 = vmatprep.subr.mxu0 0.0
    %3350 = vmatpush1.msra.mxu0 0.0
    %3351 = vmatprep.subr.mxu0 0.0
    %3352 = vmatpush1.msra.mxu0 0.0
    %3353 = vmatprep.subr.mxu0 0.0
    %3354 = vmatpush1.msra.mxu0 0.0
    %3355 = vmatprep.subr.mxu0 0.0
    %3356 = vmatpush1.msra.mxu0 0.0
    %3357 = vmatprep.subr.mxu0 0.0
    %3358 = vmatpush1.msra.mxu0 0.0
    %3359 = vmatprep.subr.mxu0 0.0
    %3360 = vmatpush1.msra.mxu0 0.0
    %3361 = vmatprep.subr.mxu0 0.0
    %3362 = vmatpush1.msra.mxu0 0.0
    %3363 = vmatprep.subr.mxu0 0.0
    %3364 = vmatpush1.msra.mxu0 0.0
    %3365 = vmatprep.subr.mxu0 0.0
    %3366 = vmatpush1.msra.mxu0 0.0
    %3367 = vmatprep.subr.mxu0 0.0
    %3368 = vmatpush1.msra.mxu0 0.0
    %3369 = vmatprep.mubr.f32.mxu0 0.0
    %3370 = vmatmul.mubr.f32.gmra.mrb[0].mxu0 %v3163
    %v3371 = vpop.f32.mrb[0].mxu0
    %v3372 = vadd.f32 0.0, %v3371
    %v3373 = vpop.f32.mrb[0].mxu0
    %v3374 = vadd.f32 0.0, %v3373
    %3375 = vdwg.mxu0
    %v3376 = vadd.f32 %v3166, %v3301
    %v3377 = vadd.f32 %v3167, %v3303
    %v3378 = vadd.f32 %v3168, %v3372
    %v3379 = vadd.f32 %v3169, %v3374
    %v3380 = vxor.u32 %v3376, 2147483648
    %v3381 = vmul.f32 %v3380, 1.442695
    %v3382 = vpow.pop %v3381
    %v3383 = vadd.f32 %v3382, 1.0
    %v3384 = vrcp.pop %v3383
    %v3385 = vmul.f32 1.0, %v3384
    %v3386 = vxor.u32 %v3377, 2147483648
    %v3387 = vmul.f32 %v3386, 1.442695
    %v3388 = vpow.pop %v3387
    %v3389 = vadd.f32 %v3388, 1.0
    %v3390 = vrcp.pop %v3389
    %v3391 = vmul.f32 1.0, %v3390
    %v3392 = vtanh.pop %v3378
    %v3393 = vxor.u32 %v3379, 2147483648
    %v3394 = vmul.f32 %v3393, 1.442695
    %v3395 = vpow.pop %v3394
    %v3396 = vadd.f32 %v3395, 1.0
    %v3397 = vrcp.pop %v3396
    %v3398 = vmul.f32 1.0, %v3397
    %v3399 = vmul.f32 %v3391, %v3161
    %v3400 = vmul.f32 %v3385, %v3392
    %v3401 = vadd.f32 %v3399, %v3400
    %v3402 = vtanh.pop %v3401
    %v3403 = vmul.f32 %v3398, %v3402
    %s3404 = scalar_lea.vmem [#allocation4], 16
    %3405 = vst [vmem:[%s3404] sm:$0xff] %v3403
    %v3406 = vld [vmem:[%s1122] sm:$0xff]
    %v3407 = vld [vmem:[%s1122 + $0x8] sm:$0xff]
    %v3408 = vld [vmem:[%s1122 + $0x10] sm:$0xff]
    %v3409 = vld [vmem:[%s1122 + $0x18] sm:$0xff]
    %v3410 = vld [vmem:[#allocation10] sm:$0xff]
    %v3411 = vld [vmem:[#allocation10 + $0x8] sm:$0xff]
    %v3412 = vld [vmem:[#allocation10 + $0x10] sm:$0xff]
    %v3413 = vld [vmem:[#allocation10 + $0x18] sm:$0xff]
    %v3414 = vld [vmem:[#allocation10 + $0x20] sm:$0xff]
    %v3415 = vld [vmem:[#allocation10 + $0x28] sm:$0xff]
    %v3416 = vld [vmem:[#allocation10 + $0x30] sm:$0xff]
    %v3417 = vld [vmem:[#allocation10 + $0x38] sm:$0xff]
    %v3418 = vld [vmem:[#allocation10 + $0x40] sm:$0xff]
    %v3419 = vld [vmem:[#allocation10 + $0x48] sm:$0xff]
    %v3420 = vld [vmem:[#allocation10 + $0x50] sm:$0xff]
    %v3421 = vld [vmem:[#allocation10 + $0x58] sm:$0xff]
    %v3422 = vld [vmem:[#allocation10 + $0x60] sm:$0xff]
    %v3423 = vld [vmem:[#allocation10 + $0x68] sm:$0xff]
    %v3424 = vld [vmem:[#allocation10 + $0x70] sm:$0xff]
    %v3425 = vld [vmem:[#allocation10 + $0x78] sm:$0xff]
    %v3426 = vld [vmem:[#allocation10 + $0x80] sm:$0xff]
    %v3427 = vld [vmem:[#allocation10 + $0x88] sm:$0xff]
    %v3428 = vld [vmem:[#allocation10 + $0x90] sm:$0xff]
    %v3429 = vld [vmem:[#allocation10 + $0x98] sm:$0xff]
    %v3430 = vld [vmem:[#allocation10 + $0xa0] sm:$0xff]
    %v3431 = vld [vmem:[#allocation10 + $0xa8] sm:$0xff]
    %v3432 = vld [vmem:[#allocation10 + $0xb0] sm:$0xff]
    %v3433 = vld [vmem:[#allocation10 + $0xb8] sm:$0xff]
    %v3434 = vld [vmem:[#allocation10 + $0xc0] sm:$0xff]
    %v3435 = vld [vmem:[#allocation10 + $0xc8] sm:$0xff]
    %v3436 = vld [vmem:[#allocation10 + $0xd0] sm:$0xff]
    %v3437 = vld [vmem:[#allocation10 + $0xd8] sm:$0xff]
    %v3438 = vld [vmem:[#allocation10 + $0xe0] sm:$0xff]
    %v3439 = vld [vmem:[#allocation10 + $0xe8] sm:$0xff]
    %v3440 = vld [vmem:[#allocation10 + $0xf0] sm:$0xff]
    %v3441 = vld [vmem:[#allocation10 + $0xf8] sm:$0xff]
    %v3442 = vld [vmem:[#allocation10 + $0x100] sm:$0xff]
    %v3443 = vld [vmem:[#allocation10 + $0x108] sm:$0xff]
    %v3444 = vld [vmem:[#allocation10 + $0x110] sm:$0xff]
    %v3445 = vld [vmem:[#allocation10 + $0x118] sm:$0xff]
    %v3446 = vld [vmem:[#allocation10 + $0x120] sm:$0xff]
    %v3447 = vld [vmem:[#allocation10 + $0x128] sm:$0xff]
    %v3448 = vld [vmem:[#allocation10 + $0x130] sm:$0xff]
    %v3449 = vld [vmem:[#allocation10 + $0x138] sm:$0xff]
    %v3450 = vld [vmem:[#allocation10 + $0x140] sm:$0xff]
    %v3451 = vld [vmem:[#allocation10 + $0x148] sm:$0xff]
    %v3452 = vld [vmem:[#allocation10 + $0x150] sm:$0xff]
    %v3453 = vld [vmem:[#allocation10 + $0x158] sm:$0xff]
    %v3454 = vld [vmem:[#allocation10 + $0x160] sm:$0xff]
    %v3455 = vld [vmem:[#allocation10 + $0x168] sm:$0xff]
    %v3456 = vld [vmem:[#allocation10 + $0x170] sm:$0xff]
    %v3457 = vld [vmem:[#allocation10 + $0x178] sm:$0xff]
    %v3458 = vld [vmem:[#allocation10 + $0x180] sm:$0xff]
    %v3459 = vld [vmem:[#allocation10 + $0x188] sm:$0xff]
    %v3460 = vld [vmem:[#allocation10 + $0x190] sm:$0xff]
    %v3461 = vld [vmem:[#allocation10 + $0x198] sm:$0xff]
    %v3462 = vld [vmem:[#allocation10 + $0x1a0] sm:$0xff]
    %v3463 = vld [vmem:[#allocation10 + $0x1a8] sm:$0xff]
    %v3464 = vld [vmem:[#allocation10 + $0x1b0] sm:$0xff]
    %v3465 = vld [vmem:[#allocation10 + $0x1b8] sm:$0xff]
    %v3466 = vld [vmem:[#allocation10 + $0x1c0] sm:$0xff]
    %v3467 = vld [vmem:[#allocation10 + $0x1c8] sm:$0xff]
    %v3468 = vld [vmem:[#allocation10 + $0x1d0] sm:$0xff]
    %v3469 = vld [vmem:[#allocation10 + $0x1d8] sm:$0xff]
    %v3470 = vld [vmem:[#allocation10 + $0x1e0] sm:$0xff]
    %v3471 = vld [vmem:[#allocation10 + $0x1e8] sm:$0xff]
    %v3472 = vld [vmem:[#allocation10 + $0x1f0] sm:$0xff]
    %v3473 = vld [vmem:[#allocation10 + $0x1f8] sm:$0xff]
    %3474 = vmatprep.subr.mxu0 %v3411
    %3475 = vmatpush1.msra.mxu0 %v3410
    %3476 = vmatprep.subr.mxu0 %v3415
    %3477 = vmatpush1.msra.mxu0 %v3414
    %3478 = vmatprep.subr.mxu0 %v3419
    %3479 = vmatpush1.msra.mxu0 %v3418
    %3480 = vmatprep.subr.mxu0 %v3423
    %3481 = vmatpush1.msra.mxu0 %v3422
    %3482 = vmatprep.subr.mxu0 %v3427
    %3483 = vmatpush1.msra.mxu0 %v3426
    %3484 = vmatprep.subr.mxu0 %v3431
    %3485 = vmatpush1.msra.mxu0 %v3430
    %3486 = vmatprep.subr.mxu0 %v3435
    %3487 = vmatpush1.msra.mxu0 %v3434
    %3488 = vmatprep.subr.mxu0 %v3439
    %3489 = vmatpush1.msra.mxu0 %v3438
    %3490 = vmatprep.subr.mxu0 %v3443
    %3491 = vmatpush1.msra.mxu0 %v3442
    %3492 = vmatprep.subr.mxu0 %v3447
    %3493 = vmatpush1.msra.mxu0 %v3446
    %3494 = vmatprep.subr.mxu0 %v3451
    %3495 = vmatpush1.msra.mxu0 %v3450
    %3496 = vmatprep.subr.mxu0 %v3455
    %3497 = vmatpush1.msra.mxu0 %v3454
    %3498 = vmatprep.subr.mxu0 %v3459
    %3499 = vmatpush1.msra.mxu0 %v3458
    %3500 = vmatprep.subr.mxu0 %v3463
    %3501 = vmatpush1.msra.mxu0 %v3462
    %3502 = vmatprep.subr.mxu0 %v3467
    %3503 = vmatpush1.msra.mxu0 %v3466
    %3504 = vmatprep.subr.mxu0 %v3471
    %3505 = vmatpush1.msra.mxu0 %v3470
    %3506 = vmatprep.subr.mxu0 0.0
    %3507 = vmatpush1.msra.mxu0 0.0
    %3508 = vmatprep.subr.mxu0 0.0
    %3509 = vmatpush1.msra.mxu0 0.0
    %3510 = vmatprep.subr.mxu0 0.0
    %3511 = vmatpush1.msra.mxu0 0.0
    %3512 = vmatprep.subr.mxu0 0.0
    %3513 = vmatpush1.msra.mxu0 0.0
    %3514 = vmatprep.subr.mxu0 0.0
    %3515 = vmatpush1.msra.mxu0 0.0
    %3516 = vmatprep.subr.mxu0 0.0
    %3517 = vmatpush1.msra.mxu0 0.0
    %3518 = vmatprep.subr.mxu0 0.0
    %3519 = vmatpush1.msra.mxu0 0.0
    %3520 = vmatprep.subr.mxu0 0.0
    %3521 = vmatpush1.msra.mxu0 0.0
    %3522 = vmatprep.subr.mxu0 0.0
    %3523 = vmatpush1.msra.mxu0 0.0
    %3524 = vmatprep.subr.mxu0 0.0
    %3525 = vmatpush1.msra.mxu0 0.0
    %3526 = vmatprep.subr.mxu0 0.0
    %3527 = vmatpush1.msra.mxu0 0.0
    %3528 = vmatprep.subr.mxu0 0.0
    %3529 = vmatpush1.msra.mxu0 0.0
    %3530 = vmatprep.subr.mxu0 0.0
    %3531 = vmatpush1.msra.mxu0 0.0
    %3532 = vmatprep.subr.mxu0 0.0
    %3533 = vmatpush1.msra.mxu0 0.0
    %3534 = vmatprep.subr.mxu0 0.0
    %3535 = vmatpush1.msra.mxu0 0.0
    %3536 = vmatprep.subr.mxu0 0.0
    %3537 = vmatpush1.msra.mxu0 0.0
    %3538 = vmatprep.mubr.f32.mxu0 0.0
    %3539 = vmatmul.mubr.f32.gmra.mrb[0].mxu0 %v3403
    %v3540 = vpop.f32.mrb[0].mxu0
    %v3541 = vadd.f32 0.0, %v3540
    %v3542 = vpop.f32.mrb[0].mxu0
    %v3543 = vadd.f32 0.0, %v3542
    %3544 = vdwg.mxu0
    %3545 = vmatprep.subr.mxu0 %v3413
    %3546 = vmatpush1.msra.mxu0 %v3412
    %3547 = vmatprep.subr.mxu0 %v3417
    %3548 = vmatpush1.msra.mxu0 %v3416
    %3549 = vmatprep.subr.mxu0 %v3421
    %3550 = vmatpush1.msra.mxu0 %v3420
    %3551 = vmatprep.subr.mxu0 %v3425
    %3552 = vmatpush1.msra.mxu0 %v3424
    %3553 = vmatprep.subr.mxu0 %v3429
    %3554 = vmatpush1.msra.mxu0 %v3428
    %3555 = vmatprep.subr.mxu0 %v3433
    %3556 = vmatpush1.msra.mxu0 %v3432
    %3557 = vmatprep.subr.mxu0 %v3437
    %3558 = vmatpush1.msra.mxu0 %v3436
    %3559 = vmatprep.subr.mxu0 %v3441
    %3560 = vmatpush1.msra.mxu0 %v3440
    %3561 = vmatprep.subr.mxu0 %v3445
    %3562 = vmatpush1.msra.mxu0 %v3444
    %3563 = vmatprep.subr.mxu0 %v3449
    %3564 = vmatpush1.msra.mxu0 %v3448
    %3565 = vmatprep.subr.mxu0 %v3453
    %3566 = vmatpush1.msra.mxu0 %v3452
    %3567 = vmatprep.subr.mxu0 %v3457
    %3568 = vmatpush1.msra.mxu0 %v3456
    %3569 = vmatprep.subr.mxu0 %v3461
    %3570 = vmatpush1.msra.mxu0 %v3460
    %3571 = vmatprep.subr.mxu0 %v3465
    %3572 = vmatpush1.msra.mxu0 %v3464
    %3573 = vmatprep.subr.mxu0 %v3469
    %3574 = vmatpush1.msra.mxu0 %v3468
    %3575 = vmatprep.subr.mxu0 %v3473
    %3576 = vmatpush1.msra.mxu0 %v3472
    %3577 = vmatprep.subr.mxu0 0.0
    %3578 = vmatpush1.msra.mxu0 0.0
    %3579 = vmatprep.subr.mxu0 0.0
    %3580 = vmatpush1.msra.mxu0 0.0
    %3581 = vmatprep.subr.mxu0 0.0
    %3582 = vmatpush1.msra.mxu0 0.0
    %3583 = vmatprep.subr.mxu0 0.0
    %3584 = vmatpush1.msra.mxu0 0.0
    %3585 = vmatprep.subr.mxu0 0.0
    %3586 = vmatpush1.msra.mxu0 0.0
    %3587 = vmatprep.subr.mxu0 0.0
    %3588 = vmatpush1.msra.mxu0 0.0
    %3589 = vmatprep.subr.mxu0 0.0
    %3590 = vmatpush1.msra.mxu0 0.0
    %3591 = vmatprep.subr.mxu0 0.0
    %3592 = vmatpush1.msra.mxu0 0.0
    %3593 = vmatprep.subr.mxu0 0.0
    %3594 = vmatpush1.msra.mxu0 0.0
    %3595 = vmatprep.subr.mxu0 0.0
    %3596 = vmatpush1.msra.mxu0 0.0
    %3597 = vmatprep.subr.mxu0 0.0
    %3598 = vmatpush1.msra.mxu0 0.0
    %3599 = vmatprep.subr.mxu0 0.0
    %3600 = vmatpush1.msra.mxu0 0.0
    %3601 = vmatprep.subr.mxu0 0.0
    %3602 = vmatpush1.msra.mxu0 0.0
    %3603 = vmatprep.subr.mxu0 0.0
    %3604 = vmatpush1.msra.mxu0 0.0
    %3605 = vmatprep.subr.mxu0 0.0
    %3606 = vmatpush1.msra.mxu0 0.0
    %3607 = vmatprep.subr.mxu0 0.0
    %3608 = vmatpush1.msra.mxu0 0.0
    %3609 = vmatprep.mubr.f32.mxu0 0.0
    %3610 = vmatmul.mubr.f32.gmra.mrb[0].mxu0 %v3403
    %v3611 = vpop.f32.mrb[0].mxu0
    %v3612 = vadd.f32 0.0, %v3611
    %v3613 = vpop.f32.mrb[0].mxu0
    %v3614 = vadd.f32 0.0, %v3613
    %3615 = vdwg.mxu0
    %v3616 = vadd.f32 %v3406, %v3541
    %v3617 = vadd.f32 %v3407, %v3543
    %v3618 = vadd.f32 %v3408, %v3612
    %v3619 = vadd.f32 %v3409, %v3614
    %v3620 = vxor.u32 %v3616, 2147483648
    %v3621 = vmul.f32 %v3620, 1.442695
    %v3622 = vpow.pop %v3621
    %v3623 = vadd.f32 %v3622, 1.0
    %v3624 = vrcp.pop %v3623
    %v3625 = vmul.f32 1.0, %v3624
    %v3626 = vxor.u32 %v3617, 2147483648
    %v3627 = vmul.f32 %v3626, 1.442695
    %v3628 = vpow.pop %v3627
    %v3629 = vadd.f32 %v3628, 1.0
    %v3630 = vrcp.pop %v3629
    %v3631 = vmul.f32 1.0, %v3630
    %v3632 = vtanh.pop %v3618
    %v3633 = vxor.u32 %v3619, 2147483648
    %v3634 = vmul.f32 %v3633, 1.442695
    %v3635 = vpow.pop %v3634
    %v3636 = vadd.f32 %v3635, 1.0
    %v3637 = vrcp.pop %v3636
    %v3638 = vmul.f32 1.0, %v3637
    %v3639 = vmul.f32 %v3631, %v3401
    %v3640 = vmul.f32 %v3625, %v3632
    %v3641 = vadd.f32 %v3639, %v3640
    %v3642 = vtanh.pop %v3641
    %v3643 = vmul.f32 %v3638, %v3642
    %s3644 = scalar_lea.vmem [#allocation4], 24
    %3645 = vst [vmem:[%s3644] sm:$0xff] %v3643
    %v3646 = vld [vmem:[%s1365] sm:$0xff]
    %v3647 = vld [vmem:[%s1365 + $0x8] sm:$0xff]
    %v3648 = vld [vmem:[%s1365 + $0x10] sm:$0xff]
    %v3649 = vld [vmem:[%s1365 + $0x18] sm:$0xff]
    %v3650 = vld [vmem:[#allocation10] sm:$0xff]
    %v3651 = vld [vmem:[#allocation10 + $0x8] sm:$0xff]
    %v3652 = vld [vmem:[#allocation10 + $0x10] sm:$0xff]
    %v3653 = vld [vmem:[#allocation10 + $0x18] sm:$0xff]
    %v3654 = vld [vmem:[#allocation10 + $0x20] sm:$0xff]
    %v3655 = vld [vmem:[#allocation10 + $0x28] sm:$0xff]
    %v3656 = vld [vmem:[#allocation10 + $0x30] sm:$0xff]
    %v3657 = vld [vmem:[#allocation10 + $0x38] sm:$0xff]
    %v3658 = vld [vmem:[#allocation10 + $0x40] sm:$0xff]
    %v3659 = vld [vmem:[#allocation10 + $0x48] sm:$0xff]
    %v3660 = vld [vmem:[#allocation10 + $0x50] sm:$0xff]
    %v3661 = vld [vmem:[#allocation10 + $0x58] sm:$0xff]
    %v3662 = vld [vmem:[#allocation10 + $0x60] sm:$0xff]
    %v3663 = vld [vmem:[#allocation10 + $0x68] sm:$0xff]
    %v3664 = vld [vmem:[#allocation10 + $0x70] sm:$0xff]
    %v3665 = vld [vmem:[#allocation10 + $0x78] sm:$0xff]
    %v3666 = vld [vmem:[#allocation10 + $0x80] sm:$0xff]
    %v3667 = vld [vmem:[#allocation10 + $0x88] sm:$0xff]
    %v3668 = vld [vmem:[#allocation10 + $0x90] sm:$0xff]
    %v3669 = vld [vmem:[#allocation10 + $0x98] sm:$0xff]
    %v3670 = vld [vmem:[#allocation10 + $0xa0] sm:$0xff]
    %v3671 = vld [vmem:[#allocation10 + $0xa8] sm:$0xff]
    %v3672 = vld [vmem:[#allocation10 + $0xb0] sm:$0xff]
    %v3673 = vld [vmem:[#allocation10 + $0xb8] sm:$0xff]
    %v3674 = vld [vmem:[#allocation10 + $0xc0] sm:$0xff]
    %v3675 = vld [vmem:[#allocation10 + $0xc8] sm:$0xff]
    %v3676 = vld [vmem:[#allocation10 + $0xd0] sm:$0xff]
    %v3677 = vld [vmem:[#allocation10 + $0xd8] sm:$0xff]
    %v3678 = vld [vmem:[#allocation10 + $0xe0] sm:$0xff]
    %v3679 = vld [vmem:[#allocation10 + $0xe8] sm:$0xff]
    %v3680 = vld [vmem:[#allocation10 + $0xf0] sm:$0xff]
    %v3681 = vld [vmem:[#allocation10 + $0xf8] sm:$0xff]
    %v3682 = vld [vmem:[#allocation10 + $0x100] sm:$0xff]
    %v3683 = vld [vmem:[#allocation10 + $0x108] sm:$0xff]
    %v3684 = vld [vmem:[#allocation10 + $0x110] sm:$0xff]
    %v3685 = vld [vmem:[#allocation10 + $0x118] sm:$0xff]
    %v3686 = vld [vmem:[#allocation10 + $0x120] sm:$0xff]
    %v3687 = vld [vmem:[#allocation10 + $0x128] sm:$0xff]
    %v3688 = vld [vmem:[#allocation10 + $0x130] sm:$0xff]
    %v3689 = vld [vmem:[#allocation10 + $0x138] sm:$0xff]
    %v3690 = vld [vmem:[#allocation10 + $0x140] sm:$0xff]
    %v3691 = vld [vmem:[#allocation10 + $0x148] sm:$0xff]
    %v3692 = vld [vmem:[#allocation10 + $0x150] sm:$0xff]
    %v3693 = vld [vmem:[#allocation10 + $0x158] sm:$0xff]
    %v3694 = vld [vmem:[#allocation10 + $0x160] sm:$0xff]
    %v3695 = vld [vmem:[#allocation10 + $0x168] sm:$0xff]
    %v3696 = vld [vmem:[#allocation10 + $0x170] sm:$0xff]
    %v3697 = vld [vmem:[#allocation10 + $0x178] sm:$0xff]
    %v3698 = vld [vmem:[#allocation10 + $0x180] sm:$0xff]
    %v3699 = vld [vmem:[#allocation10 + $0x188] sm:$0xff]
    %v3700 = vld [vmem:[#allocation10 + $0x190] sm:$0xff]
    %v3701 = vld [vmem:[#allocation10 + $0x198] sm:$0xff]
    %v3702 = vld [vmem:[#allocation10 + $0x1a0] sm:$0xff]
    %v3703 = vld [vmem:[#allocation10 + $0x1a8] sm:$0xff]
    %v3704 = vld [vmem:[#allocation10 + $0x1b0] sm:$0xff]
    %v3705 = vld [vmem:[#allocation10 + $0x1b8] sm:$0xff]
    %v3706 = vld [vmem:[#allocation10 + $0x1c0] sm:$0xff]
    %v3707 = vld [vmem:[#allocation10 + $0x1c8] sm:$0xff]
    %v3708 = vld [vmem:[#allocation10 + $0x1d0] sm:$0xff]
    %v3709 = vld [vmem:[#allocation10 + $0x1d8] sm:$0xff]
    %v3710 = vld [vmem:[#allocation10 + $0x1e0] sm:$0xff]
    %v3711 = vld [vmem:[#allocation10 + $0x1e8] sm:$0xff]
    %v3712 = vld [vmem:[#allocation10 + $0x1f0] sm:$0xff]
    %v3713 = vld [vmem:[#allocation10 + $0x1f8] sm:$0xff]
    %3714 = vmatprep.subr.mxu0 %v3651
    %3715 = vmatpush1.msra.mxu0 %v3650
    %3716 = vmatprep.subr.mxu0 %v3655
    %3717 = vmatpush1.msra.mxu0 %v3654
    %3718 = vmatprep.subr.mxu0 %v3659
    %3719 = vmatpush1.msra.mxu0 %v3658
    %3720 = vmatprep.subr.mxu0 %v3663
    %3721 = vmatpush1.msra.mxu0 %v3662
    %3722 = vmatprep.subr.mxu0 %v3667
    %3723 = vmatpush1.msra.mxu0 %v3666
    %3724 = vmatprep.subr.mxu0 %v3671
    %3725 = vmatpush1.msra.mxu0 %v3670
    %3726 = vmatprep.subr.mxu0 %v3675
    %3727 = vmatpush1.msra.mxu0 %v3674
    %3728 = vmatprep.subr.mxu0 %v3679
    %3729 = vmatpush1.msra.mxu0 %v3678
    %3730 = vmatprep.subr.mxu0 %v3683
    %3731 = vmatpush1.msra.mxu0 %v3682
    %3732 = vmatprep.subr.mxu0 %v3687
    %3733 = vmatpush1.msra.mxu0 %v3686
    %3734 = vmatprep.subr.mxu0 %v3691
    %3735 = vmatpush1.msra.mxu0 %v3690
    %3736 = vmatprep.subr.mxu0 %v3695
    %3737 = vmatpush1.msra.mxu0 %v3694
    %3738 = vmatprep.subr.mxu0 %v3699
    %3739 = vmatpush1.msra.mxu0 %v3698
    %3740 = vmatprep.subr.mxu0 %v3703
    %3741 = vmatpush1.msra.mxu0 %v3702
    %3742 = vmatprep.subr.mxu0 %v3707
    %3743 = vmatpush1.msra.mxu0 %v3706
    %3744 = vmatprep.subr.mxu0 %v3711
    %3745 = vmatpush1.msra.mxu0 %v3710
    %3746 = vmatprep.subr.mxu0 0.0
    %3747 = vmatpush1.msra.mxu0 0.0
    %3748 = vmatprep.subr.mxu0 0.0
    %3749 = vmatpush1.msra.mxu0 0.0
    %3750 = vmatprep.subr.mxu0 0.0
    %3751 = vmatpush1.msra.mxu0 0.0
    %3752 = vmatprep.subr.mxu0 0.0
    %3753 = vmatpush1.msra.mxu0 0.0
    %3754 = vmatprep.subr.mxu0 0.0
    %3755 = vmatpush1.msra.mxu0 0.0
    %3756 = vmatprep.subr.mxu0 0.0
    %3757 = vmatpush1.msra.mxu0 0.0
    %3758 = vmatprep.subr.mxu0 0.0
    %3759 = vmatpush1.msra.mxu0 0.0
    %3760 = vmatprep.subr.mxu0 0.0
    %3761 = vmatpush1.msra.mxu0 0.0
    %3762 = vmatprep.subr.mxu0 0.0
    %3763 = vmatpush1.msra.mxu0 0.0
    %3764 = vmatprep.subr.mxu0 0.0
    %3765 = vmatpush1.msra.mxu0 0.0
    %3766 = vmatprep.subr.mxu0 0.0
    %3767 = vmatpush1.msra.mxu0 0.0
    %3768 = vmatprep.subr.mxu0 0.0
    %3769 = vmatpush1.msra.mxu0 0.0
    %3770 = vmatprep.subr.mxu0 0.0
    %3771 = vmatpush1.msra.mxu0 0.0
    %3772 = vmatprep.subr.mxu0 0.0
    %3773 = vmatpush1.msra.mxu0 0.0
    %3774 = vmatprep.subr.mxu0 0.0
    %3775 = vmatpush1.msra.mxu0 0.0
    %3776 = vmatprep.subr.mxu0 0.0
    %3777 = vmatpush1.msra.mxu0 0.0
    %3778 = vmatprep.mubr.f32.mxu0 0.0
    %3779 = vmatmul.mubr.f32.gmra.mrb[0].mxu0 %v3643
    %v3780 = vpop.f32.mrb[0].mxu0
    %v3781 = vadd.f32 0.0, %v3780
    %v3782 = vpop.f32.mrb[0].mxu0
    %v3783 = vadd.f32 0.0, %v3782
    %3784 = vdwg.mxu0
    %3785 = vmatprep.subr.mxu0 %v3653
    %3786 = vmatpush1.msra.mxu0 %v3652
    %3787 = vmatprep.subr.mxu0 %v3657
    %3788 = vmatpush1.msra.mxu0 %v3656
    %3789 = vmatprep.subr.mxu0 %v3661
    %3790 = vmatpush1.msra.mxu0 %v3660
    %3791 = vmatprep.subr.mxu0 %v3665
    %3792 = vmatpush1.msra.mxu0 %v3664
    %3793 = vmatprep.subr.mxu0 %v3669
    %3794 = vmatpush1.msra.mxu0 %v3668
    %3795 = vmatprep.subr.mxu0 %v3673
    %3796 = vmatpush1.msra.mxu0 %v3672
    %3797 = vmatprep.subr.mxu0 %v3677
    %3798 = vmatpush1.msra.mxu0 %v3676
    %3799 = vmatprep.subr.mxu0 %v3681
    %3800 = vmatpush1.msra.mxu0 %v3680
    %3801 = vmatprep.subr.mxu0 %v3685
    %3802 = vmatpush1.msra.mxu0 %v3684
    %3803 = vmatprep.subr.mxu0 %v3689
    %3804 = vmatpush1.msra.mxu0 %v3688
    %3805 = vmatprep.subr.mxu0 %v3693
    %3806 = vmatpush1.msra.mxu0 %v3692
    %3807 = vmatprep.subr.mxu0 %v3697
    %3808 = vmatpush1.msra.mxu0 %v3696
    %3809 = vmatprep.subr.mxu0 %v3701
    %3810 = vmatpush1.msra.mxu0 %v3700
    %3811 = vmatprep.subr.mxu0 %v3705
    %3812 = vmatpush1.msra.mxu0 %v3704
    %3813 = vmatprep.subr.mxu0 %v3709
    %3814 = vmatpush1.msra.mxu0 %v3708
    %3815 = vmatprep.subr.mxu0 %v3713
    %3816 = vmatpush1.msra.mxu0 %v3712
    %3817 = vmatprep.subr.mxu0 0.0
    %3818 = vmatpush1.msra.mxu0 0.0
    %3819 = vmatprep.subr.mxu0 0.0
    %3820 = vmatpush1.msra.mxu0 0.0
    %3821 = vmatprep.subr.mxu0 0.0
    %3822 = vmatpush1.msra.mxu0 0.0
    %3823 = vmatprep.subr.mxu0 0.0
    %3824 = vmatpush1.msra.mxu0 0.0
    %3825 = vmatprep.subr.mxu0 0.0
    %3826 = vmatpush1.msra.mxu0 0.0
    %3827 = vmatprep.subr.mxu0 0.0
    %3828 = vmatpush1.msra.mxu0 0.0
    %3829 = vmatprep.subr.mxu0 0.0
    %3830 = vmatpush1.msra.mxu0 0.0
    %3831 = vmatprep.subr.mxu0 0.0
    %3832 = vmatpush1.msra.mxu0 0.0
    %3833 = vmatprep.subr.mxu0 0.0
    %3834 = vmatpush1.msra.mxu0 0.0
    %3835 = vmatprep.subr.mxu0 0.0
    %3836 = vmatpush1.msra.mxu0 0.0
    %3837 = vmatprep.subr.mxu0 0.0
    %3838 = vmatpush1.msra.mxu0 0.0
    %3839 = vmatprep.subr.mxu0 0.0
    %3840 = vmatpush1.msra.mxu0 0.0
    %3841 = vmatprep.subr.mxu0 0.0
    %3842 = vmatpush1.msra.mxu0 0.0
    %3843 = vmatprep.subr.mxu0 0.0
    %3844 = vmatpush1.msra.mxu0 0.0
    %3845 = vmatprep.subr.mxu0 0.0
    %3846 = vmatpush1.msra.mxu0 0.0
    %3847 = vmatprep.subr.mxu0 0.0
    %3848 = vmatpush1.msra.mxu0 0.0
    %3849 = vmatprep.mubr.f32.mxu0 0.0
    %3850 = vmatmul.mubr.f32.gmra.mrb[0].mxu0 %v3643
    %v3851 = vpop.f32.mrb[0].mxu0
    %v3852 = vadd.f32 0.0, %v3851
    %v3853 = vpop.f32.mrb[0].mxu0
    %v3854 = vadd.f32 0.0, %v3853
    %3855 = vdwg.mxu0
    %v3856 = vadd.f32 %v3646, %v3781
    %v3857 = vadd.f32 %v3647, %v3783
    %v3858 = vadd.f32 %v3648, %v3852
    %v3859 = vadd.f32 %v3649, %v3854
    %v3860 = vxor.u32 %v3856, 2147483648
    %v3861 = vmul.f32 %v3860, 1.442695
    %v3862 = vpow.pop %v3861
    %v3863 = vadd.f32 %v3862, 1.0
    %v3864 = vrcp.pop %v3863
    %v3865 = vmul.f32 1.0, %v3864
    %v3866 = vxor.u32 %v3857, 2147483648
    %v3867 = vmul.f32 %v3866, 1.442695
    %v3868 = vpow.pop %v3867
    %v3869 = vadd.f32 %v3868, 1.0
    %v3870 = vrcp.pop %v3869
    %v3871 = vmul.f32 1.0, %v3870
    %v3872 = vtanh.pop %v3858
    %v3873 = vxor.u32 %v3859, 2147483648
    %v3874 = vmul.f32 %v3873, 1.442695
    %v3875 = vpow.pop %v3874
    %v3876 = vadd.f32 %v3875, 1.0
    %v3877 = vrcp.pop %v3876
    %v3878 = vmul.f32 1.0, %v3877
    %v3879 = vmul.f32 %v3871, %v3641
    %v3880 = vmul.f32 %v3865, %v3872
    %v3881 = vadd.f32 %v3879, %v3880
    %v3882 = vtanh.pop %v3881
    %v3883 = vmul.f32 %v3878, %v3882
    %s3884 = scalar_lea.vmem [#allocation4], 32
    %3885 = vst [vmem:[%s3884] sm:$0xff] %v3883
    %v3886 = vld [vmem:[%s1608] sm:$0xff]
    %v3887 = vld [vmem:[%s1608 + $0x8] sm:$0xff]
    %v3888 = vld [vmem:[%s1608 + $0x10] sm:$0xff]
    %v3889 = vld [vmem:[%s1608 + $0x18] sm:$0xff]
    %v3890 = vld [vmem:[#allocation10] sm:$0xff]
    %v3891 = vld [vmem:[#allocation10 + $0x8] sm:$0xff]
    %v3892 = vld [vmem:[#allocation10 + $0x10] sm:$0xff]
    %v3893 = vld [vmem:[#allocation10 + $0x18] sm:$0xff]
    %v3894 = vld [vmem:[#allocation10 + $0x20] sm:$0xff]
    %v3895 = vld [vmem:[#allocation10 + $0x28] sm:$0xff]
    %v3896 = vld [vmem:[#allocation10 + $0x30] sm:$0xff]
    %v3897 = vld [vmem:[#allocation10 + $0x38] sm:$0xff]
    %v3898 = vld [vmem:[#allocation10 + $0x40] sm:$0xff]
    %v3899 = vld [vmem:[#allocation10 + $0x48] sm:$0xff]
    %v3900 = vld [vmem:[#allocation10 + $0x50] sm:$0xff]
    %v3901 = vld [vmem:[#allocation10 + $0x58] sm:$0xff]
    %v3902 = vld [vmem:[#allocation10 + $0x60] sm:$0xff]
    %v3903 = vld [vmem:[#allocation10 + $0x68] sm:$0xff]
    %v3904 = vld [vmem:[#allocation10 + $0x70] sm:$0xff]
    %v3905 = vld [vmem:[#allocation10 + $0x78] sm:$0xff]
    %v3906 = vld [vmem:[#allocation10 + $0x80] sm:$0xff]
    %v3907 = vld [vmem:[#allocation10 + $0x88] sm:$0xff]
    %v3908 = vld [vmem:[#allocation10 + $0x90] sm:$0xff]
    %v3909 = vld [vmem:[#allocation10 + $0x98] sm:$0xff]
    %v3910 = vld [vmem:[#allocation10 + $0xa0] sm:$0xff]
    %v3911 = vld [vmem:[#allocation10 + $0xa8] sm:$0xff]
    %v3912 = vld [vmem:[#allocation10 + $0xb0] sm:$0xff]
    %v3913 = vld [vmem:[#allocation10 + $0xb8] sm:$0xff]
    %v3914 = vld [vmem:[#allocation10 + $0xc0] sm:$0xff]
    %v3915 = vld [vmem:[#allocation10 + $0xc8] sm:$0xff]
    %v3916 = vld [vmem:[#allocation10 + $0xd0] sm:$0xff]
    %v3917 = vld [vmem:[#allocation10 + $0xd8] sm:$0xff]
    %v3918 = vld [vmem:[#allocation10 + $0xe0] sm:$0xff]
    %v3919 = vld [vmem:[#allocation10 + $0xe8] sm:$0xff]
    %v3920 = vld [vmem:[#allocation10 + $0xf0] sm:$0xff]
    %v3921 = vld [vmem:[#allocation10 + $0xf8] sm:$0xff]
    %v3922 = vld [vmem:[#allocation10 + $0x100] sm:$0xff]
    %v3923 = vld [vmem:[#allocation10 + $0x108] sm:$0xff]
    %v3924 = vld [vmem:[#allocation10 + $0x110] sm:$0xff]
    %v3925 = vld [vmem:[#allocation10 + $0x118] sm:$0xff]
    %v3926 = vld [vmem:[#allocation10 + $0x120] sm:$0xff]
    %v3927 = vld [vmem:[#allocation10 + $0x128] sm:$0xff]
    %v3928 = vld [vmem:[#allocation10 + $0x130] sm:$0xff]
    %v3929 = vld [vmem:[#allocation10 + $0x138] sm:$0xff]
    %v3930 = vld [vmem:[#allocation10 + $0x140] sm:$0xff]
    %v3931 = vld [vmem:[#allocation10 + $0x148] sm:$0xff]
    %v3932 = vld [vmem:[#allocation10 + $0x150] sm:$0xff]
    %v3933 = vld [vmem:[#allocation10 + $0x158] sm:$0xff]
    %v3934 = vld [vmem:[#allocation10 + $0x160] sm:$0xff]
    %v3935 = vld [vmem:[#allocation10 + $0x168] sm:$0xff]
    %v3936 = vld [vmem:[#allocation10 + $0x170] sm:$0xff]
    %v3937 = vld [vmem:[#allocation10 + $0x178] sm:$0xff]
    %v3938 = vld [vmem:[#allocation10 + $0x180] sm:$0xff]
    %v3939 = vld [vmem:[#allocation10 + $0x188] sm:$0xff]
    %v3940 = vld [vmem:[#allocation10 + $0x190] sm:$0xff]
    %v3941 = vld [vmem:[#allocation10 + $0x198] sm:$0xff]
    %v3942 = vld [vmem:[#allocation10 + $0x1a0] sm:$0xff]
    %v3943 = vld [vmem:[#allocation10 + $0x1a8] sm:$0xff]
    %v3944 = vld [vmem:[#allocation10 + $0x1b0] sm:$0xff]
    %v3945 = vld [vmem:[#allocation10 + $0x1b8] sm:$0xff]
    %v3946 = vld [vmem:[#allocation10 + $0x1c0] sm:$0xff]
    %v3947 = vld [vmem:[#allocation10 + $0x1c8] sm:$0xff]
    %v3948 = vld [vmem:[#allocation10 + $0x1d0] sm:$0xff]
    %v3949 = vld [vmem:[#allocation10 + $0x1d8] sm:$0xff]
    %v3950 = vld [vmem:[#allocation10 + $0x1e0] sm:$0xff]
    %v3951 = vld [vmem:[#allocation10 + $0x1e8] sm:$0xff]
    %v3952 = vld [vmem:[#allocation10 + $0x1f0] sm:$0xff]
    %v3953 = vld [vmem:[#allocation10 + $0x1f8] sm:$0xff]
    %3954 = vmatprep.subr.mxu0 %v3891
    %3955 = vmatpush1.msra.mxu0 %v3890
    %3956 = vmatprep.subr.mxu0 %v3895
    %3957 = vmatpush1.msra.mxu0 %v3894
    %3958 = vmatprep.subr.mxu0 %v3899
    %3959 = vmatpush1.msra.mxu0 %v3898
    %3960 = vmatprep.subr.mxu0 %v3903
    %3961 = vmatpush1.msra.mxu0 %v3902
    %3962 = vmatprep.subr.mxu0 %v3907
    %3963 = vmatpush1.msra.mxu0 %v3906
    %3964 = vmatprep.subr.mxu0 %v3911
    %3965 = vmatpush1.msra.mxu0 %v3910
    %3966 = vmatprep.subr.mxu0 %v3915
    %3967 = vmatpush1.msra.mxu0 %v3914
    %3968 = vmatprep.subr.mxu0 %v3919
    %3969 = vmatpush1.msra.mxu0 %v3918
    %3970 = vmatprep.subr.mxu0 %v3923
    %3971 = vmatpush1.msra.mxu0 %v3922
    %3972 = vmatprep.subr.mxu0 %v3927
    %3973 = vmatpush1.msra.mxu0 %v3926
    %3974 = vmatprep.subr.mxu0 %v3931
    %3975 = vmatpush1.msra.mxu0 %v3930
    %3976 = vmatprep.subr.mxu0 %v3935
    %3977 = vmatpush1.msra.mxu0 %v3934
    %3978 = vmatprep.subr.mxu0 %v3939
    %3979 = vmatpush1.msra.mxu0 %v3938
    %3980 = vmatprep.subr.mxu0 %v3943
    %3981 = vmatpush1.msra.mxu0 %v3942
    %3982 = vmatprep.subr.mxu0 %v3947
    %3983 = vmatpush1.msra.mxu0 %v3946
    %3984 = vmatprep.subr.mxu0 %v3951
    %3985 = vmatpush1.msra.mxu0 %v3950
    %3986 = vmatprep.subr.mxu0 0.0
    %3987 = vmatpush1.msra.mxu0 0.0
    %3988 = vmatprep.subr.mxu0 0.0
    %3989 = vmatpush1.msra.mxu0 0.0
    %3990 = vmatprep.subr.mxu0 0.0
    %3991 = vmatpush1.msra.mxu0 0.0
    %3992 = vmatprep.subr.mxu0 0.0
    %3993 = vmatpush1.msra.mxu0 0.0
    %3994 = vmatprep.subr.mxu0 0.0
    %3995 = vmatpush1.msra.mxu0 0.0
    %3996 = vmatprep.subr.mxu0 0.0
    %3997 = vmatpush1.msra.mxu0 0.0
    %3998 = vmatprep.subr.mxu0 0.0
    %3999 = vmatpush1.msra.mxu0 0.0
    %4000 = vmatprep.subr.mxu0 0.0
    %4001 = vmatpush1.msra.mxu0 0.0
    %4002 = vmatprep.subr.mxu0 0.0
    %4003 = vmatpush1.msra.mxu0 0.0
    %4004 = vmatprep.subr.mxu0 0.0
    %4005 = vmatpush1.msra.mxu0 0.0
    %4006 = vmatprep.subr.mxu0 0.0
    %4007 = vmatpush1.msra.mxu0 0.0
    %4008 = vmatprep.subr.mxu0 0.0
    %4009 = vmatpush1.msra.mxu0 0.0
    %4010 = vmatprep.subr.mxu0 0.0
    %4011 = vmatpush1.msra.mxu0 0.0
    %4012 = vmatprep.subr.mxu0 0.0
    %4013 = vmatpush1.msra.mxu0 0.0
    %4014 = vmatprep.subr.mxu0 0.0
    %4015 = vmatpush1.msra.mxu0 0.0
    %4016 = vmatprep.subr.mxu0 0.0
    %4017 = vmatpush1.msra.mxu0 0.0
    %4018 = vmatprep.mubr.f32.mxu0 0.0
    %4019 = vmatmul.mubr.f32.gmra.mrb[0].mxu0 %v3883
    %v4020 = vpop.f32.mrb[0].mxu0
    %v4021 = vadd.f32 0.0, %v4020
    %v4022 = vpop.f32.mrb[0].mxu0
    %v4023 = vadd.f32 0.0, %v4022
    %4024 = vdwg.mxu0
    %4025 = vmatprep.subr.mxu0 %v3893
    %4026 = vmatpush1.msra.mxu0 %v3892
    %4027 = vmatprep.subr.mxu0 %v3897
    %4028 = vmatpush1.msra.mxu0 %v3896
    %4029 = vmatprep.subr.mxu0 %v3901
    %4030 = vmatpush1.msra.mxu0 %v3900
    %4031 = vmatprep.subr.mxu0 %v3905
    %4032 = vmatpush1.msra.mxu0 %v3904
    %4033 = vmatprep.subr.mxu0 %v3909
    %4034 = vmatpush1.msra.mxu0 %v3908
    %4035 = vmatprep.subr.mxu0 %v3913
    %4036 = vmatpush1.msra.mxu0 %v3912
    %4037 = vmatprep.subr.mxu0 %v3917
    %4038 = vmatpush1.msra.mxu0 %v3916
    %4039 = vmatprep.subr.mxu0 %v3921
    %4040 = vmatpush1.msra.mxu0 %v3920
    %4041 = vmatprep.subr.mxu0 %v3925
    %4042 = vmatpush1.msra.mxu0 %v3924
    %4043 = vmatprep.subr.mxu0 %v3929
    %4044 = vmatpush1.msra.mxu0 %v3928
    %4045 = vmatprep.subr.mxu0 %v3933
    %4046 = vmatpush1.msra.mxu0 %v3932
    %4047 = vmatprep.subr.mxu0 %v3937
    %4048 = vmatpush1.msra.mxu0 %v3936
    %4049 = vmatprep.subr.mxu0 %v3941
    %4050 = vmatpush1.msra.mxu0 %v3940
    %4051 = vmatprep.subr.mxu0 %v3945
    %4052 = vmatpush1.msra.mxu0 %v3944
    %4053 = vmatprep.subr.mxu0 %v3949
    %4054 = vmatpush1.msra.mxu0 %v3948
    %4055 = vmatprep.subr.mxu0 %v3953
    %4056 = vmatpush1.msra.mxu0 %v3952
    %4057 = vmatprep.subr.mxu0 0.0
    %4058 = vmatpush1.msra.mxu0 0.0
    %4059 = vmatprep.subr.mxu0 0.0
    %4060 = vmatpush1.msra.mxu0 0.0
    %4061 = vmatprep.subr.mxu0 0.0
    %4062 = vmatpush1.msra.mxu0 0.0
    %4063 = vmatprep.subr.mxu0 0.0
    %4064 = vmatpush1.msra.mxu0 0.0
    %4065 = vmatprep.subr.mxu0 0.0
    %4066 = vmatpush1.msra.mxu0 0.0
    %4067 = vmatprep.subr.mxu0 0.0
    %4068 = vmatpush1.msra.mxu0 0.0
    %4069 = vmatprep.subr.mxu0 0.0
    %4070 = vmatpush1.msra.mxu0 0.0
    %4071 = vmatprep.subr.mxu0 0.0
    %4072 = vmatpush1.msra.mxu0 0.0
    %4073 = vmatprep.subr.mxu0 0.0
    %4074 = vmatpush1.msra.mxu0 0.0
    %4075 = vmatprep.subr.mxu0 0.0
    %4076 = vmatpush1.msra.mxu0 0.0
    %4077 = vmatprep.subr.mxu0 0.0
    %4078 = vmatpush1.msra.mxu0 0.0
    %4079 = vmatprep.subr.mxu0 0.0
    %4080 = vmatpush1.msra.mxu0 0.0
    %4081 = vmatprep.subr.mxu0 0.0
    %4082 = vmatpush1.msra.mxu0 0.0
    %4083 = vmatprep.subr.mxu0 0.0
    %4084 = vmatpush1.msra.mxu0 0.0
    %4085 = vmatprep.subr.mxu0 0.0
    %4086 = vmatpush1.msra.mxu0 0.0
    %4087 = vmatprep.subr.mxu0 0.0
    %4088 = vmatpush1.msra.mxu0 0.0
    %4089 = vmatprep.mubr.f32.mxu0 0.0
    %4090 = vmatmul.mubr.f32.gmra.mrb[0].mxu0 %v3883
    %v4091 = vpop.f32.mrb[0].mxu0
    %v4092 = vadd.f32 0.0, %v4091
    %v4093 = vpop.f32.mrb[0].mxu0
    %v4094 = vadd.f32 0.0, %v4093
    %4095 = vdwg.mxu0
    %v4096 = vadd.f32 %v3886, %v4021
    %v4097 = vadd.f32 %v3887, %v4023
    %v4098 = vadd.f32 %v3888, %v4092
    %v4099 = vadd.f32 %v3889, %v4094
    %v4100 = vxor.u32 %v4096, 2147483648
    %v4101 = vmul.f32 %v4100, 1.442695
    %v4102 = vpow.pop %v4101
    %v4103 = vadd.f32 %v4102, 1.0
    %v4104 = vrcp.pop %v4103
    %v4105 = vmul.f32 1.0, %v4104
    %v4106 = vxor.u32 %v4097, 2147483648
    %v4107 = vmul.f32 %v4106, 1.442695
    %v4108 = vpow.pop %v4107
    %v4109 = vadd.f32 %v4108, 1.0
    %v4110 = vrcp.pop %v4109
    %v4111 = vmul.f32 1.0, %v4110
    %v4112 = vtanh.pop %v4098
    %v4113 = vxor.u32 %v4099, 2147483648
    %v4114 = vmul.f32 %v4113, 1.442695
    %v4115 = vpow.pop %v4114
    %v4116 = vadd.f32 %v4115, 1.0
    %v4117 = vrcp.pop %v4116
    %v4118 = vmul.f32 1.0, %v4117
    %v4119 = vmul.f32 %v4111, %v3881
    %v4120 = vmul.f32 %v4105, %v4112
    %v4121 = vadd.f32 %v4119, %v4120
    %v4122 = vtanh.pop %v4121
    %v4123 = vmul.f32 %v4118, %v4122
    %s4124 = scalar_lea.vmem [#allocation4], 40
    %4125 = vst [vmem:[%s4124] sm:$0xff] %v4123
    %v4126 = vld [vmem:[%s1851] sm:$0xff]
    %v4127 = vld [vmem:[%s1851 + $0x8] sm:$0xff]
    %v4128 = vld [vmem:[%s1851 + $0x10] sm:$0xff]
    %v4129 = vld [vmem:[%s1851 + $0x18] sm:$0xff]
    %v4130 = vld [vmem:[#allocation10] sm:$0xff]
    %v4131 = vld [vmem:[#allocation10 + $0x8] sm:$0xff]
    %v4132 = vld [vmem:[#allocation10 + $0x10] sm:$0xff]
    %v4133 = vld [vmem:[#allocation10 + $0x18] sm:$0xff]
    %v4134 = vld [vmem:[#allocation10 + $0x20] sm:$0xff]
    %v4135 = vld [vmem:[#allocation10 + $0x28] sm:$0xff]
    %v4136 = vld [vmem:[#allocation10 + $0x30] sm:$0xff]
    %v4137 = vld [vmem:[#allocation10 + $0x38] sm:$0xff]
    %v4138 = vld [vmem:[#allocation10 + $0x40] sm:$0xff]
    %v4139 = vld [vmem:[#allocation10 + $0x48] sm:$0xff]
    %v4140 = vld [vmem:[#allocation10 + $0x50] sm:$0xff]
    %v4141 = vld [vmem:[#allocation10 + $0x58] sm:$0xff]
    %v4142 = vld [vmem:[#allocation10 + $0x60] sm:$0xff]
    %v4143 = vld [vmem:[#allocation10 + $0x68] sm:$0xff]
    %v4144 = vld [vmem:[#allocation10 + $0x70] sm:$0xff]
    %v4145 = vld [vmem:[#allocation10 + $0x78] sm:$0xff]
    %v4146 = vld [vmem:[#allocation10 + $0x80] sm:$0xff]
    %v4147 = vld [vmem:[#allocation10 + $0x88] sm:$0xff]
    %v4148 = vld [vmem:[#allocation10 + $0x90] sm:$0xff]
    %v4149 = vld [vmem:[#allocation10 + $0x98] sm:$0xff]
    %v4150 = vld [vmem:[#allocation10 + $0xa0] sm:$0xff]
    %v4151 = vld [vmem:[#allocation10 + $0xa8] sm:$0xff]
    %v4152 = vld [vmem:[#allocation10 + $0xb0] sm:$0xff]
    %v4153 = vld [vmem:[#allocation10 + $0xb8] sm:$0xff]
    %v4154 = vld [vmem:[#allocation10 + $0xc0] sm:$0xff]
    %v4155 = vld [vmem:[#allocation10 + $0xc8] sm:$0xff]
    %v4156 = vld [vmem:[#allocation10 + $0xd0] sm:$0xff]
    %v4157 = vld [vmem:[#allocation10 + $0xd8] sm:$0xff]
    %v4158 = vld [vmem:[#allocation10 + $0xe0] sm:$0xff]
    %v4159 = vld [vmem:[#allocation10 + $0xe8] sm:$0xff]
    %v4160 = vld [vmem:[#allocation10 + $0xf0] sm:$0xff]
    %v4161 = vld [vmem:[#allocation10 + $0xf8] sm:$0xff]
    %v4162 = vld [vmem:[#allocation10 + $0x100] sm:$0xff]
    %v4163 = vld [vmem:[#allocation10 + $0x108] sm:$0xff]
    %v4164 = vld [vmem:[#allocation10 + $0x110] sm:$0xff]
    %v4165 = vld [vmem:[#allocation10 + $0x118] sm:$0xff]
    %v4166 = vld [vmem:[#allocation10 + $0x120] sm:$0xff]
    %v4167 = vld [vmem:[#allocation10 + $0x128] sm:$0xff]
    %v4168 = vld [vmem:[#allocation10 + $0x130] sm:$0xff]
    %v4169 = vld [vmem:[#allocation10 + $0x138] sm:$0xff]
    %v4170 = vld [vmem:[#allocation10 + $0x140] sm:$0xff]
    %v4171 = vld [vmem:[#allocation10 + $0x148] sm:$0xff]
    %v4172 = vld [vmem:[#allocation10 + $0x150] sm:$0xff]
    %v4173 = vld [vmem:[#allocation10 + $0x158] sm:$0xff]
    %v4174 = vld [vmem:[#allocation10 + $0x160] sm:$0xff]
    %v4175 = vld [vmem:[#allocation10 + $0x168] sm:$0xff]
    %v4176 = vld [vmem:[#allocation10 + $0x170] sm:$0xff]
    %v4177 = vld [vmem:[#allocation10 + $0x178] sm:$0xff]
    %v4178 = vld [vmem:[#allocation10 + $0x180] sm:$0xff]
    %v4179 = vld [vmem:[#allocation10 + $0x188] sm:$0xff]
    %v4180 = vld [vmem:[#allocation10 + $0x190] sm:$0xff]
    %v4181 = vld [vmem:[#allocation10 + $0x198] sm:$0xff]
    %v4182 = vld [vmem:[#allocation10 + $0x1a0] sm:$0xff]
    %v4183 = vld [vmem:[#allocation10 + $0x1a8] sm:$0xff]
    %v4184 = vld [vmem:[#allocation10 + $0x1b0] sm:$0xff]
    %v4185 = vld [vmem:[#allocation10 + $0x1b8] sm:$0xff]
    %v4186 = vld [vmem:[#allocation10 + $0x1c0] sm:$0xff]
    %v4187 = vld [vmem:[#allocation10 + $0x1c8] sm:$0xff]
    %v4188 = vld [vmem:[#allocation10 + $0x1d0] sm:$0xff]
    %v4189 = vld [vmem:[#allocation10 + $0x1d8] sm:$0xff]
    %v4190 = vld [vmem:[#allocation10 + $0x1e0] sm:$0xff]
    %v4191 = vld [vmem:[#allocation10 + $0x1e8] sm:$0xff]
    %v4192 = vld [vmem:[#allocation10 + $0x1f0] sm:$0xff]
    %v4193 = vld [vmem:[#allocation10 + $0x1f8] sm:$0xff]
    %4194 = vmatprep.subr.mxu0 %v4131
    %4195 = vmatpush1.msra.mxu0 %v4130
    %4196 = vmatprep.subr.mxu0 %v4135
    %4197 = vmatpush1.msra.mxu0 %v4134
    %4198 = vmatprep.subr.mxu0 %v4139
    %4199 = vmatpush1.msra.mxu0 %v4138
    %4200 = vmatprep.subr.mxu0 %v4143
    %4201 = vmatpush1.msra.mxu0 %v4142
    %4202 = vmatprep.subr.mxu0 %v4147
    %4203 = vmatpush1.msra.mxu0 %v4146
    %4204 = vmatprep.subr.mxu0 %v4151
    %4205 = vmatpush1.msra.mxu0 %v4150
    %4206 = vmatprep.subr.mxu0 %v4155
    %4207 = vmatpush1.msra.mxu0 %v4154
    %4208 = vmatprep.subr.mxu0 %v4159
    %4209 = vmatpush1.msra.mxu0 %v4158
    %4210 = vmatprep.subr.mxu0 %v4163
    %4211 = vmatpush1.msra.mxu0 %v4162
    %4212 = vmatprep.subr.mxu0 %v4167
    %4213 = vmatpush1.msra.mxu0 %v4166
    %4214 = vmatprep.subr.mxu0 %v4171
    %4215 = vmatpush1.msra.mxu0 %v4170
    %4216 = vmatprep.subr.mxu0 %v4175
    %4217 = vmatpush1.msra.mxu0 %v4174
    %4218 = vmatprep.subr.mxu0 %v4179
    %4219 = vmatpush1.msra.mxu0 %v4178
    %4220 = vmatprep.subr.mxu0 %v4183
    %4221 = vmatpush1.msra.mxu0 %v4182
    %4222 = vmatprep.subr.mxu0 %v4187
    %4223 = vmatpush1.msra.mxu0 %v4186
    %4224 = vmatprep.subr.mxu0 %v4191
    %4225 = vmatpush1.msra.mxu0 %v4190
    %4226 = vmatprep.subr.mxu0 0.0
    %4227 = vmatpush1.msra.mxu0 0.0
    %4228 = vmatprep.subr.mxu0 0.0
    %4229 = vmatpush1.msra.mxu0 0.0
    %4230 = vmatprep.subr.mxu0 0.0
    %4231 = vmatpush1.msra.mxu0 0.0
    %4232 = vmatprep.subr.mxu0 0.0
    %4233 = vmatpush1.msra.mxu0 0.0
    %4234 = vmatprep.subr.mxu0 0.0
    %4235 = vmatpush1.msra.mxu0 0.0
    %4236 = vmatprep.subr.mxu0 0.0
    %4237 = vmatpush1.msra.mxu0 0.0
    %4238 = vmatprep.subr.mxu0 0.0
    %4239 = vmatpush1.msra.mxu0 0.0
    %4240 = vmatprep.subr.mxu0 0.0
    %4241 = vmatpush1.msra.mxu0 0.0
    %4242 = vmatprep.subr.mxu0 0.0
    %4243 = vmatpush1.msra.mxu0 0.0
    %4244 = vmatprep.subr.mxu0 0.0
    %4245 = vmatpush1.msra.mxu0 0.0
    %4246 = vmatprep.subr.mxu0 0.0
    %4247 = vmatpush1.msra.mxu0 0.0
    %4248 = vmatprep.subr.mxu0 0.0
    %4249 = vmatpush1.msra.mxu0 0.0
    %4250 = vmatprep.subr.mxu0 0.0
    %4251 = vmatpush1.msra.mxu0 0.0
    %4252 = vmatprep.subr.mxu0 0.0
    %4253 = vmatpush1.msra.mxu0 0.0
    %4254 = vmatprep.subr.mxu0 0.0
    %4255 = vmatpush1.msra.mxu0 0.0
    %4256 = vmatprep.subr.mxu0 0.0
    %4257 = vmatpush1.msra.mxu0 0.0
    %4258 = vmatprep.mubr.f32.mxu0 0.0
    %4259 = vmatmul.mubr.f32.gmra.mrb[0].mxu0 %v4123
    %v4260 = vpop.f32.mrb[0].mxu0
    %v4261 = vadd.f32 0.0, %v4260
    %v4262 = vpop.f32.mrb[0].mxu0
    %v4263 = vadd.f32 0.0, %v4262
    %4264 = vdwg.mxu0
    %4265 = vmatprep.subr.mxu0 %v4133
    %4266 = vmatpush1.msra.mxu0 %v4132
    %4267 = vmatprep.subr.mxu0 %v4137
    %4268 = vmatpush1.msra.mxu0 %v4136
    %4269 = vmatprep.subr.mxu0 %v4141
    %4270 = vmatpush1.msra.mxu0 %v4140
    %4271 = vmatprep.subr.mxu0 %v4145
    %4272 = vmatpush1.msra.mxu0 %v4144
    %4273 = vmatprep.subr.mxu0 %v4149
    %4274 = vmatpush1.msra.mxu0 %v4148
    %4275 = vmatprep.subr.mxu0 %v4153
    %4276 = vmatpush1.msra.mxu0 %v4152
    %4277 = vmatprep.subr.mxu0 %v4157
    %4278 = vmatpush1.msra.mxu0 %v4156
    %4279 = vmatprep.subr.mxu0 %v4161
    %4280 = vmatpush1.msra.mxu0 %v4160
    %4281 = vmatprep.subr.mxu0 %v4165
    %4282 = vmatpush1.msra.mxu0 %v4164
    %4283 = vmatprep.subr.mxu0 %v4169
    %4284 = vmatpush1.msra.mxu0 %v4168
    %4285 = vmatprep.subr.mxu0 %v4173
    %4286 = vmatpush1.msra.mxu0 %v4172
    %4287 = vmatprep.subr.mxu0 %v4177
    %4288 = vmatpush1.msra.mxu0 %v4176
    %4289 = vmatprep.subr.mxu0 %v4181
    %4290 = vmatpush1.msra.mxu0 %v4180
    %4291 = vmatprep.subr.mxu0 %v4185
    %4292 = vmatpush1.msra.mxu0 %v4184
    %4293 = vmatprep.subr.mxu0 %v4189
    %4294 = vmatpush1.msra.mxu0 %v4188
    %4295 = vmatprep.subr.mxu0 %v4193
    %4296 = vmatpush1.msra.mxu0 %v4192
    %4297 = vmatprep.subr.mxu0 0.0
    %4298 = vmatpush1.msra.mxu0 0.0
    %4299 = vmatprep.subr.mxu0 0.0
    %4300 = vmatpush1.msra.mxu0 0.0
    %4301 = vmatprep.subr.mxu0 0.0
    %4302 = vmatpush1.msra.mxu0 0.0
    %4303 = vmatprep.subr.mxu0 0.0
    %4304 = vmatpush1.msra.mxu0 0.0
    %4305 = vmatprep.subr.mxu0 0.0
    %4306 = vmatpush1.msra.mxu0 0.0
    %4307 = vmatprep.subr.mxu0 0.0
    %4308 = vmatpush1.msra.mxu0 0.0
    %4309 = vmatprep.subr.mxu0 0.0
    %4310 = vmatpush1.msra.mxu0 0.0
    %4311 = vmatprep.subr.mxu0 0.0
    %4312 = vmatpush1.msra.mxu0 0.0
    %4313 = vmatprep.subr.mxu0 0.0
    %4314 = vmatpush1.msra.mxu0 0.0
    %4315 = vmatprep.subr.mxu0 0.0
    %4316 = vmatpush1.msra.mxu0 0.0
    %4317 = vmatprep.subr.mxu0 0.0
    %4318 = vmatpush1.msra.mxu0 0.0
    %4319 = vmatprep.subr.mxu0 0.0
    %4320 = vmatpush1.msra.mxu0 0.0
    %4321 = vmatprep.subr.mxu0 0.0
    %4322 = vmatpush1.msra.mxu0 0.0
    %4323 = vmatprep.subr.mxu0 0.0
    %4324 = vmatpush1.msra.mxu0 0.0
    %4325 = vmatprep.subr.mxu0 0.0
    %4326 = vmatpush1.msra.mxu0 0.0
    %4327 = vmatprep.subr.mxu0 0.0
    %4328 = vmatpush1.msra.mxu0 0.0
    %4329 = vmatprep.mubr.f32.mxu0 0.0
    %4330 = vmatmul.mubr.f32.gmra.mrb[0].mxu0 %v4123
    %v4331 = vpop.f32.mrb[0].mxu0
    %v4332 = vadd.f32 0.0, %v4331
    %v4333 = vpop.f32.mrb[0].mxu0
    %v4334 = vadd.f32 0.0, %v4333
    %4335 = vdwg.mxu0
    %v4336 = vadd.f32 %v4126, %v4261
    %v4337 = vadd.f32 %v4127, %v4263
    %v4338 = vadd.f32 %v4128, %v4332
    %v4339 = vadd.f32 %v4129, %v4334
    %v4340 = vxor.u32 %v4336, 2147483648
    %v4341 = vmul.f32 %v4340, 1.442695
    %v4342 = vpow.pop %v4341
    %v4343 = vadd.f32 %v4342, 1.0
    %v4344 = vrcp.pop %v4343
    %v4345 = vmul.f32 1.0, %v4344
    %v4346 = vxor.u32 %v4337, 2147483648
    %v4347 = vmul.f32 %v4346, 1.442695
    %v4348 = vpow.pop %v4347
    %v4349 = vadd.f32 %v4348, 1.0
    %v4350 = vrcp.pop %v4349
    %v4351 = vmul.f32 1.0, %v4350
    %v4352 = vtanh.pop %v4338
    %v4353 = vxor.u32 %v4339, 2147483648
    %v4354 = vmul.f32 %v4353, 1.442695
    %v4355 = vpow.pop %v4354
    %v4356 = vadd.f32 %v4355, 1.0
    %v4357 = vrcp.pop %v4356
    %v4358 = vmul.f32 1.0, %v4357
    %v4359 = vmul.f32 %v4351, %v4121
    %v4360 = vmul.f32 %v4345, %v4352
    %v4361 = vadd.f32 %v4359, %v4360
    %v4362 = vtanh.pop %v4361
    %v4363 = vmul.f32 %v4358, %v4362
    %s4364 = scalar_lea.vmem [#allocation4], 48
    %4365 = vst [vmem:[%s4364] sm:$0xff] %v4363
    %v4366 = vld [vmem:[%s2094] sm:$0xff]
    %v4367 = vld [vmem:[%s2094 + $0x8] sm:$0xff]
    %v4368 = vld [vmem:[%s2094 + $0x10] sm:$0xff]
    %v4369 = vld [vmem:[%s2094 + $0x18] sm:$0xff]
    %v4370 = vld [vmem:[#allocation10] sm:$0xff]
    %v4371 = vld [vmem:[#allocation10 + $0x8] sm:$0xff]
    %v4372 = vld [vmem:[#allocation10 + $0x10] sm:$0xff]
    %v4373 = vld [vmem:[#allocation10 + $0x18] sm:$0xff]
    %v4374 = vld [vmem:[#allocation10 + $0x20] sm:$0xff]
    %v4375 = vld [vmem:[#allocation10 + $0x28] sm:$0xff]
    %v4376 = vld [vmem:[#allocation10 + $0x30] sm:$0xff]
    %v4377 = vld [vmem:[#allocation10 + $0x38] sm:$0xff]
    %v4378 = vld [vmem:[#allocation10 + $0x40] sm:$0xff]
    %v4379 = vld [vmem:[#allocation10 + $0x48] sm:$0xff]
    %v4380 = vld [vmem:[#allocation10 + $0x50] sm:$0xff]
    %v4381 = vld [vmem:[#allocation10 + $0x58] sm:$0xff]
    %v4382 = vld [vmem:[#allocation10 + $0x60] sm:$0xff]
    %v4383 = vld [vmem:[#allocation10 + $0x68] sm:$0xff]
    %v4384 = vld [vmem:[#allocation10 + $0x70] sm:$0xff]
    %v4385 = vld [vmem:[#allocation10 + $0x78] sm:$0xff]
    %v4386 = vld [vmem:[#allocation10 + $0x80] sm:$0xff]
    %v4387 = vld [vmem:[#allocation10 + $0x88] sm:$0xff]
    %v4388 = vld [vmem:[#allocation10 + $0x90] sm:$0xff]
    %v4389 = vld [vmem:[#allocation10 + $0x98] sm:$0xff]
    %v4390 = vld [vmem:[#allocation10 + $0xa0] sm:$0xff]
    %v4391 = vld [vmem:[#allocation10 + $0xa8] sm:$0xff]
    %v4392 = vld [vmem:[#allocation10 + $0xb0] sm:$0xff]
    %v4393 = vld [vmem:[#allocation10 + $0xb8] sm:$0xff]
    %v4394 = vld [vmem:[#allocation10 + $0xc0] sm:$0xff]
    %v4395 = vld [vmem:[#allocation10 + $0xc8] sm:$0xff]
    %v4396 = vld [vmem:[#allocation10 + $0xd0] sm:$0xff]
    %v4397 = vld [vmem:[#allocation10 + $0xd8] sm:$0xff]
    %v4398 = vld [vmem:[#allocation10 + $0xe0] sm:$0xff]
    %v4399 = vld [vmem:[#allocation10 + $0xe8] sm:$0xff]
    %v4400 = vld [vmem:[#allocation10 + $0xf0] sm:$0xff]
    %v4401 = vld [vmem:[#allocation10 + $0xf8] sm:$0xff]
    %v4402 = vld [vmem:[#allocation10 + $0x100] sm:$0xff]
    %v4403 = vld [vmem:[#allocation10 + $0x108] sm:$0xff]
    %v4404 = vld [vmem:[#allocation10 + $0x110] sm:$0xff]
    %v4405 = vld [vmem:[#allocation10 + $0x118] sm:$0xff]
    %v4406 = vld [vmem:[#allocation10 + $0x120] sm:$0xff]
    %v4407 = vld [vmem:[#allocation10 + $0x128] sm:$0xff]
    %v4408 = vld [vmem:[#allocation10 + $0x130] sm:$0xff]
    %v4409 = vld [vmem:[#allocation10 + $0x138] sm:$0xff]
    %v4410 = vld [vmem:[#allocation10 + $0x140] sm:$0xff]
    %v4411 = vld [vmem:[#allocation10 + $0x148] sm:$0xff]
    %v4412 = vld [vmem:[#allocation10 + $0x150] sm:$0xff]
    %v4413 = vld [vmem:[#allocation10 + $0x158] sm:$0xff]
    %v4414 = vld [vmem:[#allocation10 + $0x160] sm:$0xff]
    %v4415 = vld [vmem:[#allocation10 + $0x168] sm:$0xff]
    %v4416 = vld [vmem:[#allocation10 + $0x170] sm:$0xff]
    %v4417 = vld [vmem:[#allocation10 + $0x178] sm:$0xff]
    %v4418 = vld [vmem:[#allocation10 + $0x180] sm:$0xff]
    %v4419 = vld [vmem:[#allocation10 + $0x188] sm:$0xff]
    %v4420 = vld [vmem:[#allocation10 + $0x190] sm:$0xff]
    %v4421 = vld [vmem:[#allocation10 + $0x198] sm:$0xff]
    %v4422 = vld [vmem:[#allocation10 + $0x1a0] sm:$0xff]
    %v4423 = vld [vmem:[#allocation10 + $0x1a8] sm:$0xff]
    %v4424 = vld [vmem:[#allocation10 + $0x1b0] sm:$0xff]
    %v4425 = vld [vmem:[#allocation10 + $0x1b8] sm:$0xff]
    %v4426 = vld [vmem:[#allocation10 + $0x1c0] sm:$0xff]
    %v4427 = vld [vmem:[#allocation10 + $0x1c8] sm:$0xff]
    %v4428 = vld [vmem:[#allocation10 + $0x1d0] sm:$0xff]
    %v4429 = vld [vmem:[#allocation10 + $0x1d8] sm:$0xff]
    %v4430 = vld [vmem:[#allocation10 + $0x1e0] sm:$0xff]
    %v4431 = vld [vmem:[#allocation10 + $0x1e8] sm:$0xff]
    %v4432 = vld [vmem:[#allocation10 + $0x1f0] sm:$0xff]
    %v4433 = vld [vmem:[#allocation10 + $0x1f8] sm:$0xff]
    %4434 = vmatprep.subr.mxu0 %v4371
    %4435 = vmatpush1.msra.mxu0 %v4370
    %4436 = vmatprep.subr.mxu0 %v4375
    %4437 = vmatpush1.msra.mxu0 %v4374
    %4438 = vmatprep.subr.mxu0 %v4379
    %4439 = vmatpush1.msra.mxu0 %v4378
    %4440 = vmatprep.subr.mxu0 %v4383
    %4441 = vmatpush1.msra.mxu0 %v4382
    %4442 = vmatprep.subr.mxu0 %v4387
    %4443 = vmatpush1.msra.mxu0 %v4386
    %4444 = vmatprep.subr.mxu0 %v4391
    %4445 = vmatpush1.msra.mxu0 %v4390
    %4446 = vmatprep.subr.mxu0 %v4395
    %4447 = vmatpush1.msra.mxu0 %v4394
    %4448 = vmatprep.subr.mxu0 %v4399
    %4449 = vmatpush1.msra.mxu0 %v4398
    %4450 = vmatprep.subr.mxu0 %v4403
    %4451 = vmatpush1.msra.mxu0 %v4402
    %4452 = vmatprep.subr.mxu0 %v4407
    %4453 = vmatpush1.msra.mxu0 %v4406
    %4454 = vmatprep.subr.mxu0 %v4411
    %4455 = vmatpush1.msra.mxu0 %v4410
    %4456 = vmatprep.subr.mxu0 %v4415
    %4457 = vmatpush1.msra.mxu0 %v4414
    %4458 = vmatprep.subr.mxu0 %v4419
    %4459 = vmatpush1.msra.mxu0 %v4418
    %4460 = vmatprep.subr.mxu0 %v4423
    %4461 = vmatpush1.msra.mxu0 %v4422
    %4462 = vmatprep.subr.mxu0 %v4427
    %4463 = vmatpush1.msra.mxu0 %v4426
    %4464 = vmatprep.subr.mxu0 %v4431
    %4465 = vmatpush1.msra.mxu0 %v4430
    %4466 = vmatprep.subr.mxu0 0.0
    %4467 = vmatpush1.msra.mxu0 0.0
    %4468 = vmatprep.subr.mxu0 0.0
    %4469 = vmatpush1.msra.mxu0 0.0
    %4470 = vmatprep.subr.mxu0 0.0
    %4471 = vmatpush1.msra.mxu0 0.0
    %4472 = vmatprep.subr.mxu0 0.0
    %4473 = vmatpush1.msra.mxu0 0.0
    %4474 = vmatprep.subr.mxu0 0.0
    %4475 = vmatpush1.msra.mxu0 0.0
    %4476 = vmatprep.subr.mxu0 0.0
    %4477 = vmatpush1.msra.mxu0 0.0
    %4478 = vmatprep.subr.mxu0 0.0
    %4479 = vmatpush1.msra.mxu0 0.0
    %4480 = vmatprep.subr.mxu0 0.0
    %4481 = vmatpush1.msra.mxu0 0.0
    %4482 = vmatprep.subr.mxu0 0.0
    %4483 = vmatpush1.msra.mxu0 0.0
    %4484 = vmatprep.subr.mxu0 0.0
    %4485 = vmatpush1.msra.mxu0 0.0
    %4486 = vmatprep.subr.mxu0 0.0
    %4487 = vmatpush1.msra.mxu0 0.0
    %4488 = vmatprep.subr.mxu0 0.0
    %4489 = vmatpush1.msra.mxu0 0.0
    %4490 = vmatprep.subr.mxu0 0.0
    %4491 = vmatpush1.msra.mxu0 0.0
    %4492 = vmatprep.subr.mxu0 0.0
    %4493 = vmatpush1.msra.mxu0 0.0
    %4494 = vmatprep.subr.mxu0 0.0
    %4495 = vmatpush1.msra.mxu0 0.0
    %4496 = vmatprep.subr.mxu0 0.0
    %4497 = vmatpush1.msra.mxu0 0.0
    %4498 = vmatprep.mubr.f32.mxu0 0.0
    %4499 = vmatmul.mubr.f32.gmra.mrb[0].mxu0 %v4363
    %v4500 = vpop.f32.mrb[0].mxu0
    %v4501 = vadd.f32 0.0, %v4500
    %v4502 = vpop.f32.mrb[0].mxu0
    %v4503 = vadd.f32 0.0, %v4502
    %4504 = vdwg.mxu0
    %4505 = vmatprep.subr.mxu0 %v4373
    %4506 = vmatpush1.msra.mxu0 %v4372
    %4507 = vmatprep.subr.mxu0 %v4377
    %4508 = vmatpush1.msra.mxu0 %v4376
    %4509 = vmatprep.subr.mxu0 %v4381
    %4510 = vmatpush1.msra.mxu0 %v4380
    %4511 = vmatprep.subr.mxu0 %v4385
    %4512 = vmatpush1.msra.mxu0 %v4384
    %4513 = vmatprep.subr.mxu0 %v4389
    %4514 = vmatpush1.msra.mxu0 %v4388
    %4515 = vmatprep.subr.mxu0 %v4393
    %4516 = vmatpush1.msra.mxu0 %v4392
    %4517 = vmatprep.subr.mxu0 %v4397
    %4518 = vmatpush1.msra.mxu0 %v4396
    %4519 = vmatprep.subr.mxu0 %v4401
    %4520 = vmatpush1.msra.mxu0 %v4400
    %4521 = vmatprep.subr.mxu0 %v4405
    %4522 = vmatpush1.msra.mxu0 %v4404
    %4523 = vmatprep.subr.mxu0 %v4409
    %4524 = vmatpush1.msra.mxu0 %v4408
    %4525 = vmatprep.subr.mxu0 %v4413
    %4526 = vmatpush1.msra.mxu0 %v4412
    %4527 = vmatprep.subr.mxu0 %v4417
    %4528 = vmatpush1.msra.mxu0 %v4416
    %4529 = vmatprep.subr.mxu0 %v4421
    %4530 = vmatpush1.msra.mxu0 %v4420
    %4531 = vmatprep.subr.mxu0 %v4425
    %4532 = vmatpush1.msra.mxu0 %v4424
    %4533 = vmatprep.subr.mxu0 %v4429
    %4534 = vmatpush1.msra.mxu0 %v4428
    %4535 = vmatprep.subr.mxu0 %v4433
    %4536 = vmatpush1.msra.mxu0 %v4432
    %4537 = vmatprep.subr.mxu0 0.0
    %4538 = vmatpush1.msra.mxu0 0.0
    %4539 = vmatprep.subr.mxu0 0.0
    %4540 = vmatpush1.msra.mxu0 0.0
    %4541 = vmatprep.subr.mxu0 0.0
    %4542 = vmatpush1.msra.mxu0 0.0
    %4543 = vmatprep.subr.mxu0 0.0
    %4544 = vmatpush1.msra.mxu0 0.0
    %4545 = vmatprep.subr.mxu0 0.0
    %4546 = vmatpush1.msra.mxu0 0.0
    %4547 = vmatprep.subr.mxu0 0.0
    %4548 = vmatpush1.msra.mxu0 0.0
    %4549 = vmatprep.subr.mxu0 0.0
    %4550 = vmatpush1.msra.mxu0 0.0
    %4551 = vmatprep.subr.mxu0 0.0
    %4552 = vmatpush1.msra.mxu0 0.0
    %4553 = vmatprep.subr.mxu0 0.0
    %4554 = vmatpush1.msra.mxu0 0.0
    %4555 = vmatprep.subr.mxu0 0.0
    %4556 = vmatpush1.msra.mxu0 0.0
    %4557 = vmatprep.subr.mxu0 0.0
    %4558 = vmatpush1.msra.mxu0 0.0
    %4559 = vmatprep.subr.mxu0 0.0
    %4560 = vmatpush1.msra.mxu0 0.0
    %4561 = vmatprep.subr.mxu0 0.0
    %4562 = vmatpush1.msra.mxu0 0.0
    %4563 = vmatprep.subr.mxu0 0.0
    %4564 = vmatpush1.msra.mxu0 0.0
    %4565 = vmatprep.subr.mxu0 0.0
    %4566 = vmatpush1.msra.mxu0 0.0
    %4567 = vmatprep.subr.mxu0 0.0
    %4568 = vmatpush1.msra.mxu0 0.0
    %4569 = vmatprep.mubr.f32.mxu0 0.0
    %4570 = vmatmul.mubr.f32.gmra.mrb[0].mxu0 %v4363
    %v4571 = vpop.f32.mrb[0].mxu0
    %v4572 = vadd.f32 0.0, %v4571
    %v4573 = vpop.f32.mrb[0].mxu0
    %v4574 = vadd.f32 0.0, %v4573
    %4575 = vdwg.mxu0
    %v4576 = vadd.f32 %v4366, %v4501
    %v4577 = vadd.f32 %v4367, %v4503
    %v4578 = vadd.f32 %v4368, %v4572
    %v4579 = vadd.f32 %v4369, %v4574
    %v4580 = vxor.u32 %v4576, 2147483648
    %v4581 = vmul.f32 %v4580, 1.442695
    %v4582 = vpow.pop %v4581
    %v4583 = vadd.f32 %v4582, 1.0
    %v4584 = vrcp.pop %v4583
    %v4585 = vmul.f32 1.0, %v4584
    %v4586 = vxor.u32 %v4577, 2147483648
    %v4587 = vmul.f32 %v4586, 1.442695
    %v4588 = vpow.pop %v4587
    %v4589 = vadd.f32 %v4588, 1.0
    %v4590 = vrcp.pop %v4589
    %v4591 = vmul.f32 1.0, %v4590
    %v4592 = vtanh.pop %v4578
    %v4593 = vxor.u32 %v4579, 2147483648
    %v4594 = vmul.f32 %v4593, 1.442695
    %v4595 = vpow.pop %v4594
    %v4596 = vadd.f32 %v4595, 1.0
    %v4597 = vrcp.pop %v4596
    %v4598 = vmul.f32 1.0, %v4597
    %v4599 = vmul.f32 %v4591, %v4361
    %v4600 = vmul.f32 %v4585, %v4592
    %v4601 = vadd.f32 %v4599, %v4600
    %v4602 = vtanh.pop %v4601
    %v4603 = vmul.f32 %v4598, %v4602
    %s4604 = scalar_lea.vmem [#allocation4], 56
    %4605 = vst [vmem:[%s4604] sm:$0xff] %v4603
    %v4606 = vld [vmem:[#allocation4] sm:$0xff]
    %v4607 = vld [vmem:[#allocation4 + $0x8] sm:$0xff]
    %v4608 = vld [vmem:[#allocation4 + $0x10] sm:$0xff]
    %v4609 = vld [vmem:[#allocation4 + $0x18] sm:$0xff]
    %v4610 = vld [vmem:[#allocation4 + $0x20] sm:$0xff]
    %v4611 = vld [vmem:[#allocation4 + $0x28] sm:$0xff]
    %v4612 = vld [vmem:[#allocation4 + $0x30] sm:$0xff]
    %v4613 = vld [vmem:[#allocation4 + $0x38] sm:$0xff]
    %v4614 = vld [vmem:[%s7] sm:$0xff]
    %v4615 = vld [vmem:[%s7 + $0x8] sm:$0xff]
    %v4616 = vld [vmem:[%s7 + $0x10] sm:$0xff]
    %v4617 = vld [vmem:[%s7 + $0x18] sm:$0xff]
    %v4618 = vld [vmem:[%s7 + $0x20] sm:$0xff]
    %v4619 = vld [vmem:[%s7 + $0x28] sm:$0xff]
    %v4620 = vld [vmem:[%s7 + $0x30] sm:$0xff]
    %v4621 = vld [vmem:[%s7 + $0x38] sm:$0xff]
    %v4622 = vld [vmem:[%s7 + $0x40] sm:$0xff]
    %v4623 = vld [vmem:[%s7 + $0x48] sm:$0xff]
    %v4624 = vld [vmem:[%s7 + $0x50] sm:$0xff]
    %v4625 = vld [vmem:[%s7 + $0x58] sm:$0xff]
    %v4626 = vld [vmem:[%s7 + $0x60] sm:$0xff]
    %v4627 = vld [vmem:[%s7 + $0x68] sm:$0xff]
    %v4628 = vld [vmem:[%s7 + $0x70] sm:$0xff]
    %v4629 = vld [vmem:[%s7 + $0x78] sm:$0xff]
    %v4630 = vld [vmem:[#allocation5] sm:$0x1]
    %v4632 = vlaneseq
    %v4633 = vshrl.u32 %v4632, 7
    %v4634 = vsub.s32 0, %v4633
    %v4635 = vrot.slane %v4630, %v4634
    %4637 = vmatprep.subr.mxu0 0.0
    %4638 = vmatpush1.msra.mxu0 %v4614
    %4639 = vmatprep.subr.mxu0 0.0
    %4640 = vmatpush1.msra.mxu0 %v4615
    %4641 = vmatprep.subr.mxu0 0.0
    %4642 = vmatpush1.msra.mxu0 %v4616
    %4643 = vmatprep.subr.mxu0 0.0
    %4644 = vmatpush1.msra.mxu0 %v4617
    %4645 = vmatprep.subr.mxu0 0.0
    %4646 = vmatpush1.msra.mxu0 %v4618
    %4647 = vmatprep.subr.mxu0 0.0
    %4648 = vmatpush1.msra.mxu0 %v4619
    %4649 = vmatprep.subr.mxu0 0.0
    %4650 = vmatpush1.msra.mxu0 %v4620
    %4651 = vmatprep.subr.mxu0 0.0
    %4652 = vmatpush1.msra.mxu0 %v4621
    %4653 = vmatprep.subr.mxu0 0.0
    %4654 = vmatpush1.msra.mxu0 %v4622
    %4655 = vmatprep.subr.mxu0 0.0
    %4656 = vmatpush1.msra.mxu0 %v4623
    %4657 = vmatprep.subr.mxu0 0.0
    %4658 = vmatpush1.msra.mxu0 %v4624
    %4659 = vmatprep.subr.mxu0 0.0
    %4660 = vmatpush1.msra.mxu0 %v4625
    %4661 = vmatprep.subr.mxu0 0.0
    %4662 = vmatpush1.msra.mxu0 %v4626
    %4663 = vmatprep.subr.mxu0 0.0
    %4664 = vmatpush1.msra.mxu0 %v4627
    %4665 = vmatprep.subr.mxu0 0.0
    %4666 = vmatpush1.msra.mxu0 %v4628
    %4667 = vmatprep.subr.mxu0 0.0
    %4668 = vmatpush1.msra.mxu0 %v4629
    %4669 = vmatprep.subr.mxu0 0.0
    %4670 = vmatpush1.msra.mxu0 0.0
    %4671 = vmatprep.subr.mxu0 0.0
    %4672 = vmatpush1.msra.mxu0 0.0
    %4673 = vmatprep.subr.mxu0 0.0
    %4674 = vmatpush1.msra.mxu0 0.0
    %4675 = vmatprep.subr.mxu0 0.0
    %4676 = vmatpush1.msra.mxu0 0.0
    %4677 = vmatprep.subr.mxu0 0.0
    %4678 = vmatpush1.msra.mxu0 0.0
    %4679 = vmatprep.subr.mxu0 0.0
    %4680 = vmatpush1.msra.mxu0 0.0
    %4681 = vmatprep.subr.mxu0 0.0
    %4682 = vmatpush1.msra.mxu0 0.0
    %4683 = vmatprep.subr.mxu0 0.0
    %4684 = vmatpush1.msra.mxu0 0.0
    %4685 = vmatprep.subr.mxu0 0.0
    %4686 = vmatpush1.msra.mxu0 0.0
    %4687 = vmatprep.subr.mxu0 0.0
    %4688 = vmatpush1.msra.mxu0 0.0
    %4689 = vmatprep.subr.mxu0 0.0
    %4690 = vmatpush1.msra.mxu0 0.0
    %4691 = vmatprep.subr.mxu0 0.0
    %4692 = vmatpush1.msra.mxu0 0.0
    %4693 = vmatprep.subr.mxu0 0.0
    %4694 = vmatpush1.msra.mxu0 0.0
    %4695 = vmatprep.subr.mxu0 0.0
    %4696 = vmatpush1.msra.mxu0 0.0
    %4697 = vmatprep.subr.mxu0 0.0
    %4698 = vmatpush1.msra.mxu0 0.0
    %4699 = vmatprep.subr.mxu0 0.0
    %4700 = vmatpush1.msra.mxu0 0.0
    %4701 = vmatprep.mubr.f32.mxu0 0.0
    %4702 = vmatmul.mubr.f32.gmra.mrb[0].mxu0 %v4606
    %v4703 = vpop.f32.mrb[0].mxu0
    %v4704 = vadd.f32 %v4635, %v4703
    %v4705 = vpop.f32.mrb[0].mxu0
    %4706 = vmatprep.mubr.f32.mxu0 0.0
    %4707 = vmatmul.mubr.f32.gmra.mrb[0].mxu0 %v4607
    %v4708 = vpop.f32.mrb[0].mxu0
    %v4709 = vadd.f32 %v4635, %v4708
    %v4710 = vpop.f32.mrb[0].mxu0
    %4711 = vmatprep.mubr.f32.mxu0 0.0
    %4712 = vmatmul.mubr.f32.gmra.mrb[0].mxu0 %v4608
    %v4713 = vpop.f32.mrb[0].mxu0
    %v4714 = vadd.f32 %v4635, %v4713
    %v4715 = vpop.f32.mrb[0].mxu0
    %4716 = vmatprep.mubr.f32.mxu0 0.0
    %4717 = vmatmul.mubr.f32.gmra.mrb[0].mxu0 %v4609
    %v4718 = vpop.f32.mrb[0].mxu0
    %v4719 = vadd.f32 %v4635, %v4718
    %v4720 = vpop.f32.mrb[0].mxu0
    %4721 = vmatprep.mubr.f32.mxu0 0.0
    %4722 = vmatmul.mubr.f32.gmra.mrb[0].mxu0 %v4610
    %v4723 = vpop.f32.mrb[0].mxu0
    %v4724 = vadd.f32 %v4635, %v4723
    %v4725 = vpop.f32.mrb[0].mxu0
    %4726 = vmatprep.mubr.f32.mxu0 0.0
    %4727 = vmatmul.mubr.f32.gmra.mrb[0].mxu0 %v4611
    %v4728 = vpop.f32.mrb[0].mxu0
    %v4729 = vadd.f32 %v4635, %v4728
    %v4730 = vpop.f32.mrb[0].mxu0
    %4731 = vmatprep.mubr.f32.mxu0 0.0
    %4732 = vmatmul.mubr.f32.gmra.mrb[0].mxu0 %v4612
    %v4733 = vpop.f32.mrb[0].mxu0
    %v4734 = vadd.f32 %v4635, %v4733
    %v4735 = vpop.f32.mrb[0].mxu0
    %4736 = vmatprep.mubr.f32.mxu0 0.0
    %4737 = vmatmul.mubr.f32.gmra.mrb[0].mxu0 %v4613
    %v4738 = vpop.f32.mrb[0].mxu0
    %v4739 = vadd.f32 %v4635, %v4738
    %v4740 = vpop.f32.mrb[0].mxu0
    %4741 = vdwg.mxu0
    %vm4742 = vcmask 7168
    %4743 = vst.msk [vmem:[%s9] sm:$0xff] %vm4742, %v4704
    %4744 = vst.msk [vmem:[%s9 + $0x8] sm:$0xff] %vm4742, %v4709
    %4745 = vst.msk [vmem:[%s9 + $0x10] sm:$0xff] %vm4742, %v4714
    %4746 = vst.msk [vmem:[%s9 + $0x18] sm:$0xff] %vm4742, %v4719
    %4747 = vst.msk [vmem:[%s9 + $0x20] sm:$0xff] %vm4742, %v4724
    %4748 = vst.msk [vmem:[%s9 + $0x28] sm:$0xff] %vm4742, %v4729
    %4749 = vst.msk [vmem:[%s9 + $0x30] sm:$0xff] %vm4742, %v4734
    %4750 = vst.msk [vmem:[%s9 + $0x38] sm:$0xff] %vm4742, %v4739
    // Predicated region
    $region50: #{tpu_custom_call.1} parent=1 // pred_check
      _
    $region51: #{tpu_custom_call.1} parent=1 // pred_check_branch
      %4752 = sbr.rel (0) target = $region53
    $region52: #{tpu_custom_call.1} parent=1 // pred_region
      _
    $region53: #{tpu_custom_call.1} parent=1 // pred_fallthru
      _
    // Predicated region
    $region54: #{tpu_custom_call.1} parent=1 // pred_check
      _
    $region55: #{tpu_custom_call.1} parent=1 // pred_check_branch
      %4754 = sbr.rel (0) target = $region57
    $region56: #{tpu_custom_call.1} parent=1 // pred_region
      _
    $region57: #{tpu_custom_call.1} parent=1 // pred_fallthru
      _
    %4755 = vsyncpa [#allocation7], 1
    %4756 = vsyncpa [#allocation9], 1

</llo_original>
